<compile_context>
chip_gen: v7x
topology: tpu7x:2x2x1
jax: 0.10.0
libtpu: 0.0.40
codegen_flags: <defaults>
</compile_context>

<pallas_src>
import jax
import jax.numpy as jnp
import numpy as np
from jax import lax
from jax.experimental import pallas as pl
from jax.experimental.pallas import tpu as pltpu


# --------------------------------------------------------------------------
# Fused forward kernel.
# --------------------------------------------------------------------------
def _net_kernel(cols1_ref, w1_ref, b1_ref, w2_ref, b2_ref, w3_ref, b3_ref,
                whT_ref, bhT_ref, wafc_ref, bafc_ref,
                wvfc1_ref, bvfc1_ref, wvfc2_ref, bvfc2_ref,
                pol_ref, val_ref,
                pad2, pad3, col3):
    f32 = jnp.float32
    bf16 = jnp.bfloat16

    N = pad2.shape[0]
    H = pad2.shape[1] - 2
    W = pad2.shape[2] - 2
    HW = H * W
    R = N * HW

    def conv3x3_relu(a_prev_2d, pad_ref, col_ref, w_ref, b_ref):
        """a_prev_2d: (R, Cin) f32 NHWC-flattened activation -> (R, Cout) f32."""
        Cin = w_ref.shape[0] // 9
        # Zero only the 1-pixel halo ("same" padding); interior fully written.
        pad_ref[:, 0:1, :, :] = jnp.zeros((N, 1, W + 2, Cin), f32)
        pad_ref[:, H + 1:H + 2, :, :] = jnp.zeros((N, 1, W + 2, Cin), f32)
        pad_ref[:, :, 0:1, :] = jnp.zeros((N, H + 2, 1, Cin), f32)
        pad_ref[:, :, W + 1:W + 2, :] = jnp.zeros((N, H + 2, 1, Cin), f32)
        pad_ref[:, 1:H + 1, 1:W + 1, :] = a_prev_2d.reshape(N, H, W, Cin)

        if col_ref is None:
            # Small layer: keep the im2col taps in registers (no VMEM roundtrip).
            taps = [pad_ref[:, dy:dy + H, dx:dx + W, :]
                    for dy in range(3) for dx in range(3)]
            cols = jnp.concatenate(taps, axis=-1).reshape(R, 9 * Cin)
        else:
            # Large layer: stage the taps through an explicit VMEM col scratch.
            for dy in range(3):
                for dx in range(3):
                    t = dy * 3 + dx
                    col_ref[:, :, :, t * Cin:(t + 1) * Cin] = \
                        pad_ref[:, dy:dy + H, dx:dx + W, :]
            cols = col_ref[...].reshape(R, 9 * Cin)

        y = jnp.dot(cols.astype(bf16), w_ref[...], preferred_element_type=f32)
        return jnp.maximum(y + b_ref[...], 0.0)                       # (R, Cout) f32

    # ---- conv1: im2col was hoisted into the wrapper; only the matmul here ----
    a1 = jnp.maximum(
        jnp.dot(cols1_ref[...], w1_ref[...], preferred_element_type=f32)
        + b1_ref[...], 0.0)                                           # (R, 32)
    a2 = conv3x3_relu(a1, pad2, None, w2_ref, b2_ref)                 # (R, 64)
    a3 = conv3x3_relu(a2, pad3, col3, w3_ref, b3_ref)                 # (R, 128)

    # ---- fused 1x1 policy+value head conv, transposed output (6, R) ----
    # Contract a3's lane (channel) axis directly; no explicit a3.T.
    a3_bf = a3.astype(bf16)
    headT = jnp.maximum(
        lax.dot_general(whT_ref[...], a3_bf,
                        dimension_numbers=(((1,), (1,)), ((), ())),
                        preferred_element_type=f32) + bhT_ref[...],
        0.0)                                                          # (6, R) f32

    # Rebuild the PyTorch NCHW channel-major flatten as batched (N, C*HW) rows.
    def flat_nchw(first, count):
        rows = []
        for n in range(N):
            chunks = [headT[first + c:first + c + 1, n * HW:(n + 1) * HW]
                      for c in range(count)]
            rows.append(jnp.concatenate(chunks, axis=1))
        return jnp.concatenate(rows, axis=0)                          # (N, count*HW)

    pol_in = flat_nchw(0, 4).astype(bf16)                             # (N, 4*HW)
    val_in = flat_nchw(4, 2).astype(bf16)                             # (N, 2*HW)

    # ---- policy head: one batched FC + log_softmax, full-block store ----
    logits = jnp.dot(pol_in, wafc_ref[...], preferred_element_type=f32) + bafc_ref[...]
    m = jnp.max(logits, axis=-1, keepdims=True)
    s = logits - m
    pol_ref[...] = s - jnp.log(jnp.sum(jnp.exp(s), axis=-1, keepdims=True))

    # ---- value head: two batched FCs + tanh, full-block store ----
    v1 = jnp.maximum(
        jnp.dot(val_in, wvfc1_ref[...], preferred_element_type=f32) + bvfc1_ref[...],
        0.0)                                                          # (N, 64)
    v2 = jnp.dot(v1.astype(bf16), wvfc2_ref[...], preferred_element_type=f32) \
        + bvfc2_ref[...]                                              # (N, 1)
    val_ref[...] = jnp.tanh(v2)


def net_forward(kp, state_input):
    """Fused forward pass. state_input: NCHW (N, 4, H, W) float32."""
    N, Cin, H, W = state_input.shape
    HW = H * W

    # Tiny XLA glue: NCHW->NHWC transpose + conv1 im2col (the Cin=4 lane
    # scatter is far cheaper here than as masked stores inside the kernel).
    x = jnp.transpose(state_input, (0, 2, 3, 1))                      # NHWC
    xp = jnp.pad(x, ((0, 0), (1, 1), (1, 1), (0, 0)))
    cols1 = jnp.concatenate(
        [xp[:, dy:dy + H, dx:dx + W, :] for dy in range(3) for dx in range(3)],
        axis=-1).reshape(N * HW, 9 * Cin).astype(jnp.bfloat16)        # (R, 36)

    args = (cols1, kp["w1"], kp["b1"], kp["w2"], kp["b2"], kp["w3"], kp["b3"],
            kp["whT"], kp["bhT"], kp["wafc"], kp["bafc"],
            kp["wvfc1"], kp["bvfc1"], kp["wvfc2"], kp["bvfc2"])

    def full_block(a):
        nd = a.ndim
        return pl.BlockSpec(a.shape, lambda i, _nd=nd: (0,) * _nd)

    return pl.pallas_call(
        _net_kernel,
        out_shape=(jax.ShapeDtypeStruct((N, HW), jnp.float32),
                   jax.ShapeDtypeStruct((N, 1), jnp.float32)),
        grid=(1,),
        in_specs=[full_block(a) for a in args],
        out_specs=(pl.BlockSpec((N, HW), lambda i: (0, 0)),
                   pl.BlockSpec((N, 1), lambda i: (0, 0))),
        scratch_shapes=[
            pltpu.VMEM((N, H + 2, W + 2, 32), jnp.float32),   # pad2
            pltpu.VMEM((N, H + 2, W + 2, 64), jnp.float32),   # pad3
            pltpu.VMEM((N, H, W, 9 * 64), jnp.float32),       # col3
        ],
        compiler_params=pltpu.CompilerParams(
            dimension_semantics=("arbitrary",)),
    )(*args)


# --------------------------------------------------------------------------
# Parameters (deterministic, synthetic) + kernel-layout preparation.
# --------------------------------------------------------------------------
def init_params(key, board_width, board_height):
    H, W = board_height, board_width
    ks = jax.random.split(key, 16)

    def nrm(k, shape, scale=0.05):
        return scale * jax.random.normal(k, shape, jnp.float32)

    p = {}
    p["w1"], p["b1"] = nrm(ks[0], (3, 3, 4, 32)), nrm(ks[1], (1, 32))
    p["w2"], p["b2"] = nrm(ks[2], (3, 3, 32, 64)), nrm(ks[3], (1, 64))
    p["w3"], p["b3"] = nrm(ks[4], (3, 3, 64, 128)), nrm(ks[5], (1, 128))
    p["wa_c"], p["ba_c"] = nrm(ks[6], (128, 4)), nrm(ks[7], (1, 4))
    p["wa_fc"], p["ba_fc"] = nrm(ks[8], (4 * H * W, H * W)), nrm(ks[9], (1, H * W))
    p["wv_c"], p["bv_c"] = nrm(ks[10], (128, 2)), nrm(ks[11], (1, 2))
    p["wv_fc1"], p["bv_fc1"] = nrm(ks[12], (2 * H * W, 64)), nrm(ks[13], (1, 64))
    p["wv_fc2"], p["bv_fc2"] = nrm(ks[14], (64, 1)), nrm(ks[15], (1, 1))
    return p


def prepare_params(p):
    """Reshape/transpose/pre-cast the reference params into the layouts the
    fused kernel consumes: matmul weights in bf16 (MXU), biases in f32."""
    bf16 = jnp.bfloat16
    kp = {}
    kp["w1"] = p["w1"].reshape(9 * 4, 32).astype(bf16)      # (36, 32)
    kp["w2"] = p["w2"].reshape(9 * 32, 64).astype(bf16)     # (288, 64)
    kp["w3"] = p["w3"].reshape(9 * 64, 128).astype(bf16)    # (576, 128)
    kp["b1"], kp["b2"], kp["b3"] = p["b1"], p["b2"], p["b3"]
    # Fused + transposed 1x1 heads: rows 0..3 -> policy, rows 4..5 -> value.
    kp["whT"] = jnp.concatenate([p["wa_c"], p["wv_c"]], axis=1).T.astype(bf16)  # (6, 128)
    kp["bhT"] = jnp.concatenate([p["ba_c"], p["bv_c"]], axis=1).T               # (6, 1)
    # FC weights stay flat (K, out) — the kernel rebuilds the NCHW flatten order.
    kp["wafc"] = p["wa_fc"].astype(bf16)     # (4*HW, HW)
    kp["bafc"] = p["ba_fc"]                  # (1, HW)
    kp["wvfc1"] = p["wv_fc1"].astype(bf16)   # (2*HW, 64)
    kp["bvfc1"] = p["bv_fc1"]                # (1, 64)
    kp["wvfc2"] = p["wv_fc2"].astype(bf16)   # (64, 1)
    kp["bvfc2"] = p["bv_fc2"]                # (1, 1)
    return kp


# --------------------------------------------------------------------------
# Pure-JAX reference (PyTorch semantics; bf16 matmul inputs + f32 accumulation
# to match the kernel's MXU numerics).
# --------------------------------------------------------------------------
def net_forward_ref(params, state_input):
    bf16 = jnp.bfloat16
    f32 = jnp.float32

    def mm(a, w):
        return jnp.dot(a.astype(bf16), w.astype(bf16), preferred_element_type=f32)

    def conv_ref(x, w, b):
        N, H, W, _ = x.shape
        Cout = w.shape[-1]
        xp = jnp.pad(x, ((0, 0), (1, 1), (1, 1), (0, 0)))
        out = jnp.zeros((N, H, W, Cout), f32)
        for dy in range(3):
            for dx in range(3):
                out = out + jnp.einsum(
                    "nhwc,co->nhwo",
                    xp[:, dy:dy + H, dx:dx + W, :].astype(bf16),
                    w[dy, dx].astype(bf16),
                    preferred_element_type=f32)
        return jnp.maximum(out + b[0], 0.0)

    x = jnp.transpose(state_input, (0, 2, 3, 1))   # NHWC
    x = conv_ref(x, params["w1"], params["b1"])
    x = conv_ref(x, params["w2"], params["b2"])
    x = conv_ref(x, params["w3"], params["b3"])
    N, H, W, _ = x.shape
    HW = H * W
    xf = x.reshape(N * HW, 128)

    xa = jnp.maximum(mm(xf, params["wa_c"]) + params["ba_c"][0], 0.0)
    xa = xa.reshape(N, H, W, 4).transpose(0, 3, 1, 2).reshape(N, 4 * HW)
    x_act = jax.nn.log_softmax(mm(xa, params["wa_fc"]) + params["ba_fc"][0], axis=-1)

    xv = jnp.maximum(mm(xf, params["wv_c"]) + params["bv_c"][0], 0.0)
    xv = xv.reshape(N, H, W, 2).transpose(0, 3, 1, 2).reshape(N, 2 * HW)
    xv = jnp.maximum(mm(xv, params["wv_fc1"]) + params["bv_fc1"][0], 0.0)
    x_val = jnp.tanh(mm(xv, params["wv_fc2"]) + params["bv_fc2"][0])
    return x_act, x_val


if __name__ == "__main__":
    board_width = board_height = 8
    batch = 2

    key = jax.random.PRNGKey(0)
    k_params, k_input = jax.random.split(key)
    params = init_params(k_params, board_width, board_height)
    kparams = prepare_params(params)
    state_input = jax.random.normal(
        k_input, (batch, 4, board_height, board_width), jnp.float32)   # NCHW

    fwd = jax.jit(net_forward)
    x_act, x_val = fwd(kparams, state_input)
    jax.block_until_ready((x_act, x_val))

    assert x_act.shape == (batch, board_width * board_height)
    assert x_val.shape == (batch, 1)

    ra, rv = net_forward_ref(params, state_input)
    np.testing.assert_allclose(np.asarray(x_act), np.asarray(ra), rtol=2e-3, atol=2e-3)
    np.testing.assert_allclose(np.asarray(x_val), np.asarray(rv), rtol=2e-3, atol=2e-3)

    print("KERNEL_OK")
</pallas_src>

<mosaic_0001>
module attributes {stable_mosaic.version = 11 : i64} {
  func.func @_net_kernel(%arg0: i32, %arg1: memref<128x36xbf16, #tpu.memory_space<vmem>>, %arg2: memref<36x32xbf16, #tpu.memory_space<vmem>>, %arg3: memref<1x32xf32, #tpu.memory_space<vmem>>, %arg4: memref<288x64xbf16, #tpu.memory_space<vmem>>, %arg5: memref<1x64xf32, #tpu.memory_space<vmem>>, %arg6: memref<576x128xbf16, #tpu.memory_space<vmem>>, %arg7: memref<1x128xf32, #tpu.memory_space<vmem>>, %arg8: memref<6x128xbf16, #tpu.memory_space<vmem>>, %arg9: memref<6x1xf32, #tpu.memory_space<vmem>>, %arg10: memref<256x64xbf16, #tpu.memory_space<vmem>>, %arg11: memref<1x64xf32, #tpu.memory_space<vmem>>, %arg12: memref<128x64xbf16, #tpu.memory_space<vmem>>, %arg13: memref<1x64xf32, #tpu.memory_space<vmem>>, %arg14: memref<64x1xbf16, #tpu.memory_space<vmem>>, %arg15: memref<1x1xf32, #tpu.memory_space<vmem>>, %arg16: memref<2x64xf32, #tpu.memory_space<vmem>>, %arg17: memref<2x1xf32, #tpu.memory_space<vmem>>, %arg18: memref<2x10x10x32xf32, #tpu.memory_space<vmem>>, %arg19: memref<2x10x10x64xf32, #tpu.memory_space<vmem>>, %arg20: memref<2x8x8x576xf32, #tpu.memory_space<vmem>>) attributes {dimension_semantics = [#tpu.dimension_semantics<arbitrary>], iteration_bounds = array<i64: 1>, scalar_prefetch = 0 : i64, scratch_operands = 3 : i64, tpu.core_type = #tpu.core_type<tc>, window_params = [{pipeline_mode = #tpu.pipeline_mode<synchronous>, transform_indices = @transform_0, window_bounds = array<i64: 128, 36>}, {pipeline_mode = #tpu.pipeline_mode<synchronous>, transform_indices = @transform_1, window_bounds = array<i64: 36, 32>}, {pipeline_mode = #tpu.pipeline_mode<synchronous>, transform_indices = @transform_2, window_bounds = array<i64: 1, 32>}, {pipeline_mode = #tpu.pipeline_mode<synchronous>, transform_indices = @transform_3, window_bounds = array<i64: 288, 64>}, {pipeline_mode = #tpu.pipeline_mode<synchronous>, transform_indices = @transform_4, window_bounds = array<i64: 1, 64>}, {pipeline_mode = #tpu.pipeline_mode<synchronous>, transform_indices = @transform_5, window_bounds = array<i64: 576, 128>}, {pipeline_mode = #tpu.pipeline_mode<synchronous>, transform_indices = @transform_6, window_bounds = array<i64: 1, 128>}, {pipeline_mode = #tpu.pipeline_mode<synchronous>, transform_indices = @transform_7, window_bounds = array<i64: 6, 128>}, {pipeline_mode = #tpu.pipeline_mode<synchronous>, transform_indices = @transform_8, window_bounds = array<i64: 6, 1>}, {pipeline_mode = #tpu.pipeline_mode<synchronous>, transform_indices = @transform_9, window_bounds = array<i64: 256, 64>}, {pipeline_mode = #tpu.pipeline_mode<synchronous>, transform_indices = @transform_10, window_bounds = array<i64: 1, 64>}, {pipeline_mode = #tpu.pipeline_mode<synchronous>, transform_indices = @transform_11, window_bounds = array<i64: 128, 64>}, {pipeline_mode = #tpu.pipeline_mode<synchronous>, transform_indices = @transform_12, window_bounds = array<i64: 1, 64>}, {pipeline_mode = #tpu.pipeline_mode<synchronous>, transform_indices = @transform_13, window_bounds = array<i64: 64, 1>}, {pipeline_mode = #tpu.pipeline_mode<synchronous>, transform_indices = @transform_14, window_bounds = array<i64: 1, 1>}, {pipeline_mode = #tpu.pipeline_mode<synchronous>, transform_indices = @transform_15, window_bounds = array<i64: 2, 64>}, {pipeline_mode = #tpu.pipeline_mode<synchronous>, transform_indices = @transform_16, window_bounds = array<i64: 2, 1>}]} {
    %c0 = arith.constant 0 : index
    %c0_0 = arith.constant 0 : index
    %0 = vector.load %arg1[%c0, %c0_0] : memref<128x36xbf16, #tpu.memory_space<vmem>>, vector<128x36xbf16>
    %c0_1 = arith.constant 0 : index
    %c0_2 = arith.constant 0 : index
    %1 = vector.load %arg2[%c0_1, %c0_2] : memref<36x32xbf16, #tpu.memory_space<vmem>>, vector<36x32xbf16>
    %cst = arith.constant dense<0.000000e+00> : vector<128x32xf32>
    %2 = tpu.matmul %0, %1, %cst {dimension_numbers = #tpu.dot_dimension_numbers<[1], [0], [0], [1], [0, 0, 1, 1], [], []>} : vector<128x36xbf16>, vector<36x32xbf16>, vector<128x32xf32> -> vector<128x32xf32>
    %c0_3 = arith.constant 0 : index
    %c0_4 = arith.constant 0 : index
    %3 = vector.load %arg3[%c0_3, %c0_4] : memref<1x32xf32, #tpu.memory_space<vmem>>, vector<1x32xf32>
    %4 = vector.broadcast %3 : vector<1x32xf32> to vector<128x32xf32>
    %5 = arith.addf %2, %4 : vector<128x32xf32>
    %cst_5 = arith.constant 0.000000e+00 : f32
    %6 = vector.broadcast %cst_5 : f32 to vector<128x32xf32>
    %7 = arith.maximumf %5, %6 : vector<128x32xf32>
    %cst_6 = arith.constant 0.000000e+00 : f32
    %8 = vector.broadcast %cst_6 : f32 to vector<2x1x10x32xf32>
    %c0_7 = arith.constant 0 : index
    %c0_8 = arith.constant 0 : index
    %c0_9 = arith.constant 0 : index
    %c0_10 = arith.constant 0 : index
    %9 = vector.load %arg18[%c0_7, %c0_8, %c0_9, %c0_10] : memref<2x10x10x32xf32, #tpu.memory_space<vmem>>, vector<2x1x10x32xf32>
    tpu.vector_store %arg18[%c0_7, %c0_8, %c0_9, %c0_10], %8 {strides = array<i32>} : memref<2x10x10x32xf32, #tpu.memory_space<vmem>>, vector<2x1x10x32xf32>,
    %cst_11 = arith.constant 0.000000e+00 : f32
    %10 = vector.broadcast %cst_11 : f32 to vector<2x1x10x32xf32>
    %c0_12 = arith.constant 0 : index
    %c9 = arith.constant 9 : index
    %c0_13 = arith.constant 0 : index
    %c0_14 = arith.constant 0 : index
    %11 = vector.load %arg18[%c0_12, %c9, %c0_13, %c0_14] : memref<2x10x10x32xf32, #tpu.memory_space<vmem>>, vector<2x1x10x32xf32>
    tpu.vector_store %arg18[%c0_12, %c9, %c0_13, %c0_14], %10 {strides = array<i32>} : memref<2x10x10x32xf32, #tpu.memory_space<vmem>>, vector<2x1x10x32xf32>,
    %cst_15 = arith.constant 0.000000e+00 : f32
    %12 = vector.broadcast %cst_15 : f32 to vector<2x10x1x32xf32>
    %c0_16 = arith.constant 0 : index
    %c0_17 = arith.constant 0 : index
    %c0_18 = arith.constant 0 : index
    %c0_19 = arith.constant 0 : index
    %13 = vector.load %arg18[%c0_16, %c0_17, %c0_18, %c0_19] : memref<2x10x10x32xf32, #tpu.memory_space<vmem>>, vector<2x10x1x32xf32>
    tpu.vector_store %arg18[%c0_16, %c0_17, %c0_18, %c0_19], %12 {strides = array<i32>} : memref<2x10x10x32xf32, #tpu.memory_space<vmem>>, vector<2x10x1x32xf32>,
    %cst_20 = arith.constant 0.000000e+00 : f32
    %14 = vector.broadcast %cst_20 : f32 to vector<2x10x1x32xf32>
    %c0_21 = arith.constant 0 : index
    %c0_22 = arith.constant 0 : index
    %c9_23 = arith.constant 9 : index
    %c0_24 = arith.constant 0 : index
    %15 = vector.load %arg18[%c0_21, %c0_22, %c9_23, %c0_24] : memref<2x10x10x32xf32, #tpu.memory_space<vmem>>, vector<2x10x1x32xf32>
    tpu.vector_store %arg18[%c0_21, %c0_22, %c9_23, %c0_24], %14 {strides = array<i32>} : memref<2x10x10x32xf32, #tpu.memory_space<vmem>>, vector<2x10x1x32xf32>,
    %16 = vector.shape_cast %7 : vector<128x32xf32> to vector<2x8x8x32xf32>
    %c0_25 = arith.constant 0 : index
    %c1 = arith.constant 1 : index
    %c1_26 = arith.constant 1 : index
    %c0_27 = arith.constant 0 : index
    %17 = vector.load %arg18[%c0_25, %c1, %c1_26, %c0_27] : memref<2x10x10x32xf32, #tpu.memory_space<vmem>>, vector<2x8x8x32xf32>
    tpu.vector_store %arg18[%c0_25, %c1, %c1_26, %c0_27], %16 {strides = array<i32>} : memref<2x10x10x32xf32, #tpu.memory_space<vmem>>, vector<2x8x8x32xf32>,
    %c0_28 = arith.constant 0 : index
    %c0_29 = arith.constant 0 : index
    %c0_30 = arith.constant 0 : index
    %c0_31 = arith.constant 0 : index
    %18 = vector.load %arg18[%c0_28, %c0_29, %c0_30, %c0_31] : memref<2x10x10x32xf32, #tpu.memory_space<vmem>>, vector<2x8x8x32xf32>
    %c0_32 = arith.constant 0 : index
    %c0_33 = arith.constant 0 : index
    %c1_34 = arith.constant 1 : index
    %c0_35 = arith.constant 0 : index
    %19 = vector.load %arg18[%c0_32, %c0_33, %c1_34, %c0_35] : memref<2x10x10x32xf32, #tpu.memory_space<vmem>>, vector<2x8x8x32xf32>
    %c0_36 = arith.constant 0 : index
    %c0_37 = arith.constant 0 : index
    %c2 = arith.constant 2 : index
    %c0_38 = arith.constant 0 : index
    %20 = vector.load %arg18[%c0_36, %c0_37, %c2, %c0_38] : memref<2x10x10x32xf32, #tpu.memory_space<vmem>>, vector<2x8x8x32xf32>
    %c0_39 = arith.constant 0 : index
    %c1_40 = arith.constant 1 : index
    %c0_41 = arith.constant 0 : index
    %c0_42 = arith.constant 0 : index
    %21 = vector.load %arg18[%c0_39, %c1_40, %c0_41, %c0_42] : memref<2x10x10x32xf32, #tpu.memory_space<vmem>>, vector<2x8x8x32xf32>
    %c0_43 = arith.constant 0 : index
    %c1_44 = arith.constant 1 : index
    %c1_45 = arith.constant 1 : index
    %c0_46 = arith.constant 0 : index
    %22 = vector.load %arg18[%c0_43, %c1_44, %c1_45, %c0_46] : memref<2x10x10x32xf32, #tpu.memory_space<vmem>>, vector<2x8x8x32xf32>
    %c0_47 = arith.constant 0 : index
    %c1_48 = arith.constant 1 : index
    %c2_49 = arith.constant 2 : index
    %c0_50 = arith.constant 0 : index
    %23 = vector.load %arg18[%c0_47, %c1_48, %c2_49, %c0_50] : memref<2x10x10x32xf32, #tpu.memory_space<vmem>>, vector<2x8x8x32xf32>
    %c0_51 = arith.constant 0 : index
    %c2_52 = arith.constant 2 : index
    %c0_53 = arith.constant 0 : index
    %c0_54 = arith.constant 0 : index
    %24 = vector.load %arg18[%c0_51, %c2_52, %c0_53, %c0_54] : memref<2x10x10x32xf32, #tpu.memory_space<vmem>>, vector<2x8x8x32xf32>
    %c0_55 = arith.constant 0 : index
    %c2_56 = arith.constant 2 : index
    %c1_57 = arith.constant 1 : index
    %c0_58 = arith.constant 0 : index
    %25 = vector.load %arg18[%c0_55, %c2_56, %c1_57, %c0_58] : memref<2x10x10x32xf32, #tpu.memory_space<vmem>>, vector<2x8x8x32xf32>
    %c0_59 = arith.constant 0 : index
    %c2_60 = arith.constant 2 : index
    %c2_61 = arith.constant 2 : index
    %c0_62 = arith.constant 0 : index
    %26 = vector.load %arg18[%c0_59, %c2_60, %c2_61, %c0_62] : memref<2x10x10x32xf32, #tpu.memory_space<vmem>>, vector<2x8x8x32xf32>
    %27 = tpu.concatenate %18, %19, %20, %21, %22, %23, %24, %25, %26 in 3 : vector<2x8x8x32xf32>, vector<2x8x8x32xf32>, vector<2x8x8x32xf32>, vector<2x8x8x32xf32>, vector<2x8x8x32xf32>, vector<2x8x8x32xf32>, vector<2x8x8x32xf32>, vector<2x8x8x32xf32>, vector<2x8x8x32xf32> -> vector<2x8x8x288xf32>
    %28 = vector.shape_cast %27 : vector<2x8x8x288xf32> to vector<128x288xf32>
    %29 = arith.truncf %28 : vector<128x288xf32> to vector<128x288xbf16>
    %c0_63 = arith.constant 0 : index
    %c0_64 = arith.constant 0 : index
    %30 = vector.load %arg4[%c0_63, %c0_64] : memref<288x64xbf16, #tpu.memory_space<vmem>>, vector<288x64xbf16>
    %cst_65 = arith.constant dense<0.000000e+00> : vector<128x64xf32>
    %31 = tpu.matmul %29, %30, %cst_65 {dimension_numbers = #tpu.dot_dimension_numbers<[1], [0], [0], [1], [0, 0, 1, 1], [], []>} : vector<128x288xbf16>, vector<288x64xbf16>, vector<128x64xf32> -> vector<128x64xf32>
    %c0_66 = arith.constant 0 : index
    %c0_67 = arith.constant 0 : index
    %32 = vector.load %arg5[%c0_66, %c0_67] : memref<1x64xf32, #tpu.memory_space<vmem>>, vector<1x64xf32>
    %33 = vector.broadcast %32 : vector<1x64xf32> to vector<128x64xf32>
    %34 = arith.addf %31, %33 : vector<128x64xf32>
    %cst_68 = arith.constant 0.000000e+00 : f32
    %35 = vector.broadcast %cst_68 : f32 to vector<128x64xf32>
    %36 = arith.maximumf %34, %35 : vector<128x64xf32>
    %cst_69 = arith.constant 0.000000e+00 : f32
    %37 = vector.broadcast %cst_69 : f32 to vector<2x1x10x64xf32>
    %c0_70 = arith.constant 0 : index
    %c0_71 = arith.constant 0 : index
    %c0_72 = arith.constant 0 : index
    %c0_73 = arith.constant 0 : index
    %38 = vector.load %arg19[%c0_70, %c0_71, %c0_72, %c0_73] : memref<2x10x10x64xf32, #tpu.memory_space<vmem>>, vector<2x1x10x64xf32>
    tpu.vector_store %arg19[%c0_70, %c0_71, %c0_72, %c0_73], %37 {strides = array<i32>} : memref<2x10x10x64xf32, #tpu.memory_space<vmem>>, vector<2x1x10x64xf32>,
    %cst_74 = arith.constant 0.000000e+00 : f32
    %39 = vector.broadcast %cst_74 : f32 to vector<2x1x10x64xf32>
    %c0_75 = arith.constant 0 : index
    %c9_76 = arith.constant 9 : index
    %c0_77 = arith.constant 0 : index
    %c0_78 = arith.constant 0 : index
    %40 = vector.load %arg19[%c0_75, %c9_76, %c0_77, %c0_78] : memref<2x10x10x64xf32, #tpu.memory_space<vmem>>, vector<2x1x10x64xf32>
    tpu.vector_store %arg19[%c0_75, %c9_76, %c0_77, %c0_78], %39 {strides = array<i32>} : memref<2x10x10x64xf32, #tpu.memory_space<vmem>>, vector<2x1x10x64xf32>,
    %cst_79 = arith.constant 0.000000e+00 : f32
    %41 = vector.broadcast %cst_79 : f32 to vector<2x10x1x64xf32>
    %c0_80 = arith.constant 0 : index
    %c0_81 = arith.constant 0 : index
    %c0_82 = arith.constant 0 : index
    %c0_83 = arith.constant 0 : index
    %42 = vector.load %arg19[%c0_80, %c0_81, %c0_82, %c0_83] : memref<2x10x10x64xf32, #tpu.memory_space<vmem>>, vector<2x10x1x64xf32>
    tpu.vector_store %arg19[%c0_80, %c0_81, %c0_82, %c0_83], %41 {strides = array<i32>} : memref<2x10x10x64xf32, #tpu.memory_space<vmem>>, vector<2x10x1x64xf32>,
    %cst_84 = arith.constant 0.000000e+00 : f32
    %43 = vector.broadcast %cst_84 : f32 to vector<2x10x1x64xf32>
    %c0_85 = arith.constant 0 : index
    %c0_86 = arith.constant 0 : index
    %c9_87 = arith.constant 9 : index
    %c0_88 = arith.constant 0 : index
    %44 = vector.load %arg19[%c0_85, %c0_86, %c9_87, %c0_88] : memref<2x10x10x64xf32, #tpu.memory_space<vmem>>, vector<2x10x1x64xf32>
    tpu.vector_store %arg19[%c0_85, %c0_86, %c9_87, %c0_88], %43 {strides = array<i32>} : memref<2x10x10x64xf32, #tpu.memory_space<vmem>>, vector<2x10x1x64xf32>,
    %45 = vector.shape_cast %36 : vector<128x64xf32> to vector<2x8x8x64xf32>
    %c0_89 = arith.constant 0 : index
    %c1_90 = arith.constant 1 : index
    %c1_91 = arith.constant 1 : index
    %c0_92 = arith.constant 0 : index
    %46 = vector.load %arg19[%c0_89, %c1_90, %c1_91, %c0_92] : memref<2x10x10x64xf32, #tpu.memory_space<vmem>>, vector<2x8x8x64xf32>
    tpu.vector_store %arg19[%c0_89, %c1_90, %c1_91, %c0_92], %45 {strides = array<i32>} : memref<2x10x10x64xf32, #tpu.memory_space<vmem>>, vector<2x8x8x64xf32>,
    %c0_93 = arith.constant 0 : index
    %c0_94 = arith.constant 0 : index
    %c0_95 = arith.constant 0 : index
    %c0_96 = arith.constant 0 : index
    %47 = vector.load %arg19[%c0_93, %c0_94, %c0_95, %c0_96] : memref<2x10x10x64xf32, #tpu.memory_space<vmem>>, vector<2x8x8x64xf32>
    %c0_97 = arith.constant 0 : index
    %c0_98 = arith.constant 0 : index
    %c0_99 = arith.constant 0 : index
    %c0_100 = arith.constant 0 : index
    %48 = vector.load %arg20[%c0_97, %c0_98, %c0_99, %c0_100] : memref<2x8x8x576xf32, #tpu.memory_space<vmem>>, vector<2x8x8x64xf32>
    tpu.vector_store %arg20[%c0_97, %c0_98, %c0_99, %c0_100], %47 {strides = array<i32>} : memref<2x8x8x576xf32, #tpu.memory_space<vmem>>, vector<2x8x8x64xf32>,
    %c0_101 = arith.constant 0 : index
    %c0_102 = arith.constant 0 : index
    %c1_103 = arith.constant 1 : index
    %c0_104 = arith.constant 0 : index
    %49 = vector.load %arg19[%c0_101, %c0_102, %c1_103, %c0_104] : memref<2x10x10x64xf32, #tpu.memory_space<vmem>>, vector<2x8x8x64xf32>
    %c0_105 = arith.constant 0 : index
    %c0_106 = arith.constant 0 : index
    %c0_107 = arith.constant 0 : index
    %c64 = arith.constant 64 : index
    %50 = vector.load %arg20[%c0_105, %c0_106, %c0_107, %c64] : memref<2x8x8x576xf32, #tpu.memory_space<vmem>>, vector<2x8x8x64xf32>
    tpu.vector_store %arg20[%c0_105, %c0_106, %c0_107, %c64], %49 {strides = array<i32>} : memref<2x8x8x576xf32, #tpu.memory_space<vmem>>, vector<2x8x8x64xf32>,
    %c0_108 = arith.constant 0 : index
    %c0_109 = arith.constant 0 : index
    %c2_110 = arith.constant 2 : index
    %c0_111 = arith.constant 0 : index
    %51 = vector.load %arg19[%c0_108, %c0_109, %c2_110, %c0_111] : memref<2x10x10x64xf32, #tpu.memory_space<vmem>>, vector<2x8x8x64xf32>
    %c0_112 = arith.constant 0 : index
    %c0_113 = arith.constant 0 : index
    %c0_114 = arith.constant 0 : index
    %c128 = arith.constant 128 : index
    %52 = vector.load %arg20[%c0_112, %c0_113, %c0_114, %c128] : memref<2x8x8x576xf32, #tpu.memory_space<vmem>>, vector<2x8x8x64xf32>
    tpu.vector_store %arg20[%c0_112, %c0_113, %c0_114, %c128], %51 {strides = array<i32>} : memref<2x8x8x576xf32, #tpu.memory_space<vmem>>, vector<2x8x8x64xf32>,
    %c0_115 = arith.constant 0 : index
    %c1_116 = arith.constant 1 : index
    %c0_117 = arith.constant 0 : index
    %c0_118 = arith.constant 0 : index
    %53 = vector.load %arg19[%c0_115, %c1_116, %c0_117, %c0_118] : memref<2x10x10x64xf32, #tpu.memory_space<vmem>>, vector<2x8x8x64xf32>
    %c0_119 = arith.constant 0 : index
    %c0_120 = arith.constant 0 : index
    %c0_121 = arith.constant 0 : index
    %c192 = arith.constant 192 : index
    %54 = vector.load %arg20[%c0_119, %c0_120, %c0_121, %c192] : memref<2x8x8x576xf32, #tpu.memory_space<vmem>>, vector<2x8x8x64xf32>
    tpu.vector_store %arg20[%c0_119, %c0_120, %c0_121, %c192], %53 {strides = array<i32>} : memref<2x8x8x576xf32, #tpu.memory_space<vmem>>, vector<2x8x8x64xf32>,
    %c0_122 = arith.constant 0 : index
    %c1_123 = arith.constant 1 : index
    %c1_124 = arith.constant 1 : index
    %c0_125 = arith.constant 0 : index
    %55 = vector.load %arg19[%c0_122, %c1_123, %c1_124, %c0_125] : memref<2x10x10x64xf32, #tpu.memory_space<vmem>>, vector<2x8x8x64xf32>
    %c0_126 = arith.constant 0 : index
    %c0_127 = arith.constant 0 : index
    %c0_128 = arith.constant 0 : index
    %c256 = arith.constant 256 : index
    %56 = vector.load %arg20[%c0_126, %c0_127, %c0_128, %c256] : memref<2x8x8x576xf32, #tpu.memory_space<vmem>>, vector<2x8x8x64xf32>
    tpu.vector_store %arg20[%c0_126, %c0_127, %c0_128, %c256], %55 {strides = array<i32>} : memref<2x8x8x576xf32, #tpu.memory_space<vmem>>, vector<2x8x8x64xf32>,
    %c0_129 = arith.constant 0 : index
    %c1_130 = arith.constant 1 : index
    %c2_131 = arith.constant 2 : index
    %c0_132 = arith.constant 0 : index
    %57 = vector.load %arg19[%c0_129, %c1_130, %c2_131, %c0_132] : memref<2x10x10x64xf32, #tpu.memory_space<vmem>>, vector<2x8x8x64xf32>
    %c0_133 = arith.constant 0 : index
    %c0_134 = arith.constant 0 : index
    %c0_135 = arith.constant 0 : index
    %c320 = arith.constant 320 : index
    %58 = vector.load %arg20[%c0_133, %c0_134, %c0_135, %c320] : memref<2x8x8x576xf32, #tpu.memory_space<vmem>>, vector<2x8x8x64xf32>
    tpu.vector_store %arg20[%c0_133, %c0_134, %c0_135, %c320], %57 {strides = array<i32>} : memref<2x8x8x576xf32, #tpu.memory_space<vmem>>, vector<2x8x8x64xf32>,
    %c0_136 = arith.constant 0 : index
    %c2_137 = arith.constant 2 : index
    %c0_138 = arith.constant 0 : index
    %c0_139 = arith.constant 0 : index
    %59 = vector.load %arg19[%c0_136, %c2_137, %c0_138, %c0_139] : memref<2x10x10x64xf32, #tpu.memory_space<vmem>>, vector<2x8x8x64xf32>
    %c0_140 = arith.constant 0 : index
    %c0_141 = arith.constant 0 : index
    %c0_142 = arith.constant 0 : index
    %c384 = arith.constant 384 : index
    %60 = vector.load %arg20[%c0_140, %c0_141, %c0_142, %c384] : memref<2x8x8x576xf32, #tpu.memory_space<vmem>>, vector<2x8x8x64xf32>
    tpu.vector_store %arg20[%c0_140, %c0_141, %c0_142, %c384], %59 {strides = array<i32>} : memref<2x8x8x576xf32, #tpu.memory_space<vmem>>, vector<2x8x8x64xf32>,
    %c0_143 = arith.constant 0 : index
    %c2_144 = arith.constant 2 : index
    %c1_145 = arith.constant 1 : index
    %c0_146 = arith.constant 0 : index
    %61 = vector.load %arg19[%c0_143, %c2_144, %c1_145, %c0_146] : memref<2x10x10x64xf32, #tpu.memory_space<vmem>>, vector<2x8x8x64xf32>
    %c0_147 = arith.constant 0 : index
    %c0_148 = arith.constant 0 : index
    %c0_149 = arith.constant 0 : index
    %c448 = arith.constant 448 : index
    %62 = vector.load %arg20[%c0_147, %c0_148, %c0_149, %c448] : memref<2x8x8x576xf32, #tpu.memory_space<vmem>>, vector<2x8x8x64xf32>
    tpu.vector_store %arg20[%c0_147, %c0_148, %c0_149, %c448], %61 {strides = array<i32>} : memref<2x8x8x576xf32, #tpu.memory_space<vmem>>, vector<2x8x8x64xf32>,
    %c0_150 = arith.constant 0 : index
    %c2_151 = arith.constant 2 : index
    %c2_152 = arith.constant 2 : index
    %c0_153 = arith.constant 0 : index
    %63 = vector.load %arg19[%c0_150, %c2_151, %c2_152, %c0_153] : memref<2x10x10x64xf32, #tpu.memory_space<vmem>>, vector<2x8x8x64xf32>
    %c0_154 = arith.constant 0 : index
    %c0_155 = arith.constant 0 : index
    %c0_156 = arith.constant 0 : index
    %c512 = arith.constant 512 : index
    %64 = vector.load %arg20[%c0_154, %c0_155, %c0_156, %c512] : memref<2x8x8x576xf32, #tpu.memory_space<vmem>>, vector<2x8x8x64xf32>
    tpu.vector_store %arg20[%c0_154, %c0_155, %c0_156, %c512], %63 {strides = array<i32>} : memref<2x8x8x576xf32, #tpu.memory_space<vmem>>, vector<2x8x8x64xf32>,
    %c0_157 = arith.constant 0 : index
    %c0_158 = arith.constant 0 : index
    %c0_159 = arith.constant 0 : index
    %c0_160 = arith.constant 0 : index
    %65 = vector.load %arg20[%c0_157, %c0_158, %c0_159, %c0_160] : memref<2x8x8x576xf32, #tpu.memory_space<vmem>>, vector<2x8x8x576xf32>
    %66 = vector.shape_cast %65 : vector<2x8x8x576xf32> to vector<128x576xf32>
    %67 = arith.truncf %66 : vector<128x576xf32> to vector<128x576xbf16>
    %c0_161 = arith.constant 0 : index
    %c0_162 = arith.constant 0 : index
    %68 = vector.load %arg6[%c0_161, %c0_162] : memref<576x128xbf16, #tpu.memory_space<vmem>>, vector<576x128xbf16>
    %cst_163 = arith.constant dense<0.000000e+00> : vector<128x128xf32>
    %69 = tpu.matmul %67, %68, %cst_163 {dimension_numbers = #tpu.dot_dimension_numbers<[1], [0], [0], [1], [0, 0, 1, 1], [], []>} : vector<128x576xbf16>, vector<576x128xbf16>, vector<128x128xf32> -> vector<128x128xf32>
    %c0_164 = arith.constant 0 : index
    %c0_165 = arith.constant 0 : index
    %70 = vector.load %arg7[%c0_164, %c0_165] : memref<1x128xf32, #tpu.memory_space<vmem>>, vector<1x128xf32>
    %71 = vector.broadcast %70 : vector<1x128xf32> to vector<128x128xf32>
    %72 = arith.addf %69, %71 : vector<128x128xf32>
    %cst_166 = arith.constant 0.000000e+00 : f32
    %73 = vector.broadcast %cst_166 : f32 to vector<128x128xf32>
    %74 = arith.maximumf %72, %73 : vector<128x128xf32>
    %75 = arith.truncf %74 : vector<128x128xf32> to vector<128x128xbf16>
    %c0_167 = arith.constant 0 : index
    %c0_168 = arith.constant 0 : index
    %76 = vector.load %arg8[%c0_167, %c0_168] : memref<6x128xbf16, #tpu.memory_space<vmem>>, vector<6x128xbf16>
    %cst_169 = arith.constant dense<0.000000e+00> : vector<6x128xf32>
    %77 = tpu.matmul %76, %75, %cst_169 {dimension_numbers = #tpu.dot_dimension_numbers<[1], [1], [0], [0], [0, 0, 1, 0], [], []>} : vector<6x128xbf16>, vector<128x128xbf16>, vector<6x128xf32> -> vector<6x128xf32>
    %c0_170 = arith.constant 0 : index
    %c0_171 = arith.constant 0 : index
    %78 = vector.load %arg9[%c0_170, %c0_171] : memref<6x1xf32, #tpu.memory_space<vmem>>, vector<6x1xf32>
    %79 = vector.broadcast %78 : vector<6x1xf32> to vector<6x128xf32>
    %80 = arith.addf %77, %79 : vector<6x128xf32>
    %cst_172 = arith.constant 0.000000e+00 : f32
    %81 = vector.broadcast %cst_172 : f32 to vector<6x128xf32>
    %82 = arith.maximumf %80, %81 : vector<6x128xf32>
    %83 = vector.extract_strided_slice %82 {offsets = [0, 0], sizes = [1, 64], strides = [1, 1]} : vector<6x128xf32> to vector<1x64xf32>
    %84 = vector.extract_strided_slice %82 {offsets = [1, 0], sizes = [1, 64], strides = [1, 1]} : vector<6x128xf32> to vector<1x64xf32>
    %85 = vector.extract_strided_slice %82 {offsets = [2, 0], sizes = [1, 64], strides = [1, 1]} : vector<6x128xf32> to vector<1x64xf32>
    %86 = vector.extract_strided_slice %82 {offsets = [3, 0], sizes = [1, 64], strides = [1, 1]} : vector<6x128xf32> to vector<1x64xf32>
    %87 = tpu.concatenate %83, %84, %85, %86 in 1 : vector<1x64xf32>, vector<1x64xf32>, vector<1x64xf32>, vector<1x64xf32> -> vector<1x256xf32>
    %88 = vector.extract_strided_slice %82 {offsets = [0, 64], sizes = [1, 64], strides = [1, 1]} : vector<6x128xf32> to vector<1x64xf32>
    %89 = vector.extract_strided_slice %82 {offsets = [1, 64], sizes = [1, 64], strides = [1, 1]} : vector<6x128xf32> to vector<1x64xf32>
    %90 = vector.extract_strided_slice %82 {offsets = [2, 64], sizes = [1, 64], strides = [1, 1]} : vector<6x128xf32> to vector<1x64xf32>
    %91 = vector.extract_strided_slice %82 {offsets = [3, 64], sizes = [1, 64], strides = [1, 1]} : vector<6x128xf32> to vector<1x64xf32>
    %92 = tpu.concatenate %88, %89, %90, %91 in 1 : vector<1x64xf32>, vector<1x64xf32>, vector<1x64xf32>, vector<1x64xf32> -> vector<1x256xf32>
    %93 = tpu.concatenate %87, %92 in 0 : vector<1x256xf32>, vector<1x256xf32> -> vector<2x256xf32>
    %94 = arith.truncf %93 : vector<2x256xf32> to vector<2x256xbf16>
    %95 = vector.extract_strided_slice %82 {offsets = [4, 0], sizes = [1, 64], strides = [1, 1]} : vector<6x128xf32> to vector<1x64xf32>
    %96 = vector.extract_strided_slice %82 {offsets = [5, 0], sizes = [1, 64], strides = [1, 1]} : vector<6x128xf32> to vector<1x64xf32>
    %97 = tpu.concatenate %95, %96 in 1 : vector<1x64xf32>, vector<1x64xf32> -> vector<1x128xf32>
    %98 = vector.extract_strided_slice %82 {offsets = [4, 64], sizes = [1, 64], strides = [1, 1]} : vector<6x128xf32> to vector<1x64xf32>
    %99 = vector.extract_strided_slice %82 {offsets = [5, 64], sizes = [1, 64], strides = [1, 1]} : vector<6x128xf32> to vector<1x64xf32>
    %100 = tpu.concatenate %98, %99 in 1 : vector<1x64xf32>, vector<1x64xf32> -> vector<1x128xf32>
    %101 = tpu.concatenate %97, %100 in 0 : vector<1x128xf32>, vector<1x128xf32> -> vector<2x128xf32>
    %102 = arith.truncf %101 : vector<2x128xf32> to vector<2x128xbf16>
    %c0_173 = arith.constant 0 : index
    %c0_174 = arith.constant 0 : index
    %103 = vector.load %arg10[%c0_173, %c0_174] : memref<256x64xbf16, #tpu.memory_space<vmem>>, vector<256x64xbf16>
    %cst_175 = arith.constant dense<0.000000e+00> : vector<2x64xf32>
    %104 = tpu.matmul %94, %103, %cst_175 {dimension_numbers = #tpu.dot_dimension_numbers<[1], [0], [0], [1], [0, 0, 1, 1], [], []>} : vector<2x256xbf16>, vector<256x64xbf16>, vector<2x64xf32> -> vector<2x64xf32>
    %c0_176 = arith.constant 0 : index
    %c0_177 = arith.constant 0 : index
    %105 = vector.load %arg11[%c0_176, %c0_177] : memref<1x64xf32, #tpu.memory_space<vmem>>, vector<1x64xf32>
    %106 = vector.broadcast %105 : vector<1x64xf32> to vector<2x64xf32>
    %107 = arith.addf %104, %106 : vector<2x64xf32>
    %cst_178 = arith.constant dense<0xFF800000> : vector<2xf32>
    %108 = vector.multi_reduction <maximumf>, %107, %cst_178 [1] : vector<2x64xf32> to vector<2xf32>
    %109 = vector.shape_cast %108 : vector<2xf32> to vector<2x1xf32>
    %110 = vector.broadcast %109 : vector<2x1xf32> to vector<2x64xf32>
    %111 = arith.subf %107, %110 : vector<2x64xf32>
    %112 = math.exp %111 : vector<2x64xf32>
    %cst_179 = arith.constant dense<0.000000e+00> : vector<2xf32>
    %113 = vector.multi_reduction <add>, %112, %cst_179 [1] : vector<2x64xf32> to vector<2xf32>
    %114 = vector.shape_cast %113 : vector<2xf32> to vector<2x1xf32>
    %115 = math.log %114 : vector<2x1xf32>
    %116 = vector.broadcast %115 : vector<2x1xf32> to vector<2x64xf32>
    %117 = arith.subf %111, %116 : vector<2x64xf32>
    %c0_180 = arith.constant 0 : index
    %c0_181 = arith.constant 0 : index
    %118 = vector.load %arg16[%c0_180, %c0_181] : memref<2x64xf32, #tpu.memory_space<vmem>>, vector<2x64xf32>
    tpu.vector_store %arg16[%c0_180, %c0_181], %117 {strides = array<i32>} : memref<2x64xf32, #tpu.memory_space<vmem>>, vector<2x64xf32>,
    %c0_182 = arith.constant 0 : index
    %c0_183 = arith.constant 0 : index
    %119 = vector.load %arg12[%c0_182, %c0_183] : memref<128x64xbf16, #tpu.memory_space<vmem>>, vector<128x64xbf16>
    %cst_184 = arith.constant dense<0.000000e+00> : vector<2x64xf32>
    %120 = tpu.matmul %102, %119, %cst_184 {dimension_numbers = #tpu.dot_dimension_numbers<[1], [0], [0], [1], [0, 0, 1, 1], [], []>} : vector<2x128xbf16>, vector<128x64xbf16>, vector<2x64xf32> -> vector<2x64xf32>
    %c0_185 = arith.constant 0 : index
    %c0_186 = arith.constant 0 : index
    %121 = vector.load %arg13[%c0_185, %c0_186] : memref<1x64xf32, #tpu.memory_space<vmem>>, vector<1x64xf32>
    %122 = vector.broadcast %121 : vector<1x64xf32> to vector<2x64xf32>
    %123 = arith.addf %120, %122 : vector<2x64xf32>
    %cst_187 = arith.constant 0.000000e+00 : f32
    %124 = vector.broadcast %cst_187 : f32 to vector<2x64xf32>
    %125 = arith.maximumf %123, %124 : vector<2x64xf32>
    %126 = arith.truncf %125 : vector<2x64xf32> to vector<2x64xbf16>
    %c0_188 = arith.constant 0 : index
    %c0_189 = arith.constant 0 : index
    %127 = vector.load %arg14[%c0_188, %c0_189] : memref<64x1xbf16, #tpu.memory_space<vmem>>, vector<64x1xbf16>
    %cst_190 = arith.constant dense<0.000000e+00> : vector<2x1xf32>
    %128 = tpu.matmul %126, %127, %cst_190 {dimension_numbers = #tpu.dot_dimension_numbers<[1], [0], [0], [1], [0, 0, 1, 1], [], []>} : vector<2x64xbf16>, vector<64x1xbf16>, vector<2x1xf32> -> vector<2x1xf32>
    %c0_191 = arith.constant 0 : index
    %c0_192 = arith.constant 0 : index
    %129 = vector.load %arg15[%c0_191, %c0_192] : memref<1x1xf32, #tpu.memory_space<vmem>>, vector<1x1xf32>
    %130 = vector.broadcast %129 : vector<1x1xf32> to vector<2x1xf32>
    %131 = arith.addf %128, %130 : vector<2x1xf32>
    %132 = math.tanh %131 : vector<2x1xf32>
    %c0_193 = arith.constant 0 : index
    %c0_194 = arith.constant 0 : index
    %133 = vector.load %arg17[%c0_193, %c0_194] : memref<2x1xf32, #tpu.memory_space<vmem>>, vector<2x1xf32>
    tpu.vector_store %arg17[%c0_193, %c0_194], %132 {strides = array<i32>} : memref<2x1xf32, #tpu.memory_space<vmem>>, vector<2x1xf32>,
    return
  }
  func.func @transform_0(%arg0: i32) -> (i32, i32) {
    %c0_i32 = arith.constant 0 : i32
    %c0_i32_0 = arith.constant 0 : i32
    %c0_i32_1 = arith.constant 0 : i32
    return %c0_i32, %c0_i32_0 : i32, i32
  }
  func.func @transform_1(%arg0: i32) -> (i32, i32) {
    %c0_i32 = arith.constant 0 : i32
    %c0_i32_0 = arith.constant 0 : i32
    %c0_i32_1 = arith.constant 0 : i32
    return %c0_i32, %c0_i32_0 : i32, i32
  }
  func.func @transform_2(%arg0: i32) -> (i32, i32) {
    %c0_i32 = arith.constant 0 : i32
    %c0_i32_0 = arith.constant 0 : i32
    %c0_i32_1 = arith.constant 0 : i32
    return %c0_i32, %c0_i32_0 : i32, i32
  }
  func.func @transform_3(%arg0: i32) -> (i32, i32) {
    %c0_i32 = arith.constant 0 : i32
    %c0_i32_0 = arith.constant 0 : i32
    %c0_i32_1 = arith.constant 0 : i32
    return %c0_i32, %c0_i32_0 : i32, i32
  }
  func.func @transform_4(%arg0: i32) -> (i32, i32) {
    %c0_i32 = arith.constant 0 : i32
    %c0_i32_0 = arith.constant 0 : i32
    %c0_i32_1 = arith.constant 0 : i32
    return %c0_i32, %c0_i32_0 : i32, i32
  }
  func.func @transform_5(%arg0: i32) -> (i32, i32) {
    %c0_i32 = arith.constant 0 : i32
    %c0_i32_0 = arith.constant 0 : i32
    %c0_i32_1 = arith.constant 0 : i32
    return %c0_i32, %c0_i32_0 : i32, i32
  }
  func.func @transform_6(%arg0: i32) -> (i32, i32) {
    %c0_i32 = arith.constant 0 : i32
    %c0_i32_0 = arith.constant 0 : i32
    %c0_i32_1 = arith.constant 0 : i32
    return %c0_i32, %c0_i32_0 : i32, i32
  }
  func.func @transform_7(%arg0: i32) -> (i32, i32) {
    %c0_i32 = arith.constant 0 : i32
    %c0_i32_0 = arith.constant 0 : i32
    %c0_i32_1 = arith.constant 0 : i32
    return %c0_i32, %c0_i32_0 : i32, i32
  }
  func.func @transform_8(%arg0: i32) -> (i32, i32) {
    %c0_i32 = arith.constant 0 : i32
    %c0_i32_0 = arith.constant 0 : i32
    %c0_i32_1 = arith.constant 0 : i32
    return %c0_i32, %c0_i32_0 : i32, i32
  }
  func.func @transform_9(%arg0: i32) -> (i32, i32) {
    %c0_i32 = arith.constant 0 : i32
    %c0_i32_0 = arith.constant 0 : i32
    %c0_i32_1 = arith.constant 0 : i32
    return %c0_i32, %c0_i32_0 : i32, i32
  }
  func.func @transform_10(%arg0: i32) -> (i32, i32) {
    %c0_i32 = arith.constant 0 : i32
    %c0_i32_0 = arith.constant 0 : i32
    %c0_i32_1 = arith.constant 0 : i32
    return %c0_i32, %c0_i32_0 : i32, i32
  }
  func.func @transform_11(%arg0: i32) -> (i32, i32) {
    %c0_i32 = arith.constant 0 : i32
    %c0_i32_0 = arith.constant 0 : i32
    %c0_i32_1 = arith.constant 0 : i32
    return %c0_i32, %c0_i32_0 : i32, i32
  }
  func.func @transform_12(%arg0: i32) -> (i32, i32) {
    %c0_i32 = arith.constant 0 : i32
    %c0_i32_0 = arith.constant 0 : i32
    %c0_i32_1 = arith.constant 0 : i32
    return %c0_i32, %c0_i32_0 : i32, i32
  }
  func.func @transform_13(%arg0: i32) -> (i32, i32) {
    %c0_i32 = arith.constant 0 : i32
    %c0_i32_0 = arith.constant 0 : i32
    %c0_i32_1 = arith.constant 0 : i32
    return %c0_i32, %c0_i32_0 : i32, i32
  }
  func.func @transform_14(%arg0: i32) -> (i32, i32) {
    %c0_i32 = arith.constant 0 : i32
    %c0_i32_0 = arith.constant 0 : i32
    %c0_i32_1 = arith.constant 0 : i32
    return %c0_i32, %c0_i32_0 : i32, i32
  }
  func.func @transform_15(%arg0: i32) -> (i32, i32) {
    %c0_i32 = arith.constant 0 : i32
    %c0_i32_0 = arith.constant 0 : i32
    %c0_i32_1 = arith.constant 0 : i32
    return %c0_i32, %c0_i32_0 : i32, i32
  }
  func.func @transform_16(%arg0: i32) -> (i32, i32) {
    %c0_i32 = arith.constant 0 : i32
    %c0_i32_0 = arith.constant 0 : i32
    %c0_i32_1 = arith.constant 0 : i32
    return %c0_i32, %c0_i32_0 : i32, i32
  }
}

</mosaic_0001>

<llo_original>
// kernel: net_forward.1
$region0: #{net_forward.1}
  #allocation0 [shape = 'u32[]', space=smem, size = 0x4, offset = 0x4, fixed_abs, tag = 'smem constant byte address 0x4 - core index']
  #allocation1 [shape = 'u32[144,128]{1,0:T(1,128)}', space=vmem, size = 0x12000, scoped, tag = 'internal scratch']
  #allocation2 [shape = 'f32[2,10,10,32]{3,2,1,0:T(8,128)}', space=vmem, size = 0x28000, scoped, tag = 'scratch operand']
  #allocation3 [shape = 'f32[2,10,10,64]{3,2,1,0:T(8,128)}', space=vmem, size = 0x28000, scoped, tag = 'scratch operand']
  #allocation4 [shape = 'f32[2,8,8,576]{3,2,1,0:T(8,128)}', space=vmem, size = 0x50000, scoped, tag = 'scratch operand']
  #allocation5 [shape = 'f32[1,1]{1,0:T(1,128)S(1)}', space=vmem, size = 0x200, scoped, tag = 'scoped memory for net_forward.1']
  %s0 = inlined_call_operand.vmem [shape: bf16[128,36], index: 0, kind: input, shape index: {}]
  %s1 = inlined_call_operand.vmem [shape: bf16[36,32], index: 1, kind: input, shape index: {}]
  %s2 = inlined_call_operand.vmem [shape: f32[1,32], index: 2, kind: input, shape index: {}]
  %s3 = inlined_call_operand.vmem [shape: bf16[288,64], index: 3, kind: input, shape index: {}]
  %s4 = inlined_call_operand.vmem [shape: f32[1,64], index: 4, kind: input, shape index: {}]
  %s5 = inlined_call_operand.vmem [shape: bf16[576,128], index: 5, kind: input, shape index: {}]
  %s6 = inlined_call_operand.vmem [shape: f32[1,128], index: 6, kind: input, shape index: {}]
  %s7 = inlined_call_operand.vmem [shape: bf16[6,128], index: 7, kind: input, shape index: {}]
  %s8 = inlined_call_operand.vmem [shape: f32[6,1], index: 8, kind: input, shape index: {}]
  %s9 = inlined_call_operand.vmem [shape: bf16[256,64], index: 9, kind: input, shape index: {}]
  %s10 = inlined_call_operand.vmem [shape: f32[1,64], index: 10, kind: input, shape index: {}]
  %s11 = inlined_call_operand.vmem [shape: bf16[128,64], index: 11, kind: input, shape index: {}]
  %s12 = inlined_call_operand.vmem [shape: f32[1,64], index: 12, kind: input, shape index: {}]
  %s13 = inlined_call_operand.vmem [shape: bf16[64,1], index: 13, kind: input, shape index: {}]
  %s14 = inlined_call_operand.<no memory space> [shape: f32[1,1], index: 14, kind: input, shape index: {}]
  %s15 = inlined_call_operand.hbm [shape: f32[2,64], index: 15, kind: output, shape index: {0}]
  %s16 = inlined_call_operand.vmem [shape: f32[2,1], index: 16, kind: output, shape index: {1}]
  %17 = xla_tuple %s15, %s16
  %s18 = sld [smem:[#allocation0]]
  $region78: #{net_forward.1} parent=0
    _
  %s20 = ssub.s32 1, %s18
  %s21 = scalar_select 0, %s20, %s18
  %v22 = vstv %s14
  %23 = vst [vmem:[#allocation5] sm:$0x1] %v22
  $region1: #{net_forward.1} parent=0
    #allocation6 [shape = 'u8[1024]{0}', space=vmem, size = 0x400, scoped, tag = 'output window, operand 0, single buffered']
    #allocation7 [shape = 's32[1]{0}', space=sflag, size = 0x4, scoped, tag = 'scoped memory for net_forward.1']
    %24 = vsyncpa [#allocation7], 0
    // Predicated region
    $region2: #{net_forward.1} parent=1 // pred_check
      _
    $region3: #{net_forward.1} parent=1 // pred_check_branch
      %26 = sbr.rel (0) target = $region5
    $region4: #{net_forward.1} parent=1 // pred_region
      _
    $region5: #{net_forward.1} parent=1 // pred_fallthru
      _
    // Predicated region
    $region6: #{net_forward.1} parent=1 // pred_check
      _
    $region7: #{net_forward.1} parent=1 // pred_check_branch
      %28 = sbr.rel (0) target = $region9
    $region8: #{net_forward.1} parent=1 // pred_region
      _
    $region9: #{net_forward.1} parent=1 // pred_fallthru
      _
    // Predicated region
    $region10: #{net_forward.1} parent=1 // pred_check
      _
    $region11: #{net_forward.1} parent=1 // pred_check_branch
      %30 = sbr.rel (0) target = $region13
    $region12: #{net_forward.1} parent=1 // pred_region
      _
    $region13: #{net_forward.1} parent=1 // pred_fallthru
      _
    // Predicated region
    $region14: #{net_forward.1} parent=1 // pred_check
      _
    $region15: #{net_forward.1} parent=1 // pred_check_branch
      %32 = sbr.rel (0) target = $region17
    $region16: #{net_forward.1} parent=1 // pred_region
      _
    $region17: #{net_forward.1} parent=1 // pred_fallthru
      _
    // Predicated region
    $region18: #{net_forward.1} parent=1 // pred_check
      _
    $region19: #{net_forward.1} parent=1 // pred_check_branch
      %34 = sbr.rel (0) target = $region21
    $region20: #{net_forward.1} parent=1 // pred_region
      _
    $region21: #{net_forward.1} parent=1 // pred_fallthru
      _
    // Predicated region
    $region22: #{net_forward.1} parent=1 // pred_check
      _
    $region23: #{net_forward.1} parent=1 // pred_check_branch
      %36 = sbr.rel (0) target = $region25
    $region24: #{net_forward.1} parent=1 // pred_region
      _
    $region25: #{net_forward.1} parent=1 // pred_fallthru
      _
    // Predicated region
    $region26: #{net_forward.1} parent=1 // pred_check
      _
    $region27: #{net_forward.1} parent=1 // pred_check_branch
      %38 = sbr.rel (0) target = $region29
    $region28: #{net_forward.1} parent=1 // pred_region
      _
    $region29: #{net_forward.1} parent=1 // pred_fallthru
      _
    // Predicated region
    $region30: #{net_forward.1} parent=1 // pred_check
      _
    $region31: #{net_forward.1} parent=1 // pred_check_branch
      %40 = sbr.rel (0) target = $region33
    $region32: #{net_forward.1} parent=1 // pred_region
      _
    $region33: #{net_forward.1} parent=1 // pred_fallthru
      _
    // Predicated region
    $region34: #{net_forward.1} parent=1 // pred_check
      _
    $region35: #{net_forward.1} parent=1 // pred_check_branch
      %42 = sbr.rel (0) target = $region37
    $region36: #{net_forward.1} parent=1 // pred_region
      _
    $region37: #{net_forward.1} parent=1 // pred_fallthru
      _
    // Predicated region
    $region38: #{net_forward.1} parent=1 // pred_check
      _
    $region39: #{net_forward.1} parent=1 // pred_check_branch
      %44 = sbr.rel (0) target = $region41
    $region40: #{net_forward.1} parent=1 // pred_region
      _
    $region41: #{net_forward.1} parent=1 // pred_fallthru
      _
    // Predicated region
    $region42: #{net_forward.1} parent=1 // pred_check
      _
    $region43: #{net_forward.1} parent=1 // pred_check_branch
      %46 = sbr.rel (0) target = $region45
    $region44: #{net_forward.1} parent=1 // pred_region
      _
    $region45: #{net_forward.1} parent=1 // pred_fallthru
      _
    // Predicated region
    $region46: #{net_forward.1} parent=1 // pred_check
      _
    $region47: #{net_forward.1} parent=1 // pred_check_branch
      %48 = sbr.rel (0) target = $region49
    $region48: #{net_forward.1} parent=1 // pred_region
      _
    $region49: #{net_forward.1} parent=1 // pred_fallthru
      _
    // Predicated region
    $region50: #{net_forward.1} parent=1 // pred_check
      _
    $region51: #{net_forward.1} parent=1 // pred_check_branch
      %50 = sbr.rel (0) target = $region53
    $region52: #{net_forward.1} parent=1 // pred_region
      _
    $region53: #{net_forward.1} parent=1 // pred_fallthru
      _
    // Predicated region
    $region54: #{net_forward.1} parent=1 // pred_check
      _
    $region55: #{net_forward.1} parent=1 // pred_check_branch
      %52 = sbr.rel (0) target = $region57
    $region56: #{net_forward.1} parent=1 // pred_region
      _
    $region57: #{net_forward.1} parent=1 // pred_fallthru
      _
    // Predicated region
    $region58: #{net_forward.1} parent=1 // pred_check
      _
    $region59: #{net_forward.1} parent=1 // pred_check_branch
      %54 = sbr.rel (0) target = $region61
    $region60: #{net_forward.1} parent=1 // pred_region
      _
    $region61: #{net_forward.1} parent=1 // pred_fallthru
      _
    %v56 = vld [vmem:[%s0] sm:$0xf]
    %v57 = vld [vmem:[%s0 + $0x4] sm:$0xf]
    %v58 = vld [vmem:[%s0 + $0x8] sm:$0xf]
    %v59 = vld [vmem:[%s0 + $0xc] sm:$0xf]
    %v60 = vld [vmem:[%s0 + $0x10] sm:$0xf]
    %v61 = vld [vmem:[%s0 + $0x14] sm:$0xf]
    %v62 = vld [vmem:[%s0 + $0x18] sm:$0xf]
    %v63 = vld [vmem:[%s0 + $0x1c] sm:$0xf]
    %v64 = vld [vmem:[%s0 + $0x20] sm:$0xf]
    %v65 = vld [vmem:[%s0 + $0x24] sm:$0xf]
    %v66 = vld [vmem:[%s0 + $0x28] sm:$0xf]
    %v67 = vld [vmem:[%s0 + $0x2c] sm:$0xf]
    %v68 = vld [vmem:[%s0 + $0x30] sm:$0xf]
    %v69 = vld [vmem:[%s0 + $0x34] sm:$0xf]
    %v70 = vld [vmem:[%s0 + $0x38] sm:$0xf]
    %v71 = vld [vmem:[%s0 + $0x3c] sm:$0xf]
    %v72 = vld [vmem:[%s1] sm:$0xf]
    %v73 = vld [vmem:[%s1 + $0x4] sm:$0xf]
    %v74 = vld [vmem:[%s1 + $0x8] sm:$0xf]
    %v75 = vld [vmem:[%s1 + $0xc] sm:$0xf]
    %v76 = vld [vmem:[%s1 + $0x10] sm:$0x3]
    %v77 = vld [vmem:[%s2] sm:$0x1]
    %v79 = vlaneseq
    %v80 = vshrl.u32 %v79, 7
    %v81 = vsub.s32 0, %v80
    %v82 = vrot.slane %v77, %v81
    %v100 = vunpack.c.l.b16 %v56
    %v101 = vunpack.c.l.b16 %v57
    %v102 = vunpack.c.l.b16 %v58
    %v103 = vunpack.c.l.b16 %v59
    %v104 = vunpack.c.l.b16 %v60
    %v105 = vunpack.c.l.b16 %v61
    %v106 = vunpack.c.l.b16 %v62
    %v107 = vunpack.c.l.b16 %v63
    %v108 = vunpack.c.l.b16 %v64
    %v109 = vunpack.c.l.b16 %v65
    %v110 = vunpack.c.l.b16 %v66
    %v111 = vunpack.c.l.b16 %v67
    %v112 = vunpack.c.l.b16 %v68
    %v113 = vunpack.c.l.b16 %v69
    %v114 = vunpack.c.l.b16 %v70
    %v115 = vunpack.c.l.b16 %v71
    %v116 = vpack.c.b16 %v101, %v100
    %v117 = vpack.c.b16 %v103, %v102
    %v118 = vpack.c.b16 %v105, %v104
    %v119 = vpack.c.b16 %v107, %v106
    %v120 = vpack.c.b16 %v109, %v108
    %v121 = vpack.c.b16 %v111, %v110
    %v122 = vpack.c.b16 %v113, %v112
    %v123 = vpack.c.b16 %v115, %v114
    %v129 = vunpack.c.l.b16 %v72
    %v130 = vunpack.c.l.b16 %v73
    %v131 = vunpack.c.l.b16 %v74
    %v132 = vunpack.c.l.b16 %v75
    %v133 = vunpack.c.l.b16 %v76
    %v134 = vpack.c.b16 %v130, %v129
    %v135 = vpack.c.b16 %v132, %v131
    %v136 = vpack.c.b16 %v133, %v133
    %vm139 = vcmask 293888
    %v141 = vsel %vm139, %v116, 0
    %v144 = vsel %vm139, %v117, 0
    %v147 = vsel %vm139, %v118, 0
    %v150 = vsel %vm139, %v119, 0
    %v153 = vsel %vm139, %v120, 0
    %v156 = vsel %vm139, %v121, 0
    %v159 = vsel %vm139, %v122, 0
    %v162 = vsel %vm139, %v123, 0
    %vm164 = vcmask 1041408
    %v166 = vsel %vm164, %v136, 0
    %168 = vmatprep.subr.bf16.mxu0 0
    %169 = vmatpush1.bf16.msra.mxu0 %v134
    %170 = vmatprep.subr.bf16.mxu0 0
    %171 = vmatpush1.bf16.msra.mxu0 %v135
    %172 = vmatprep.subr.bf16.mxu0 0
    %173 = vmatpush1.bf16.msra.mxu0 %v166
    %174 = vmatprep.subr.bf16.mxu0 0
    %175 = vmatpush1.bf16.msra.mxu0 0
    %176 = vmatprep.subr.bf16.mxu0 0
    %177 = vmatpush1.bf16.msra.mxu0 0
    %178 = vmatprep.subr.bf16.mxu0 0
    %179 = vmatpush1.bf16.msra.mxu0 0
    %180 = vmatprep.subr.bf16.mxu0 0
    %181 = vmatpush1.bf16.msra.mxu0 0
    %182 = vmatprep.subr.bf16.mxu0 0
    %183 = vmatpush1.bf16.msra.mxu0 0
    %184 = vmatprep.subr.bf16.mxu0 0
    %185 = vmatpush1.bf16.msra.mxu0 0
    %186 = vmatprep.subr.bf16.mxu0 0
    %187 = vmatpush1.bf16.msra.mxu0 0
    %188 = vmatprep.subr.bf16.mxu0 0
    %189 = vmatpush1.bf16.msra.mxu0 0
    %190 = vmatprep.subr.bf16.mxu0 0
    %191 = vmatpush1.bf16.msra.mxu0 0
    %192 = vmatprep.subr.bf16.mxu0 0
    %193 = vmatpush1.bf16.msra.mxu0 0
    %194 = vmatprep.subr.bf16.mxu0 0
    %195 = vmatpush1.bf16.msra.mxu0 0
    %196 = vmatprep.subr.bf16.mxu0 0
    %197 = vmatpush1.bf16.msra.mxu0 0
    %198 = vmatprep.subr.bf16.mxu0 0
    %199 = vmatpush1.bf16.msra.mxu0 0
    %200 = vmatprep.mubr.bf16.mxu0 0
    %201 = vmatmul.mubr.bf16.gmra.mrb[0].mxu0 %v141
    %v202 = vpop.f32.mrb[0].mxu0
    %v203 = vadd.f32 %v82, %v202
    %v204 = vpop.f32.mrb[0].mxu0
    %v205 = vpop.f32.mrb[0].mxu0
    %v206 = vadd.f32 %v82, %v205
    %v207 = vpop.f32.mrb[0].mxu0
    %208 = vmatprep.mubr.bf16.mxu0 0
    %209 = vmatmul.mubr.bf16.gmra.mrb[0].mxu0 %v144
    %v210 = vpop.f32.mrb[0].mxu0
    %v211 = vadd.f32 %v82, %v210
    %v212 = vpop.f32.mrb[0].mxu0
    %v213 = vpop.f32.mrb[0].mxu0
    %v214 = vadd.f32 %v82, %v213
    %v215 = vpop.f32.mrb[0].mxu0
    %216 = vmatprep.mubr.bf16.mxu0 0
    %217 = vmatmul.mubr.bf16.gmra.mrb[0].mxu0 %v147
    %v218 = vpop.f32.mrb[0].mxu0
    %v219 = vadd.f32 %v82, %v218
    %v220 = vpop.f32.mrb[0].mxu0
    %v221 = vpop.f32.mrb[0].mxu0
    %v222 = vadd.f32 %v82, %v221
    %v223 = vpop.f32.mrb[0].mxu0
    %224 = vmatprep.mubr.bf16.mxu0 0
    %225 = vmatmul.mubr.bf16.gmra.mrb[0].mxu0 %v150
    %v226 = vpop.f32.mrb[0].mxu0
    %v227 = vadd.f32 %v82, %v226
    %v228 = vpop.f32.mrb[0].mxu0
    %v229 = vpop.f32.mrb[0].mxu0
    %v230 = vadd.f32 %v82, %v229
    %v231 = vpop.f32.mrb[0].mxu0
    %232 = vmatprep.mubr.bf16.mxu0 0
    %233 = vmatmul.mubr.bf16.gmra.mrb[0].mxu0 %v153
    %v234 = vpop.f32.mrb[0].mxu0
    %v235 = vadd.f32 %v82, %v234
    %v236 = vpop.f32.mrb[0].mxu0
    %v237 = vpop.f32.mrb[0].mxu0
    %v238 = vadd.f32 %v82, %v237
    %v239 = vpop.f32.mrb[0].mxu0
    %240 = vmatprep.mubr.bf16.mxu0 0
    %241 = vmatmul.mubr.bf16.gmra.mrb[0].mxu0 %v156
    %v242 = vpop.f32.mrb[0].mxu0
    %v243 = vadd.f32 %v82, %v242
    %v244 = vpop.f32.mrb[0].mxu0
    %v245 = vpop.f32.mrb[0].mxu0
    %v246 = vadd.f32 %v82, %v245
    %v247 = vpop.f32.mrb[0].mxu0
    %248 = vmatprep.mubr.bf16.mxu0 0
    %249 = vmatmul.mubr.bf16.gmra.mrb[0].mxu0 %v159
    %v250 = vpop.f32.mrb[0].mxu0
    %v251 = vadd.f32 %v82, %v250
    %v252 = vpop.f32.mrb[0].mxu0
    %v253 = vpop.f32.mrb[0].mxu0
    %v254 = vadd.f32 %v82, %v253
    %v255 = vpop.f32.mrb[0].mxu0
    %256 = vmatprep.mubr.bf16.mxu0 0
    %257 = vmatmul.mubr.bf16.gmra.mrb[0].mxu0 %v162
    %v258 = vpop.f32.mrb[0].mxu0
    %v259 = vadd.f32 %v82, %v258
    %v260 = vpop.f32.mrb[0].mxu0
    %v261 = vpop.f32.mrb[0].mxu0
    %v262 = vadd.f32 %v82, %v261
    %v263 = vpop.f32.mrb[0].mxu0
    %264 = vdwg.mxu0
    %v265 = vmax.f32 %v203, 0.0
    %v266 = vmax.f32 %v206, 0.0
    %v267 = vmax.f32 %v211, 0.0
    %v268 = vmax.f32 %v214, 0.0
    %v269 = vmax.f32 %v219, 0.0
    %v270 = vmax.f32 %v222, 0.0
    %v271 = vmax.f32 %v227, 0.0
    %v272 = vmax.f32 %v230, 0.0
    %v273 = vmax.f32 %v235, 0.0
    %v274 = vmax.f32 %v238, 0.0
    %v275 = vmax.f32 %v243, 0.0
    %v276 = vmax.f32 %v246, 0.0
    %v277 = vmax.f32 %v251, 0.0
    %v278 = vmax.f32 %v254, 0.0
    %v279 = vmax.f32 %v259, 0.0
    %v280 = vmax.f32 %v262, 0.0
    %vm281 = vcmask 261120
    %282 = vst.msk [vmem:[#allocation2] sm:$0xff] %vm281, 0.0
    %vm283 = vcmask 254976
    %284 = vst.msk [vmem:[#allocation2 + $0x8] sm:$0x3] %vm283, 0.0
    %285 = vst.msk [vmem:[#allocation2 + $0xa0] sm:$0xff] %vm281, 0.0
    %286 = vst.msk [vmem:[#allocation2 + $0xa8] sm:$0x3] %vm283, 0.0
    %s287 = scalar_lea.vmem [#allocation2], 144
    %288 = vst.msk [vmem:[%s287] sm:$0xff] %vm281, 0.0
    %289 = vst.msk [vmem:[%s287 + $0x8] sm:$0x3] %vm283, 0.0
    %290 = vst.msk [vmem:[%s287 + $0xa0] sm:$0xff] %vm281, 0.0
    %291 = vst.msk [vmem:[%s287 + $0xa8] sm:$0x3] %vm283, 0.0
    %vm292 = vcmask 253952
    %293 = vst.msk [vmem:[#allocation2] sm:$0x1] %vm292, 0.0
    %294 = vst.msk [vmem:[#allocation2 + $0x10] sm:$0x1] %vm292, 0.0
    %295 = vst.msk [vmem:[#allocation2 + $0x20] sm:$0x1] %vm292, 0.0
    %296 = vst.msk [vmem:[#allocation2 + $0x30] sm:$0x1] %vm292, 0.0
    %297 = vst.msk [vmem:[#allocation2 + $0x40] sm:$0x1] %vm292, 0.0
    %298 = vst.msk [vmem:[#allocation2 + $0x50] sm:$0x1] %vm292, 0.0
    %299 = vst.msk [vmem:[#allocation2 + $0x60] sm:$0x1] %vm292, 0.0
    %300 = vst.msk [vmem:[#allocation2 + $0x70] sm:$0x1] %vm292, 0.0
    %301 = vst.msk [vmem:[#allocation2 + $0x80] sm:$0x1] %vm292, 0.0
    %302 = vst.msk [vmem:[#allocation2 + $0x90] sm:$0x1] %vm292, 0.0
    %303 = vst.msk [vmem:[#allocation2 + $0xa0] sm:$0x1] %vm292, 0.0
    %304 = vst.msk [vmem:[#allocation2 + $0xb0] sm:$0x1] %vm292, 0.0
    %305 = vst.msk [vmem:[#allocation2 + $0xc0] sm:$0x1] %vm292, 0.0
    %306 = vst.msk [vmem:[#allocation2 + $0xd0] sm:$0x1] %vm292, 0.0
    %307 = vst.msk [vmem:[#allocation2 + $0xe0] sm:$0x1] %vm292, 0.0
    %308 = vst.msk [vmem:[#allocation2 + $0xf0] sm:$0x1] %vm292, 0.0
    %309 = vst.msk [vmem:[#allocation2 + $0x100] sm:$0x1] %vm292, 0.0
    %310 = vst.msk [vmem:[#allocation2 + $0x110] sm:$0x1] %vm292, 0.0
    %311 = vst.msk [vmem:[#allocation2 + $0x120] sm:$0x1] %vm292, 0.0
    %312 = vst.msk [vmem:[#allocation2 + $0x130] sm:$0x1] %vm292, 0.0
    %313 = vst.msk [vmem:[#allocation2 + $0x9] sm:$0x1] %vm292, 0.0
    %314 = vst.msk [vmem:[#allocation2 + $0x19] sm:$0x1] %vm292, 0.0
    %315 = vst.msk [vmem:[#allocation2 + $0x29] sm:$0x1] %vm292, 0.0
    %316 = vst.msk [vmem:[#allocation2 + $0x39] sm:$0x1] %vm292, 0.0
    %317 = vst.msk [vmem:[#allocation2 + $0x49] sm:$0x1] %vm292, 0.0
    %318 = vst.msk [vmem:[#allocation2 + $0x59] sm:$0x1] %vm292, 0.0
    %319 = vst.msk [vmem:[#allocation2 + $0x69] sm:$0x1] %vm292, 0.0
    %320 = vst.msk [vmem:[#allocation2 + $0x79] sm:$0x1] %vm292, 0.0
    %321 = vst.msk [vmem:[#allocation2 + $0x89] sm:$0x1] %vm292, 0.0
    %322 = vst.msk [vmem:[#allocation2 + $0x99] sm:$0x1] %vm292, 0.0
    %323 = vst.msk [vmem:[#allocation2 + $0xa9] sm:$0x1] %vm292, 0.0
    %324 = vst.msk [vmem:[#allocation2 + $0xb9] sm:$0x1] %vm292, 0.0
    %325 = vst.msk [vmem:[#allocation2 + $0xc9] sm:$0x1] %vm292, 0.0
    %326 = vst.msk [vmem:[#allocation2 + $0xd9] sm:$0x1] %vm292, 0.0
    %327 = vst.msk [vmem:[#allocation2 + $0xe9] sm:$0x1] %vm292, 0.0
    %328 = vst.msk [vmem:[#allocation2 + $0xf9] sm:$0x1] %vm292, 0.0
    %329 = vst.msk [vmem:[#allocation2 + $0x109] sm:$0x1] %vm292, 0.0
    %330 = vst.msk [vmem:[#allocation2 + $0x119] sm:$0x1] %vm292, 0.0
    %331 = vst.msk [vmem:[#allocation2 + $0x129] sm:$0x1] %vm292, 0.0
    %332 = vst.msk [vmem:[#allocation2 + $0x139] sm:$0x1] %vm292, 0.0
    %s333 = scalar_lea.vmem [#allocation2], 16
    %334 = vst.msk [vmem:[%s333 + $0x1] sm:$0xff] %vm281, %v265
    %335 = vst.msk [vmem:[%s333 + $0x11] sm:$0xff] %vm281, %v266
    %336 = vst.msk [vmem:[%s333 + $0x21] sm:$0xff] %vm281, %v267
    %337 = vst.msk [vmem:[%s333 + $0x31] sm:$0xff] %vm281, %v268
    %338 = vst.msk [vmem:[%s333 + $0x41] sm:$0xff] %vm281, %v269
    %339 = vst.msk [vmem:[%s333 + $0x51] sm:$0xff] %vm281, %v270
    %340 = vst.msk [vmem:[%s333 + $0x61] sm:$0xff] %vm281, %v271
    %341 = vst.msk [vmem:[%s333 + $0x71] sm:$0xff] %vm281, %v272
    %342 = vst.msk [vmem:[%s333 + $0xa1] sm:$0xff] %vm281, %v273
    %343 = vst.msk [vmem:[%s333 + $0xb1] sm:$0xff] %vm281, %v274
    %344 = vst.msk [vmem:[%s333 + $0xc1] sm:$0xff] %vm281, %v275
    %345 = vst.msk [vmem:[%s333 + $0xd1] sm:$0xff] %vm281, %v276
    %346 = vst.msk [vmem:[%s333 + $0xe1] sm:$0xff] %vm281, %v277
    %347 = vst.msk [vmem:[%s333 + $0xf1] sm:$0xff] %vm281, %v278
    %348 = vst.msk [vmem:[%s333 + $0x101] sm:$0xff] %vm281, %v279
    %349 = vst.msk [vmem:[%s333 + $0x111] sm:$0xff] %vm281, %v280
    %v350 = vld [vmem:[#allocation2] sm:$0xff]
    %v351 = vld [vmem:[#allocation2 + $0x10] sm:$0xff]
    %v352 = vld [vmem:[#allocation2 + $0x20] sm:$0xff]
    %v353 = vld [vmem:[#allocation2 + $0x30] sm:$0xff]
    %v354 = vld [vmem:[#allocation2 + $0x40] sm:$0xff]
    %v355 = vld [vmem:[#allocation2 + $0x50] sm:$0xff]
    %v356 = vld [vmem:[#allocation2 + $0x60] sm:$0xff]
    %v357 = vld [vmem:[#allocation2 + $0x70] sm:$0xff]
    %v358 = vld [vmem:[#allocation2 + $0xa0] sm:$0xff]
    %v359 = vld [vmem:[#allocation2 + $0xb0] sm:$0xff]
    %v360 = vld [vmem:[#allocation2 + $0xc0] sm:$0xff]
    %v361 = vld [vmem:[#allocation2 + $0xd0] sm:$0xff]
    %v362 = vld [vmem:[#allocation2 + $0xe0] sm:$0xff]
    %v363 = vld [vmem:[#allocation2 + $0xf0] sm:$0xff]
    %v364 = vld [vmem:[#allocation2 + $0x100] sm:$0xff]
    %v365 = vld [vmem:[#allocation2 + $0x110] sm:$0xff]
    %v366 = vld [vmem:[#allocation2 + $0x1] sm:$0xff]
    %v367 = vld [vmem:[#allocation2 + $0x11] sm:$0xff]
    %v368 = vld [vmem:[#allocation2 + $0x21] sm:$0xff]
    %v369 = vld [vmem:[#allocation2 + $0x31] sm:$0xff]
    %v370 = vld [vmem:[#allocation2 + $0x41] sm:$0xff]
    %v371 = vld [vmem:[#allocation2 + $0x51] sm:$0xff]
    %v372 = vld [vmem:[#allocation2 + $0x61] sm:$0xff]
    %v373 = vld [vmem:[#allocation2 + $0x71] sm:$0xff]
    %v374 = vld [vmem:[#allocation2 + $0xa1] sm:$0xff]
    %v375 = vld [vmem:[#allocation2 + $0xb1] sm:$0xff]
    %v376 = vld [vmem:[#allocation2 + $0xc1] sm:$0xff]
    %v377 = vld [vmem:[#allocation2 + $0xd1] sm:$0xff]
    %v378 = vld [vmem:[#allocation2 + $0xe1] sm:$0xff]
    %v379 = vld [vmem:[#allocation2 + $0xf1] sm:$0xff]
    %v380 = vld [vmem:[#allocation2 + $0x101] sm:$0xff]
    %v381 = vld [vmem:[#allocation2 + $0x111] sm:$0xff]
    %v382 = vld [vmem:[#allocation2 + $0x2] sm:$0xff]
    %v383 = vld [vmem:[#allocation2 + $0x12] sm:$0xff]
    %v384 = vld [vmem:[#allocation2 + $0x22] sm:$0xff]
    %v385 = vld [vmem:[#allocation2 + $0x32] sm:$0xff]
    %v386 = vld [vmem:[#allocation2 + $0x42] sm:$0xff]
    %v387 = vld [vmem:[#allocation2 + $0x52] sm:$0xff]
    %v388 = vld [vmem:[#allocation2 + $0x62] sm:$0xff]
    %v389 = vld [vmem:[#allocation2 + $0x72] sm:$0xff]
    %v390 = vld [vmem:[#allocation2 + $0xa2] sm:$0xff]
    %v391 = vld [vmem:[#allocation2 + $0xb2] sm:$0xff]
    %v392 = vld [vmem:[#allocation2 + $0xc2] sm:$0xff]
    %v393 = vld [vmem:[#allocation2 + $0xd2] sm:$0xff]
    %v394 = vld [vmem:[#allocation2 + $0xe2] sm:$0xff]
    %v395 = vld [vmem:[#allocation2 + $0xf2] sm:$0xff]
    %v396 = vld [vmem:[#allocation2 + $0x102] sm:$0xff]
    %v397 = vld [vmem:[#allocation2 + $0x112] sm:$0xff]
    %v398 = vld [vmem:[%s333] sm:$0xff]
    %v399 = vld [vmem:[%s333 + $0x10] sm:$0xff]
    %v400 = vld [vmem:[%s333 + $0x20] sm:$0xff]
    %v401 = vld [vmem:[%s333 + $0x30] sm:$0xff]
    %v402 = vld [vmem:[%s333 + $0x40] sm:$0xff]
    %v403 = vld [vmem:[%s333 + $0x50] sm:$0xff]
    %v404 = vld [vmem:[%s333 + $0x60] sm:$0xff]
    %v405 = vld [vmem:[%s333 + $0x70] sm:$0xff]
    %v406 = vld [vmem:[%s333 + $0xa0] sm:$0xff]
    %v407 = vld [vmem:[%s333 + $0xb0] sm:$0xff]
    %v408 = vld [vmem:[%s333 + $0xc0] sm:$0xff]
    %v409 = vld [vmem:[%s333 + $0xd0] sm:$0xff]
    %v410 = vld [vmem:[%s333 + $0xe0] sm:$0xff]
    %v411 = vld [vmem:[%s333 + $0xf0] sm:$0xff]
    %v412 = vld [vmem:[%s333 + $0x100] sm:$0xff]
    %v413 = vld [vmem:[%s333 + $0x110] sm:$0xff]
    %v414 = vld [vmem:[%s333 + $0x1] sm:$0xff]
    %v415 = vld [vmem:[%s333 + $0x11] sm:$0xff]
    %v416 = vld [vmem:[%s333 + $0x21] sm:$0xff]
    %v417 = vld [vmem:[%s333 + $0x31] sm:$0xff]
    %v418 = vld [vmem:[%s333 + $0x41] sm:$0xff]
    %v419 = vld [vmem:[%s333 + $0x51] sm:$0xff]
    %v420 = vld [vmem:[%s333 + $0x61] sm:$0xff]
    %v421 = vld [vmem:[%s333 + $0x71] sm:$0xff]
    %v422 = vld [vmem:[%s333 + $0xa1] sm:$0xff]
    %v423 = vld [vmem:[%s333 + $0xb1] sm:$0xff]
    %v424 = vld [vmem:[%s333 + $0xc1] sm:$0xff]
    %v425 = vld [vmem:[%s333 + $0xd1] sm:$0xff]
    %v426 = vld [vmem:[%s333 + $0xe1] sm:$0xff]
    %v427 = vld [vmem:[%s333 + $0xf1] sm:$0xff]
    %v428 = vld [vmem:[%s333 + $0x101] sm:$0xff]
    %v429 = vld [vmem:[%s333 + $0x111] sm:$0xff]
    %v430 = vld [vmem:[%s333 + $0x2] sm:$0xff]
    %v431 = vld [vmem:[%s333 + $0x12] sm:$0xff]
    %v432 = vld [vmem:[%s333 + $0x22] sm:$0xff]
    %v433 = vld [vmem:[%s333 + $0x32] sm:$0xff]
    %v434 = vld [vmem:[%s333 + $0x42] sm:$0xff]
    %v435 = vld [vmem:[%s333 + $0x52] sm:$0xff]
    %v436 = vld [vmem:[%s333 + $0x62] sm:$0xff]
    %v437 = vld [vmem:[%s333 + $0x72] sm:$0xff]
    %v438 = vld [vmem:[%s333 + $0xa2] sm:$0xff]
    %v439 = vld [vmem:[%s333 + $0xb2] sm:$0xff]
    %v440 = vld [vmem:[%s333 + $0xc2] sm:$0xff]
    %v441 = vld [vmem:[%s333 + $0xd2] sm:$0xff]
    %v442 = vld [vmem:[%s333 + $0xe2] sm:$0xff]
    %v443 = vld [vmem:[%s333 + $0xf2] sm:$0xff]
    %v444 = vld [vmem:[%s333 + $0x102] sm:$0xff]
    %v445 = vld [vmem:[%s333 + $0x112] sm:$0xff]
    %s446 = scalar_lea.vmem [#allocation2], 32
    %v447 = vld [vmem:[%s446] sm:$0xff]
    %v448 = vld [vmem:[%s446 + $0x10] sm:$0xff]
    %v449 = vld [vmem:[%s446 + $0x20] sm:$0xff]
    %v450 = vld [vmem:[%s446 + $0x30] sm:$0xff]
    %v451 = vld [vmem:[%s446 + $0x40] sm:$0xff]
    %v452 = vld [vmem:[%s446 + $0x50] sm:$0xff]
    %v453 = vld [vmem:[%s446 + $0x60] sm:$0xff]
    %v454 = vld [vmem:[%s446 + $0x70] sm:$0xff]
    %v455 = vld [vmem:[%s446 + $0xa0] sm:$0xff]
    %v456 = vld [vmem:[%s446 + $0xb0] sm:$0xff]
    %v457 = vld [vmem:[%s446 + $0xc0] sm:$0xff]
    %v458 = vld [vmem:[%s446 + $0xd0] sm:$0xff]
    %v459 = vld [vmem:[%s446 + $0xe0] sm:$0xff]
    %v460 = vld [vmem:[%s446 + $0xf0] sm:$0xff]
    %v461 = vld [vmem:[%s446 + $0x100] sm:$0xff]
    %v462 = vld [vmem:[%s446 + $0x110] sm:$0xff]
    %v463 = vld [vmem:[%s446 + $0x1] sm:$0xff]
    %v464 = vld [vmem:[%s446 + $0x11] sm:$0xff]
    %v465 = vld [vmem:[%s446 + $0x21] sm:$0xff]
    %v466 = vld [vmem:[%s446 + $0x31] sm:$0xff]
    %v467 = vld [vmem:[%s446 + $0x41] sm:$0xff]
    %v468 = vld [vmem:[%s446 + $0x51] sm:$0xff]
    %v469 = vld [vmem:[%s446 + $0x61] sm:$0xff]
    %v470 = vld [vmem:[%s446 + $0x71] sm:$0xff]
    %v471 = vld [vmem:[%s446 + $0xa1] sm:$0xff]
    %v472 = vld [vmem:[%s446 + $0xb1] sm:$0xff]
    %v473 = vld [vmem:[%s446 + $0xc1] sm:$0xff]
    %v474 = vld [vmem:[%s446 + $0xd1] sm:$0xff]
    %v475 = vld [vmem:[%s446 + $0xe1] sm:$0xff]
    %v476 = vld [vmem:[%s446 + $0xf1] sm:$0xff]
    %v477 = vld [vmem:[%s446 + $0x101] sm:$0xff]
    %v478 = vld [vmem:[%s446 + $0x111] sm:$0xff]
    %v479 = vld [vmem:[%s446 + $0x2] sm:$0xff]
    %v480 = vld [vmem:[%s446 + $0x12] sm:$0xff]
    %v481 = vld [vmem:[%s446 + $0x22] sm:$0xff]
    %v482 = vld [vmem:[%s446 + $0x32] sm:$0xff]
    %v483 = vld [vmem:[%s446 + $0x42] sm:$0xff]
    %v484 = vld [vmem:[%s446 + $0x52] sm:$0xff]
    %v485 = vld [vmem:[%s446 + $0x62] sm:$0xff]
    %v486 = vld [vmem:[%s446 + $0x72] sm:$0xff]
    %v487 = vld [vmem:[%s446 + $0xa2] sm:$0xff]
    %v488 = vld [vmem:[%s446 + $0xb2] sm:$0xff]
    %v489 = vld [vmem:[%s446 + $0xc2] sm:$0xff]
    %v490 = vld [vmem:[%s446 + $0xd2] sm:$0xff]
    %v491 = vld [vmem:[%s446 + $0xe2] sm:$0xff]
    %v492 = vld [vmem:[%s446 + $0xf2] sm:$0xff]
    %v493 = vld [vmem:[%s446 + $0x102] sm:$0xff]
    %v494 = vld [vmem:[%s446 + $0x112] sm:$0xff]
    %511 = vrot.lane.b32.xlu0 %v366, 32
    %v512 = vpop.permute.xlu0 %511
    %513 = vrot.lane.b32.xlu0 %v367, 32
    %v514 = vpop.permute.xlu0 %513
    %515 = vrot.lane.b32.xlu0 %v368, 32
    %v516 = vpop.permute.xlu0 %515
    %517 = vrot.lane.b32.xlu0 %v369, 32
    %v518 = vpop.permute.xlu0 %517
    %519 = vrot.lane.b32.xlu0 %v370, 32
    %v520 = vpop.permute.xlu0 %519
    %521 = vrot.lane.b32.xlu0 %v371, 32
    %v522 = vpop.permute.xlu0 %521
    %523 = vrot.lane.b32.xlu0 %v372, 32
    %v524 = vpop.permute.xlu0 %523
    %525 = vrot.lane.b32.xlu0 %v373, 32
    %v526 = vpop.permute.xlu0 %525
    %527 = vrot.lane.b32.xlu0 %v374, 32
    %v528 = vpop.permute.xlu0 %527
    %529 = vrot.lane.b32.xlu0 %v375, 32
    %v530 = vpop.permute.xlu0 %529
    %531 = vrot.lane.b32.xlu0 %v376, 32
    %v532 = vpop.permute.xlu0 %531
    %533 = vrot.lane.b32.xlu0 %v377, 32
    %v534 = vpop.permute.xlu0 %533
    %535 = vrot.lane.b32.xlu0 %v378, 32
    %v536 = vpop.permute.xlu0 %535
    %537 = vrot.lane.b32.xlu0 %v379, 32
    %v538 = vpop.permute.xlu0 %537
    %539 = vrot.lane.b32.xlu0 %v380, 32
    %v540 = vpop.permute.xlu0 %539
    %541 = vrot.lane.b32.xlu0 %v381, 32
    %v542 = vpop.permute.xlu0 %541
    %575 = vrot.lane.b32.xlu0 %v382, 64
    %v576 = vpop.permute.xlu0 %575
    %577 = vrot.lane.b32.xlu0 %v383, 64
    %v578 = vpop.permute.xlu0 %577
    %579 = vrot.lane.b32.xlu0 %v384, 64
    %v580 = vpop.permute.xlu0 %579
    %581 = vrot.lane.b32.xlu0 %v385, 64
    %v582 = vpop.permute.xlu0 %581
    %583 = vrot.lane.b32.xlu0 %v386, 64
    %v584 = vpop.permute.xlu0 %583
    %585 = vrot.lane.b32.xlu0 %v387, 64
    %v586 = vpop.permute.xlu0 %585
    %587 = vrot.lane.b32.xlu0 %v388, 64
    %v588 = vpop.permute.xlu0 %587
    %589 = vrot.lane.b32.xlu0 %v389, 64
    %v590 = vpop.permute.xlu0 %589
    %591 = vrot.lane.b32.xlu0 %v390, 64
    %v592 = vpop.permute.xlu0 %591
    %593 = vrot.lane.b32.xlu0 %v391, 64
    %v594 = vpop.permute.xlu0 %593
    %595 = vrot.lane.b32.xlu0 %v392, 64
    %v596 = vpop.permute.xlu0 %595
    %597 = vrot.lane.b32.xlu0 %v393, 64
    %v598 = vpop.permute.xlu0 %597
    %599 = vrot.lane.b32.xlu0 %v394, 64
    %v600 = vpop.permute.xlu0 %599
    %601 = vrot.lane.b32.xlu0 %v395, 64
    %v602 = vpop.permute.xlu0 %601
    %603 = vrot.lane.b32.xlu0 %v396, 64
    %v604 = vpop.permute.xlu0 %603
    %605 = vrot.lane.b32.xlu0 %v397, 64
    %v606 = vpop.permute.xlu0 %605
    %639 = vrot.lane.b32.xlu0 %v398, 96
    %v640 = vpop.permute.xlu0 %639
    %641 = vrot.lane.b32.xlu0 %v399, 96
    %v642 = vpop.permute.xlu0 %641
    %643 = vrot.lane.b32.xlu0 %v400, 96
    %v644 = vpop.permute.xlu0 %643
    %645 = vrot.lane.b32.xlu0 %v401, 96
    %v646 = vpop.permute.xlu0 %645
    %647 = vrot.lane.b32.xlu0 %v402, 96
    %v648 = vpop.permute.xlu0 %647
    %649 = vrot.lane.b32.xlu0 %v403, 96
    %v650 = vpop.permute.xlu0 %649
    %651 = vrot.lane.b32.xlu0 %v404, 96
    %v652 = vpop.permute.xlu0 %651
    %653 = vrot.lane.b32.xlu0 %v405, 96
    %v654 = vpop.permute.xlu0 %653
    %655 = vrot.lane.b32.xlu0 %v406, 96
    %v656 = vpop.permute.xlu0 %655
    %657 = vrot.lane.b32.xlu0 %v407, 96
    %v658 = vpop.permute.xlu0 %657
    %659 = vrot.lane.b32.xlu0 %v408, 96
    %v660 = vpop.permute.xlu0 %659
    %661 = vrot.lane.b32.xlu0 %v409, 96
    %v662 = vpop.permute.xlu0 %661
    %663 = vrot.lane.b32.xlu0 %v410, 96
    %v664 = vpop.permute.xlu0 %663
    %665 = vrot.lane.b32.xlu0 %v411, 96
    %v666 = vpop.permute.xlu0 %665
    %667 = vrot.lane.b32.xlu0 %v412, 96
    %v668 = vpop.permute.xlu0 %667
    %669 = vrot.lane.b32.xlu0 %v413, 96
    %v670 = vpop.permute.xlu0 %669
    %703 = vrot.lane.b32.xlu0 %v430, 32
    %v704 = vpop.permute.xlu0 %703
    %705 = vrot.lane.b32.xlu0 %v431, 32
    %v706 = vpop.permute.xlu0 %705
    %707 = vrot.lane.b32.xlu0 %v432, 32
    %v708 = vpop.permute.xlu0 %707
    %709 = vrot.lane.b32.xlu0 %v433, 32
    %v710 = vpop.permute.xlu0 %709
    %711 = vrot.lane.b32.xlu0 %v434, 32
    %v712 = vpop.permute.xlu0 %711
    %713 = vrot.lane.b32.xlu0 %v435, 32
    %v714 = vpop.permute.xlu0 %713
    %715 = vrot.lane.b32.xlu0 %v436, 32
    %v716 = vpop.permute.xlu0 %715
    %717 = vrot.lane.b32.xlu0 %v437, 32
    %v718 = vpop.permute.xlu0 %717
    %719 = vrot.lane.b32.xlu0 %v438, 32
    %v720 = vpop.permute.xlu0 %719
    %721 = vrot.lane.b32.xlu0 %v439, 32
    %v722 = vpop.permute.xlu0 %721
    %723 = vrot.lane.b32.xlu0 %v440, 32
    %v724 = vpop.permute.xlu0 %723
    %725 = vrot.lane.b32.xlu0 %v441, 32
    %v726 = vpop.permute.xlu0 %725
    %727 = vrot.lane.b32.xlu0 %v442, 32
    %v728 = vpop.permute.xlu0 %727
    %729 = vrot.lane.b32.xlu0 %v443, 32
    %v730 = vpop.permute.xlu0 %729
    %731 = vrot.lane.b32.xlu0 %v444, 32
    %v732 = vpop.permute.xlu0 %731
    %733 = vrot.lane.b32.xlu0 %v445, 32
    %v734 = vpop.permute.xlu0 %733
    %767 = vrot.lane.b32.xlu0 %v447, 64
    %v768 = vpop.permute.xlu0 %767
    %769 = vrot.lane.b32.xlu0 %v448, 64
    %v770 = vpop.permute.xlu0 %769
    %771 = vrot.lane.b32.xlu0 %v449, 64
    %v772 = vpop.permute.xlu0 %771
    %773 = vrot.lane.b32.xlu0 %v450, 64
    %v774 = vpop.permute.xlu0 %773
    %775 = vrot.lane.b32.xlu0 %v451, 64
    %v776 = vpop.permute.xlu0 %775
    %777 = vrot.lane.b32.xlu0 %v452, 64
    %v778 = vpop.permute.xlu0 %777
    %779 = vrot.lane.b32.xlu0 %v453, 64
    %v780 = vpop.permute.xlu0 %779
    %781 = vrot.lane.b32.xlu0 %v454, 64
    %v782 = vpop.permute.xlu0 %781
    %783 = vrot.lane.b32.xlu0 %v455, 64
    %v784 = vpop.permute.xlu0 %783
    %785 = vrot.lane.b32.xlu0 %v456, 64
    %v786 = vpop.permute.xlu0 %785
    %787 = vrot.lane.b32.xlu0 %v457, 64
    %v788 = vpop.permute.xlu0 %787
    %789 = vrot.lane.b32.xlu0 %v458, 64
    %v790 = vpop.permute.xlu0 %789
    %791 = vrot.lane.b32.xlu0 %v459, 64
    %v792 = vpop.permute.xlu0 %791
    %793 = vrot.lane.b32.xlu0 %v460, 64
    %v794 = vpop.permute.xlu0 %793
    %795 = vrot.lane.b32.xlu0 %v461, 64
    %v796 = vpop.permute.xlu0 %795
    %797 = vrot.lane.b32.xlu0 %v462, 64
    %v798 = vpop.permute.xlu0 %797
    %831 = vrot.lane.b32.xlu0 %v463, 96
    %v832 = vpop.permute.xlu0 %831
    %833 = vrot.lane.b32.xlu0 %v464, 96
    %v834 = vpop.permute.xlu0 %833
    %835 = vrot.lane.b32.xlu0 %v465, 96
    %v836 = vpop.permute.xlu0 %835
    %837 = vrot.lane.b32.xlu0 %v466, 96
    %v838 = vpop.permute.xlu0 %837
    %839 = vrot.lane.b32.xlu0 %v467, 96
    %v840 = vpop.permute.xlu0 %839
    %841 = vrot.lane.b32.xlu0 %v468, 96
    %v842 = vpop.permute.xlu0 %841
    %843 = vrot.lane.b32.xlu0 %v469, 96
    %v844 = vpop.permute.xlu0 %843
    %845 = vrot.lane.b32.xlu0 %v470, 96
    %v846 = vpop.permute.xlu0 %845
    %847 = vrot.lane.b32.xlu0 %v471, 96
    %v848 = vpop.permute.xlu0 %847
    %849 = vrot.lane.b32.xlu0 %v472, 96
    %v850 = vpop.permute.xlu0 %849
    %851 = vrot.lane.b32.xlu0 %v473, 96
    %v852 = vpop.permute.xlu0 %851
    %853 = vrot.lane.b32.xlu0 %v474, 96
    %v854 = vpop.permute.xlu0 %853
    %855 = vrot.lane.b32.xlu0 %v475, 96
    %v856 = vpop.permute.xlu0 %855
    %857 = vrot.lane.b32.xlu0 %v476, 96
    %v858 = vpop.permute.xlu0 %857
    %859 = vrot.lane.b32.xlu0 %v477, 96
    %v860 = vpop.permute.xlu0 %859
    %861 = vrot.lane.b32.xlu0 %v478, 96
    %v862 = vpop.permute.xlu0 %861
    %v879 = vsel %vm281, %v350, %v512
    %v880 = vsel %vm281, %v351, %v514
    %v881 = vsel %vm281, %v352, %v516
    %v882 = vsel %vm281, %v353, %v518
    %v883 = vsel %vm281, %v354, %v520
    %v884 = vsel %vm281, %v355, %v522
    %v885 = vsel %vm281, %v356, %v524
    %v886 = vsel %vm281, %v357, %v526
    %v887 = vsel %vm281, %v358, %v528
    %v888 = vsel %vm281, %v359, %v530
    %v889 = vsel %vm281, %v360, %v532
    %v890 = vsel %vm281, %v361, %v534
    %v891 = vsel %vm281, %v362, %v536
    %v892 = vsel %vm281, %v363, %v538
    %v893 = vsel %vm281, %v364, %v540
    %v894 = vsel %vm281, %v365, %v542
    %vm895 = vcmask 523264
    %v896 = vsel %vm895, %v879, %v576
    %v897 = vsel %vm895, %v880, %v578
    %v898 = vsel %vm895, %v881, %v580
    %v899 = vsel %vm895, %v882, %v582
    %v900 = vsel %vm895, %v883, %v584
    %v901 = vsel %vm895, %v884, %v586
    %v902 = vsel %vm895, %v885, %v588
    %v903 = vsel %vm895, %v886, %v590
    %v904 = vsel %vm895, %v887, %v592
    %v905 = vsel %vm895, %v888, %v594
    %v906 = vsel %vm895, %v889, %v596
    %v907 = vsel %vm895, %v890, %v598
    %v908 = vsel %vm895, %v891, %v600
    %v909 = vsel %vm895, %v892, %v602
    %v910 = vsel %vm895, %v893, %v604
    %v911 = vsel %vm895, %v894, %v606
    %vm912 = vcmask 785408
    %v913 = vsel %vm912, %v896, %v640
    %v914 = vsel %vm912, %v897, %v642
    %v915 = vsel %vm912, %v898, %v644
    %v916 = vsel %vm912, %v899, %v646
    %v917 = vsel %vm912, %v900, %v648
    %v918 = vsel %vm912, %v901, %v650
    %v919 = vsel %vm912, %v902, %v652
    %v920 = vsel %vm912, %v903, %v654
    %v921 = vsel %vm912, %v904, %v656
    %v922 = vsel %vm912, %v905, %v658
    %v923 = vsel %vm912, %v906, %v660
    %v924 = vsel %vm912, %v907, %v662
    %v925 = vsel %vm912, %v908, %v664
    %v926 = vsel %vm912, %v909, %v666
    %v927 = vsel %vm912, %v910, %v668
    %v928 = vsel %vm912, %v911, %v670
    %v929 = vsel %vm281, %v414, %v704
    %v930 = vsel %vm281, %v415, %v706
    %v931 = vsel %vm281, %v416, %v708
    %v932 = vsel %vm281, %v417, %v710
    %v933 = vsel %vm281, %v418, %v712
    %v934 = vsel %vm281, %v419, %v714
    %v935 = vsel %vm281, %v420, %v716
    %v936 = vsel %vm281, %v421, %v718
    %v937 = vsel %vm281, %v422, %v720
    %v938 = vsel %vm281, %v423, %v722
    %v939 = vsel %vm281, %v424, %v724
    %v940 = vsel %vm281, %v425, %v726
    %v941 = vsel %vm281, %v426, %v728
    %v942 = vsel %vm281, %v427, %v730
    %v943 = vsel %vm281, %v428, %v732
    %v944 = vsel %vm281, %v429, %v734
    %v945 = vsel %vm895, %v929, %v768
    %v946 = vsel %vm895, %v930, %v770
    %v947 = vsel %vm895, %v931, %v772
    %v948 = vsel %vm895, %v932, %v774
    %v949 = vsel %vm895, %v933, %v776
    %v950 = vsel %vm895, %v934, %v778
    %v951 = vsel %vm895, %v935, %v780
    %v952 = vsel %vm895, %v936, %v782
    %v953 = vsel %vm895, %v937, %v784
    %v954 = vsel %vm895, %v938, %v786
    %v955 = vsel %vm895, %v939, %v788
    %v956 = vsel %vm895, %v940, %v790
    %v957 = vsel %vm895, %v941, %v792
    %v958 = vsel %vm895, %v942, %v794
    %v959 = vsel %vm895, %v943, %v796
    %v960 = vsel %vm895, %v944, %v798
    %v961 = vsel %vm912, %v945, %v832
    %v962 = vsel %vm912, %v946, %v834
    %v963 = vsel %vm912, %v947, %v836
    %v964 = vsel %vm912, %v948, %v838
    %v965 = vsel %vm912, %v949, %v840
    %v966 = vsel %vm912, %v950, %v842
    %v967 = vsel %vm912, %v951, %v844
    %v968 = vsel %vm912, %v952, %v846
    %v969 = vsel %vm912, %v953, %v848
    %v970 = vsel %vm912, %v954, %v850
    %v971 = vsel %vm912, %v955, %v852
    %v972 = vsel %vm912, %v956, %v854
    %v973 = vsel %vm912, %v957, %v856
    %v974 = vsel %vm912, %v958, %v858
    %v975 = vsel %vm912, %v959, %v860
    %v976 = vsel %vm912, %v960, %v862
    %v977 = vpack.c.bf16 %v914, %v913
    %v978 = vpack.c.bf16 %v962, %v961
    %v979 = vpack.c.bf16 %v480, %v479
    %v980 = vpack.c.bf16 %v916, %v915
    %v981 = vpack.c.bf16 %v964, %v963
    %v982 = vpack.c.bf16 %v482, %v481
    %v983 = vpack.c.bf16 %v918, %v917
    %v984 = vpack.c.bf16 %v966, %v965
    %v985 = vpack.c.bf16 %v484, %v483
    %v986 = vpack.c.bf16 %v920, %v919
    %v987 = vpack.c.bf16 %v968, %v967
    %v988 = vpack.c.bf16 %v486, %v485
    %v989 = vpack.c.bf16 %v922, %v921
    %v990 = vpack.c.bf16 %v970, %v969
    %v991 = vpack.c.bf16 %v488, %v487
    %v992 = vpack.c.bf16 %v924, %v923
    %v993 = vpack.c.bf16 %v972, %v971
    %v994 = vpack.c.bf16 %v490, %v489
    %v995 = vpack.c.bf16 %v926, %v925
    %v996 = vpack.c.bf16 %v974, %v973
    %v997 = vpack.c.bf16 %v492, %v491
    %v998 = vpack.c.bf16 %v928, %v927
    %v999 = vpack.c.bf16 %v976, %v975
    %v1000 = vpack.c.bf16 %v494, %v493
    %v1001 = vld [vmem:[%s3] sm:$0xf]
    %v1002 = vld [vmem:[%s3 + $0x4] sm:$0xf]
    %v1003 = vld [vmem:[%s3 + $0x8] sm:$0xf]
    %v1004 = vld [vmem:[%s3 + $0xc] sm:$0xf]
    %v1005 = vld [vmem:[%s3 + $0x10] sm:$0xf]
    %v1006 = vld [vmem:[%s3 + $0x14] sm:$0xf]
    %v1007 = vld [vmem:[%s3 + $0x18] sm:$0xf]
    %v1008 = vld [vmem:[%s3 + $0x1c] sm:$0xf]
    %v1009 = vld [vmem:[%s3 + $0x20] sm:$0xf]
    %v1010 = vld [vmem:[%s3 + $0x24] sm:$0xf]
    %v1011 = vld [vmem:[%s3 + $0x28] sm:$0xf]
    %v1012 = vld [vmem:[%s3 + $0x2c] sm:$0xf]
    %v1013 = vld [vmem:[%s3 + $0x30] sm:$0xf]
    %v1014 = vld [vmem:[%s3 + $0x34] sm:$0xf]
    %v1015 = vld [vmem:[%s3 + $0x38] sm:$0xf]
    %v1016 = vld [vmem:[%s3 + $0x3c] sm:$0xf]
    %v1017 = vld [vmem:[%s3 + $0x40] sm:$0xf]
    %v1018 = vld [vmem:[%s3 + $0x44] sm:$0xf]
    %v1019 = vld [vmem:[%s3 + $0x48] sm:$0xf]
    %v1020 = vld [vmem:[%s3 + $0x4c] sm:$0xf]
    %v1021 = vld [vmem:[%s3 + $0x50] sm:$0xf]
    %v1022 = vld [vmem:[%s3 + $0x54] sm:$0xf]
    %v1023 = vld [vmem:[%s3 + $0x58] sm:$0xf]
    %v1024 = vld [vmem:[%s3 + $0x5c] sm:$0xf]
    %v1025 = vld [vmem:[%s3 + $0x60] sm:$0xf]
    %v1026 = vld [vmem:[%s3 + $0x64] sm:$0xf]
    %v1027 = vld [vmem:[%s3 + $0x68] sm:$0xf]
    %v1028 = vld [vmem:[%s3 + $0x6c] sm:$0xf]
    %v1029 = vld [vmem:[%s3 + $0x70] sm:$0xf]
    %v1030 = vld [vmem:[%s3 + $0x74] sm:$0xf]
    %v1031 = vld [vmem:[%s3 + $0x78] sm:$0xf]
    %v1032 = vld [vmem:[%s3 + $0x7c] sm:$0xf]
    %v1033 = vld [vmem:[%s3 + $0x80] sm:$0xf]
    %v1034 = vld [vmem:[%s3 + $0x84] sm:$0xf]
    %v1035 = vld [vmem:[%s3 + $0x88] sm:$0xf]
    %v1036 = vld [vmem:[%s3 + $0x8c] sm:$0xf]
    %v1037 = vld [vmem:[%s4] sm:$0x1]
    %v1039 = vlaneseq
    %v1040 = vshrl.u32 %v1039, 7
    %v1041 = vsub.s32 0, %v1040
    %v1042 = vrot.slane %v1037, %v1041
    %v1080 = vunpack.c.l.b16 %v1001
    %v1081 = vunpack.c.l.b16 %v1002
    %v1082 = vunpack.c.l.b16 %v1003
    %v1083 = vunpack.c.l.b16 %v1004
    %v1084 = vunpack.c.l.b16 %v1005
    %v1085 = vunpack.c.l.b16 %v1006
    %v1086 = vunpack.c.l.b16 %v1007
    %v1087 = vunpack.c.l.b16 %v1008
    %v1088 = vunpack.c.l.b16 %v1009
    %v1089 = vunpack.c.l.b16 %v1010
    %v1090 = vunpack.c.l.b16 %v1011
    %v1091 = vunpack.c.l.b16 %v1012
    %v1092 = vunpack.c.l.b16 %v1013
    %v1093 = vunpack.c.l.b16 %v1014
    %v1094 = vunpack.c.l.b16 %v1015
    %v1095 = vunpack.c.l.b16 %v1016
    %v1096 = vunpack.c.l.b16 %v1017
    %v1097 = vunpack.c.l.b16 %v1018
    %v1098 = vunpack.c.l.b16 %v1019
    %v1099 = vunpack.c.l.b16 %v1020
    %v1100 = vunpack.c.l.b16 %v1021
    %v1101 = vunpack.c.l.b16 %v1022
    %v1102 = vunpack.c.l.b16 %v1023
    %v1103 = vunpack.c.l.b16 %v1024
    %v1104 = vunpack.c.l.b16 %v1025
    %v1105 = vunpack.c.l.b16 %v1026
    %v1106 = vunpack.c.l.b16 %v1027
    %v1107 = vunpack.c.l.b16 %v1028
    %v1108 = vunpack.c.l.b16 %v1029
    %v1109 = vunpack.c.l.b16 %v1030
    %v1110 = vunpack.c.l.b16 %v1031
    %v1111 = vunpack.c.l.b16 %v1032
    %v1112 = vunpack.c.l.b16 %v1033
    %v1113 = vunpack.c.l.b16 %v1034
    %v1114 = vunpack.c.l.b16 %v1035
    %v1115 = vunpack.c.l.b16 %v1036
    %v1116 = vpack.c.b16 %v1081, %v1080
    %v1117 = vpack.c.b16 %v1083, %v1082
    %v1118 = vpack.c.b16 %v1085, %v1084
    %v1119 = vpack.c.b16 %v1087, %v1086
    %v1120 = vpack.c.b16 %v1089, %v1088
    %v1121 = vpack.c.b16 %v1091, %v1090
    %v1122 = vpack.c.b16 %v1093, %v1092
    %v1123 = vpack.c.b16 %v1095, %v1094
    %v1124 = vpack.c.b16 %v1097, %v1096
    %v1125 = vpack.c.b16 %v1099, %v1098
    %v1126 = vpack.c.b16 %v1101, %v1100
    %v1127 = vpack.c.b16 %v1103, %v1102
    %v1128 = vpack.c.b16 %v1105, %v1104
    %v1129 = vpack.c.b16 %v1107, %v1106
    %v1130 = vpack.c.b16 %v1109, %v1108
    %v1131 = vpack.c.b16 %v1111, %v1110
    %v1132 = vpack.c.b16 %v1113, %v1112
    %v1133 = vpack.c.b16 %v1115, %v1114
    %v1153 = vsel %vm281, %v979, 0
    %v1156 = vsel %vm281, %v982, 0
    %v1159 = vsel %vm281, %v985, 0
    %v1162 = vsel %vm281, %v988, 0
    %v1165 = vsel %vm281, %v991, 0
    %v1168 = vsel %vm281, %v994, 0
    %v1171 = vsel %vm281, %v997, 0
    %v1174 = vsel %vm281, %v1000, 0
    %1176 = vmatprep.subr.bf16.mxu0 0
    %1177 = vmatpush1.bf16.msra.mxu0 %v1116
    %1178 = vmatprep.subr.bf16.mxu0 0
    %1179 = vmatpush1.bf16.msra.mxu0 %v1117
    %1180 = vmatprep.subr.bf16.mxu0 0
    %1181 = vmatpush1.bf16.msra.mxu0 %v1118
    %1182 = vmatprep.subr.bf16.mxu0 0
    %1183 = vmatpush1.bf16.msra.mxu0 %v1119
    %1184 = vmatprep.subr.bf16.mxu0 0
    %1185 = vmatpush1.bf16.msra.mxu0 %v1120
    %1186 = vmatprep.subr.bf16.mxu0 0
    %1187 = vmatpush1.bf16.msra.mxu0 %v1121
    %1188 = vmatprep.subr.bf16.mxu0 0
    %1189 = vmatpush1.bf16.msra.mxu0 %v1122
    %1190 = vmatprep.subr.bf16.mxu0 0
    %1191 = vmatpush1.bf16.msra.mxu0 %v1123
    %1192 = vmatprep.subr.bf16.mxu0 0
    %1193 = vmatpush1.bf16.msra.mxu0 %v1124
    %1194 = vmatprep.subr.bf16.mxu0 0
    %1195 = vmatpush1.bf16.msra.mxu0 %v1125
    %1196 = vmatprep.subr.bf16.mxu0 0
    %1197 = vmatpush1.bf16.msra.mxu0 %v1126
    %1198 = vmatprep.subr.bf16.mxu0 0
    %1199 = vmatpush1.bf16.msra.mxu0 %v1127
    %1200 = vmatprep.subr.bf16.mxu0 0
    %1201 = vmatpush1.bf16.msra.mxu0 %v1128
    %1202 = vmatprep.subr.bf16.mxu0 0
    %1203 = vmatpush1.bf16.msra.mxu0 %v1129
    %1204 = vmatprep.subr.bf16.mxu0 0
    %1205 = vmatpush1.bf16.msra.mxu0 %v1130
    %1206 = vmatprep.subr.bf16.mxu0 0
    %1207 = vmatpush1.bf16.msra.mxu0 %v1131
    %1208 = vmatprep.mubr.bf16.mxu0 %v978
    %1209 = vmatmul.mubr.bf16.gmra.mrb[0].mxu0 %v977
    %v1210 = vpop.f32.mrb[0].mxu0
    %v1211 = vadd.f32 %v1042, %v1210
    %v1212 = vpop.f32.mrb[0].mxu0
    %v1213 = vpop.f32.mrb[0].mxu0
    %v1214 = vadd.f32 %v1042, %v1213
    %v1215 = vpop.f32.mrb[0].mxu0
    %1216 = vmatprep.mubr.bf16.mxu0 %v981
    %1217 = vmatmul.mubr.bf16.gmra.mrb[0].mxu0 %v980
    %v1218 = vpop.f32.mrb[0].mxu0
    %v1219 = vadd.f32 %v1042, %v1218
    %v1220 = vpop.f32.mrb[0].mxu0
    %v1221 = vpop.f32.mrb[0].mxu0
    %v1222 = vadd.f32 %v1042, %v1221
    %v1223 = vpop.f32.mrb[0].mxu0
    %1224 = vmatprep.mubr.bf16.mxu0 %v984
    %1225 = vmatmul.mubr.bf16.gmra.mrb[0].mxu0 %v983
    %v1226 = vpop.f32.mrb[0].mxu0
    %v1227 = vadd.f32 %v1042, %v1226
    %v1228 = vpop.f32.mrb[0].mxu0
    %v1229 = vpop.f32.mrb[0].mxu0
    %v1230 = vadd.f32 %v1042, %v1229
    %v1231 = vpop.f32.mrb[0].mxu0
    %1232 = vmatprep.mubr.bf16.mxu0 %v987
    %1233 = vmatmul.mubr.bf16.gmra.mrb[0].mxu0 %v986
    %v1234 = vpop.f32.mrb[0].mxu0
    %v1235 = vadd.f32 %v1042, %v1234
    %v1236 = vpop.f32.mrb[0].mxu0
    %v1237 = vpop.f32.mrb[0].mxu0
    %v1238 = vadd.f32 %v1042, %v1237
    %v1239 = vpop.f32.mrb[0].mxu0
    %1240 = vmatprep.mubr.bf16.mxu0 %v990
    %1241 = vmatmul.mubr.bf16.gmra.mrb[0].mxu0 %v989
    %v1242 = vpop.f32.mrb[0].mxu0
    %v1243 = vadd.f32 %v1042, %v1242
    %v1244 = vpop.f32.mrb[0].mxu0
    %v1245 = vpop.f32.mrb[0].mxu0
    %v1246 = vadd.f32 %v1042, %v1245
    %v1247 = vpop.f32.mrb[0].mxu0
    %1248 = vmatprep.mubr.bf16.mxu0 %v993
    %1249 = vmatmul.mubr.bf16.gmra.mrb[0].mxu0 %v992
    %v1250 = vpop.f32.mrb[0].mxu0
    %v1251 = vadd.f32 %v1042, %v1250
    %v1252 = vpop.f32.mrb[0].mxu0
    %v1253 = vpop.f32.mrb[0].mxu0
    %v1254 = vadd.f32 %v1042, %v1253
    %v1255 = vpop.f32.mrb[0].mxu0
    %1256 = vmatprep.mubr.bf16.mxu0 %v996
    %1257 = vmatmul.mubr.bf16.gmra.mrb[0].mxu0 %v995
    %v1258 = vpop.f32.mrb[0].mxu0
    %v1259 = vadd.f32 %v1042, %v1258
    %v1260 = vpop.f32.mrb[0].mxu0
    %v1261 = vpop.f32.mrb[0].mxu0
    %v1262 = vadd.f32 %v1042, %v1261
    %v1263 = vpop.f32.mrb[0].mxu0
    %1264 = vmatprep.mubr.bf16.mxu0 %v999
    %1265 = vmatmul.mubr.bf16.gmra.mrb[0].mxu0 %v998
    %v1266 = vpop.f32.mrb[0].mxu0
    %v1267 = vadd.f32 %v1042, %v1266
    %v1268 = vpop.f32.mrb[0].mxu0
    %v1269 = vpop.f32.mrb[0].mxu0
    %v1270 = vadd.f32 %v1042, %v1269
    %v1271 = vpop.f32.mrb[0].mxu0
    %1272 = vdwg.mxu0
    %1273 = vmatprep.subr.bf16.mxu0 0
    %1274 = vmatpush1.bf16.msra.mxu0 %v1132
    %1275 = vmatprep.subr.bf16.mxu0 0
    %1276 = vmatpush1.bf16.msra.mxu0 %v1133
    %1277 = vmatprep.subr.bf16.mxu0 0
    %1278 = vmatpush1.bf16.msra.mxu0 0
    %1279 = vmatprep.subr.bf16.mxu0 0
    %1280 = vmatpush1.bf16.msra.mxu0 0
    %1281 = vmatprep.subr.bf16.mxu0 0
    %1282 = vmatpush1.bf16.msra.mxu0 0
    %1283 = vmatprep.subr.bf16.mxu0 0
    %1284 = vmatpush1.bf16.msra.mxu0 0
    %1285 = vmatprep.subr.bf16.mxu0 0
    %1286 = vmatpush1.bf16.msra.mxu0 0
    %1287 = vmatprep.subr.bf16.mxu0 0
    %1288 = vmatpush1.bf16.msra.mxu0 0
    %1289 = vmatprep.subr.bf16.mxu0 0
    %1290 = vmatpush1.bf16.msra.mxu0 0
    %1291 = vmatprep.subr.bf16.mxu0 0
    %1292 = vmatpush1.bf16.msra.mxu0 0
    %1293 = vmatprep.subr.bf16.mxu0 0
    %1294 = vmatpush1.bf16.msra.mxu0 0
    %1295 = vmatprep.subr.bf16.mxu0 0
    %1296 = vmatpush1.bf16.msra.mxu0 0
    %1297 = vmatprep.subr.bf16.mxu0 0
    %1298 = vmatpush1.bf16.msra.mxu0 0
    %1299 = vmatprep.subr.bf16.mxu0 0
    %1300 = vmatpush1.bf16.msra.mxu0 0
    %1301 = vmatprep.subr.bf16.mxu0 0
    %1302 = vmatpush1.bf16.msra.mxu0 0
    %1303 = vmatprep.subr.bf16.mxu0 0
    %1304 = vmatpush1.bf16.msra.mxu0 0
    %1305 = vmatprep.mubr.bf16.mxu0 0
    %1306 = vmatmul.mubr.bf16.gmra.mrb[0].mxu0 %v1153
    %v1307 = vpop.f32.mrb[0].mxu0
    %v1308 = vadd.f32 %v1211, %v1307
    %v1309 = vpop.f32.mrb[0].mxu0
    %v1310 = vpop.f32.mrb[0].mxu0
    %v1311 = vadd.f32 %v1214, %v1310
    %v1312 = vpop.f32.mrb[0].mxu0
    %1313 = vmatprep.mubr.bf16.mxu0 0
    %1314 = vmatmul.mubr.bf16.gmra.mrb[0].mxu0 %v1156
    %v1315 = vpop.f32.mrb[0].mxu0
    %v1316 = vadd.f32 %v1219, %v1315
    %v1317 = vpop.f32.mrb[0].mxu0
    %v1318 = vpop.f32.mrb[0].mxu0
    %v1319 = vadd.f32 %v1222, %v1318
    %v1320 = vpop.f32.mrb[0].mxu0
    %1321 = vmatprep.mubr.bf16.mxu0 0
    %1322 = vmatmul.mubr.bf16.gmra.mrb[0].mxu0 %v1159
    %v1323 = vpop.f32.mrb[0].mxu0
    %v1324 = vadd.f32 %v1227, %v1323
    %v1325 = vpop.f32.mrb[0].mxu0
    %v1326 = vpop.f32.mrb[0].mxu0
    %v1327 = vadd.f32 %v1230, %v1326
    %v1328 = vpop.f32.mrb[0].mxu0
    %1329 = vmatprep.mubr.bf16.mxu0 0
    %1330 = vmatmul.mubr.bf16.gmra.mrb[0].mxu0 %v1162
    %v1331 = vpop.f32.mrb[0].mxu0
    %v1332 = vadd.f32 %v1235, %v1331
    %v1333 = vpop.f32.mrb[0].mxu0
    %v1334 = vpop.f32.mrb[0].mxu0
    %v1335 = vadd.f32 %v1238, %v1334
    %v1336 = vpop.f32.mrb[0].mxu0
    %1337 = vmatprep.mubr.bf16.mxu0 0
    %1338 = vmatmul.mubr.bf16.gmra.mrb[0].mxu0 %v1165
    %v1339 = vpop.f32.mrb[0].mxu0
    %v1340 = vadd.f32 %v1243, %v1339
    %v1341 = vpop.f32.mrb[0].mxu0
    %v1342 = vpop.f32.mrb[0].mxu0
    %v1343 = vadd.f32 %v1246, %v1342
    %v1344 = vpop.f32.mrb[0].mxu0
    %1345 = vmatprep.mubr.bf16.mxu0 0
    %1346 = vmatmul.mubr.bf16.gmra.mrb[0].mxu0 %v1168
    %v1347 = vpop.f32.mrb[0].mxu0
    %v1348 = vadd.f32 %v1251, %v1347
    %v1349 = vpop.f32.mrb[0].mxu0
    %v1350 = vpop.f32.mrb[0].mxu0
    %v1351 = vadd.f32 %v1254, %v1350
    %v1352 = vpop.f32.mrb[0].mxu0
    %1353 = vmatprep.mubr.bf16.mxu0 0
    %1354 = vmatmul.mubr.bf16.gmra.mrb[0].mxu0 %v1171
    %v1355 = vpop.f32.mrb[0].mxu0
    %v1356 = vadd.f32 %v1259, %v1355
    %v1357 = vpop.f32.mrb[0].mxu0
    %v1358 = vpop.f32.mrb[0].mxu0
    %v1359 = vadd.f32 %v1262, %v1358
    %v1360 = vpop.f32.mrb[0].mxu0
    %1361 = vmatprep.mubr.bf16.mxu0 0
    %1362 = vmatmul.mubr.bf16.gmra.mrb[0].mxu0 %v1174
    %v1363 = vpop.f32.mrb[0].mxu0
    %v1364 = vadd.f32 %v1267, %v1363
    %v1365 = vpop.f32.mrb[0].mxu0
    %v1366 = vpop.f32.mrb[0].mxu0
    %v1367 = vadd.f32 %v1270, %v1366
    %v1368 = vpop.f32.mrb[0].mxu0
    %1369 = vdwg.mxu0
    %v1370 = vmax.f32 %v1308, 0.0
    %v1371 = vmax.f32 %v1311, 0.0
    %v1372 = vmax.f32 %v1316, 0.0
    %v1373 = vmax.f32 %v1319, 0.0
    %v1374 = vmax.f32 %v1324, 0.0
    %v1375 = vmax.f32 %v1327, 0.0
    %v1376 = vmax.f32 %v1332, 0.0
    %v1377 = vmax.f32 %v1335, 0.0
    %v1378 = vmax.f32 %v1340, 0.0
    %v1379 = vmax.f32 %v1343, 0.0
    %v1380 = vmax.f32 %v1348, 0.0
    %v1381 = vmax.f32 %v1351, 0.0
    %v1382 = vmax.f32 %v1356, 0.0
    %v1383 = vmax.f32 %v1359, 0.0
    %v1384 = vmax.f32 %v1364, 0.0
    %v1385 = vmax.f32 %v1367, 0.0
    %1386 = vst.msk [vmem:[#allocation3] sm:$0xff] %vm895, 0.0
    %vm1387 = vcmask 517120
    %1388 = vst.msk [vmem:[#allocation3 + $0x8] sm:$0x3] %vm1387, 0.0
    %1389 = vst.msk [vmem:[#allocation3 + $0xa0] sm:$0xff] %vm895, 0.0
    %1390 = vst.msk [vmem:[#allocation3 + $0xa8] sm:$0x3] %vm1387, 0.0
    %s1391 = scalar_lea.vmem [#allocation3], 144
    %1392 = vst.msk [vmem:[%s1391] sm:$0xff] %vm895, 0.0
    %1393 = vst.msk [vmem:[%s1391 + $0x8] sm:$0x3] %vm1387, 0.0
    %1394 = vst.msk [vmem:[%s1391 + $0xa0] sm:$0xff] %vm895, 0.0
    %1395 = vst.msk [vmem:[%s1391 + $0xa8] sm:$0x3] %vm1387, 0.0
    %vm1396 = vcmask 516096
    %1397 = vst.msk [vmem:[#allocation3] sm:$0x1] %vm1396, 0.0
    %1398 = vst.msk [vmem:[#allocation3 + $0x10] sm:$0x1] %vm1396, 0.0
    %1399 = vst.msk [vmem:[#allocation3 + $0x20] sm:$0x1] %vm1396, 0.0
    %1400 = vst.msk [vmem:[#allocation3 + $0x30] sm:$0x1] %vm1396, 0.0
    %1401 = vst.msk [vmem:[#allocation3 + $0x40] sm:$0x1] %vm1396, 0.0
    %1402 = vst.msk [vmem:[#allocation3 + $0x50] sm:$0x1] %vm1396, 0.0
    %1403 = vst.msk [vmem:[#allocation3 + $0x60] sm:$0x1] %vm1396, 0.0
    %1404 = vst.msk [vmem:[#allocation3 + $0x70] sm:$0x1] %vm1396, 0.0
    %1405 = vst.msk [vmem:[#allocation3 + $0x80] sm:$0x1] %vm1396, 0.0
    %1406 = vst.msk [vmem:[#allocation3 + $0x90] sm:$0x1] %vm1396, 0.0
    %1407 = vst.msk [vmem:[#allocation3 + $0xa0] sm:$0x1] %vm1396, 0.0
    %1408 = vst.msk [vmem:[#allocation3 + $0xb0] sm:$0x1] %vm1396, 0.0
    %1409 = vst.msk [vmem:[#allocation3 + $0xc0] sm:$0x1] %vm1396, 0.0
    %1410 = vst.msk [vmem:[#allocation3 + $0xd0] sm:$0x1] %vm1396, 0.0
    %1411 = vst.msk [vmem:[#allocation3 + $0xe0] sm:$0x1] %vm1396, 0.0
    %1412 = vst.msk [vmem:[#allocation3 + $0xf0] sm:$0x1] %vm1396, 0.0
    %1413 = vst.msk [vmem:[#allocation3 + $0x100] sm:$0x1] %vm1396, 0.0
    %1414 = vst.msk [vmem:[#allocation3 + $0x110] sm:$0x1] %vm1396, 0.0
    %1415 = vst.msk [vmem:[#allocation3 + $0x120] sm:$0x1] %vm1396, 0.0
    %1416 = vst.msk [vmem:[#allocation3 + $0x130] sm:$0x1] %vm1396, 0.0
    %1417 = vst.msk [vmem:[#allocation3 + $0x9] sm:$0x1] %vm1396, 0.0
    %1418 = vst.msk [vmem:[#allocation3 + $0x19] sm:$0x1] %vm1396, 0.0
    %1419 = vst.msk [vmem:[#allocation3 + $0x29] sm:$0x1] %vm1396, 0.0
    %1420 = vst.msk [vmem:[#allocation3 + $0x39] sm:$0x1] %vm1396, 0.0
    %1421 = vst.msk [vmem:[#allocation3 + $0x49] sm:$0x1] %vm1396, 0.0
    %1422 = vst.msk [vmem:[#allocation3 + $0x59] sm:$0x1] %vm1396, 0.0
    %1423 = vst.msk [vmem:[#allocation3 + $0x69] sm:$0x1] %vm1396, 0.0
    %1424 = vst.msk [vmem:[#allocation3 + $0x79] sm:$0x1] %vm1396, 0.0
    %1425 = vst.msk [vmem:[#allocation3 + $0x89] sm:$0x1] %vm1396, 0.0
    %1426 = vst.msk [vmem:[#allocation3 + $0x99] sm:$0x1] %vm1396, 0.0
    %1427 = vst.msk [vmem:[#allocation3 + $0xa9] sm:$0x1] %vm1396, 0.0
    %1428 = vst.msk [vmem:[#allocation3 + $0xb9] sm:$0x1] %vm1396, 0.0
    %1429 = vst.msk [vmem:[#allocation3 + $0xc9] sm:$0x1] %vm1396, 0.0
    %1430 = vst.msk [vmem:[#allocation3 + $0xd9] sm:$0x1] %vm1396, 0.0
    %1431 = vst.msk [vmem:[#allocation3 + $0xe9] sm:$0x1] %vm1396, 0.0
    %1432 = vst.msk [vmem:[#allocation3 + $0xf9] sm:$0x1] %vm1396, 0.0
    %1433 = vst.msk [vmem:[#allocation3 + $0x109] sm:$0x1] %vm1396, 0.0
    %1434 = vst.msk [vmem:[#allocation3 + $0x119] sm:$0x1] %vm1396, 0.0
    %1435 = vst.msk [vmem:[#allocation3 + $0x129] sm:$0x1] %vm1396, 0.0
    %1436 = vst.msk [vmem:[#allocation3 + $0x139] sm:$0x1] %vm1396, 0.0
    %s1437 = scalar_lea.vmem [#allocation3], 16
    %1438 = vst.msk [vmem:[%s1437 + $0x1] sm:$0xff] %vm895, %v1370
    %1439 = vst.msk [vmem:[%s1437 + $0x11] sm:$0xff] %vm895, %v1371
    %1440 = vst.msk [vmem:[%s1437 + $0x21] sm:$0xff] %vm895, %v1372
    %1441 = vst.msk [vmem:[%s1437 + $0x31] sm:$0xff] %vm895, %v1373
    %1442 = vst.msk [vmem:[%s1437 + $0x41] sm:$0xff] %vm895, %v1374
    %1443 = vst.msk [vmem:[%s1437 + $0x51] sm:$0xff] %vm895, %v1375
    %1444 = vst.msk [vmem:[%s1437 + $0x61] sm:$0xff] %vm895, %v1376
    %1445 = vst.msk [vmem:[%s1437 + $0x71] sm:$0xff] %vm895, %v1377
    %1446 = vst.msk [vmem:[%s1437 + $0xa1] sm:$0xff] %vm895, %v1378
    %1447 = vst.msk [vmem:[%s1437 + $0xb1] sm:$0xff] %vm895, %v1379
    %1448 = vst.msk [vmem:[%s1437 + $0xc1] sm:$0xff] %vm895, %v1380
    %1449 = vst.msk [vmem:[%s1437 + $0xd1] sm:$0xff] %vm895, %v1381
    %1450 = vst.msk [vmem:[%s1437 + $0xe1] sm:$0xff] %vm895, %v1382
    %1451 = vst.msk [vmem:[%s1437 + $0xf1] sm:$0xff] %vm895, %v1383
    %1452 = vst.msk [vmem:[%s1437 + $0x101] sm:$0xff] %vm895, %v1384
    %1453 = vst.msk [vmem:[%s1437 + $0x111] sm:$0xff] %vm895, %v1385
    %v1454 = vld [vmem:[#allocation3] sm:$0xff]
    %v1455 = vld [vmem:[#allocation3 + $0x10] sm:$0xff]
    %v1456 = vld [vmem:[#allocation3 + $0x20] sm:$0xff]
    %v1457 = vld [vmem:[#allocation3 + $0x30] sm:$0xff]
    %v1458 = vld [vmem:[#allocation3 + $0x40] sm:$0xff]
    %v1459 = vld [vmem:[#allocation3 + $0x50] sm:$0xff]
    %v1460 = vld [vmem:[#allocation3 + $0x60] sm:$0xff]
    %v1461 = vld [vmem:[#allocation3 + $0x70] sm:$0xff]
    %v1462 = vld [vmem:[#allocation3 + $0xa0] sm:$0xff]
    %v1463 = vld [vmem:[#allocation3 + $0xb0] sm:$0xff]
    %v1464 = vld [vmem:[#allocation3 + $0xc0] sm:$0xff]
    %v1465 = vld [vmem:[#allocation3 + $0xd0] sm:$0xff]
    %v1466 = vld [vmem:[#allocation3 + $0xe0] sm:$0xff]
    %v1467 = vld [vmem:[#allocation3 + $0xf0] sm:$0xff]
    %v1468 = vld [vmem:[#allocation3 + $0x100] sm:$0xff]
    %v1469 = vld [vmem:[#allocation3 + $0x110] sm:$0xff]
    %1470 = vst.msk [vmem:[#allocation4] sm:$0xff] %vm895, %v1454
    %1471 = vst.msk [vmem:[#allocation4 + $0x28] sm:$0xff] %vm895, %v1455
    %1472 = vst.msk [vmem:[#allocation4 + $0x50] sm:$0xff] %vm895, %v1456
    %1473 = vst.msk [vmem:[#allocation4 + $0x78] sm:$0xff] %vm895, %v1457
    %1474 = vst.msk [vmem:[#allocation4 + $0xa0] sm:$0xff] %vm895, %v1458
    %1475 = vst.msk [vmem:[#allocation4 + $0xc8] sm:$0xff] %vm895, %v1459
    %1476 = vst.msk [vmem:[#allocation4 + $0xf0] sm:$0xff] %vm895, %v1460
    %1477 = vst.msk [vmem:[#allocation4 + $0x118] sm:$0xff] %vm895, %v1461
    %1478 = vst.msk [vmem:[#allocation4 + $0x140] sm:$0xff] %vm895, %v1462
    %1479 = vst.msk [vmem:[#allocation4 + $0x168] sm:$0xff] %vm895, %v1463
    %1480 = vst.msk [vmem:[#allocation4 + $0x190] sm:$0xff] %vm895, %v1464
    %1481 = vst.msk [vmem:[#allocation4 + $0x1b8] sm:$0xff] %vm895, %v1465
    %1482 = vst.msk [vmem:[#allocation4 + $0x1e0] sm:$0xff] %vm895, %v1466
    %1483 = vst.msk [vmem:[#allocation4 + $0x208] sm:$0xff] %vm895, %v1467
    %1484 = vst.msk [vmem:[#allocation4 + $0x230] sm:$0xff] %vm895, %v1468
    %1485 = vst.msk [vmem:[#allocation4 + $0x258] sm:$0xff] %vm895, %v1469
    %v1486 = vld [vmem:[#allocation3 + $0x1] sm:$0xff]
    %v1487 = vld [vmem:[#allocation3 + $0x11] sm:$0xff]
    %v1488 = vld [vmem:[#allocation3 + $0x21] sm:$0xff]
    %v1489 = vld [vmem:[#allocation3 + $0x31] sm:$0xff]
    %v1490 = vld [vmem:[#allocation3 + $0x41] sm:$0xff]
    %v1491 = vld [vmem:[#allocation3 + $0x51] sm:$0xff]
    %v1492 = vld [vmem:[#allocation3 + $0x61] sm:$0xff]
    %v1493 = vld [vmem:[#allocation3 + $0x71] sm:$0xff]
    %v1494 = vld [vmem:[#allocation3 + $0xa1] sm:$0xff]
    %v1495 = vld [vmem:[#allocation3 + $0xb1] sm:$0xff]
    %v1496 = vld [vmem:[#allocation3 + $0xc1] sm:$0xff]
    %v1497 = vld [vmem:[#allocation3 + $0xd1] sm:$0xff]
    %v1498 = vld [vmem:[#allocation3 + $0xe1] sm:$0xff]
    %v1499 = vld [vmem:[#allocation3 + $0xf1] sm:$0xff]
    %v1500 = vld [vmem:[#allocation3 + $0x101] sm:$0xff]
    %v1501 = vld [vmem:[#allocation3 + $0x111] sm:$0xff]
    %1518 = vrot.lane.b32.xlu0 %v1486, 64
    %v1519 = vpop.permute.xlu0 %1518
    %1520 = vrot.lane.b32.xlu0 %v1487, 64
    %v1521 = vpop.permute.xlu0 %1520
    %1522 = vrot.lane.b32.xlu0 %v1488, 64
    %v1523 = vpop.permute.xlu0 %1522
    %1524 = vrot.lane.b32.xlu0 %v1489, 64
    %v1525 = vpop.permute.xlu0 %1524
    %1526 = vrot.lane.b32.xlu0 %v1490, 64
    %v1527 = vpop.permute.xlu0 %1526
    %1528 = vrot.lane.b32.xlu0 %v1491, 64
    %v1529 = vpop.permute.xlu0 %1528
    %1530 = vrot.lane.b32.xlu0 %v1492, 64
    %v1531 = vpop.permute.xlu0 %1530
    %1532 = vrot.lane.b32.xlu0 %v1493, 64
    %v1533 = vpop.permute.xlu0 %1532
    %1534 = vrot.lane.b32.xlu0 %v1494, 64
    %v1535 = vpop.permute.xlu0 %1534
    %1536 = vrot.lane.b32.xlu0 %v1495, 64
    %v1537 = vpop.permute.xlu0 %1536
    %1538 = vrot.lane.b32.xlu0 %v1496, 64
    %v1539 = vpop.permute.xlu0 %1538
    %1540 = vrot.lane.b32.xlu0 %v1497, 64
    %v1541 = vpop.permute.xlu0 %1540
    %1542 = vrot.lane.b32.xlu0 %v1498, 64
    %v1543 = vpop.permute.xlu0 %1542
    %1544 = vrot.lane.b32.xlu0 %v1499, 64
    %v1545 = vpop.permute.xlu0 %1544
    %1546 = vrot.lane.b32.xlu0 %v1500, 64
    %v1547 = vpop.permute.xlu0 %1546
    %1548 = vrot.lane.b32.xlu0 %v1501, 64
    %v1549 = vpop.permute.xlu0 %1548
    %vm1566 = vcmask 1048064
    %1567 = vst.msk [vmem:[#allocation4] sm:$0xff] %vm1566, %v1519
    %1568 = vst.msk [vmem:[#allocation4 + $0x28] sm:$0xff] %vm1566, %v1521
    %1569 = vst.msk [vmem:[#allocation4 + $0x50] sm:$0xff] %vm1566, %v1523
    %1570 = vst.msk [vmem:[#allocation4 + $0x78] sm:$0xff] %vm1566, %v1525
    %1571 = vst.msk [vmem:[#allocation4 + $0xa0] sm:$0xff] %vm1566, %v1527
    %1572 = vst.msk [vmem:[#allocation4 + $0xc8] sm:$0xff] %vm1566, %v1529
    %1573 = vst.msk [vmem:[#allocation4 + $0xf0] sm:$0xff] %vm1566, %v1531
    %1574 = vst.msk [vmem:[#allocation4 + $0x118] sm:$0xff] %vm1566, %v1533
    %1575 = vst.msk [vmem:[#allocation4 + $0x140] sm:$0xff] %vm1566, %v1535
    %1576 = vst.msk [vmem:[#allocation4 + $0x168] sm:$0xff] %vm1566, %v1537
    %1577 = vst.msk [vmem:[#allocation4 + $0x190] sm:$0xff] %vm1566, %v1539
    %1578 = vst.msk [vmem:[#allocation4 + $0x1b8] sm:$0xff] %vm1566, %v1541
    %1579 = vst.msk [vmem:[#allocation4 + $0x1e0] sm:$0xff] %vm1566, %v1543
    %1580 = vst.msk [vmem:[#allocation4 + $0x208] sm:$0xff] %vm1566, %v1545
    %1581 = vst.msk [vmem:[#allocation4 + $0x230] sm:$0xff] %vm1566, %v1547
    %1582 = vst.msk [vmem:[#allocation4 + $0x258] sm:$0xff] %vm1566, %v1549
    %v1583 = vld [vmem:[#allocation3 + $0x2] sm:$0xff]
    %v1584 = vld [vmem:[#allocation3 + $0x12] sm:$0xff]
    %v1585 = vld [vmem:[#allocation3 + $0x22] sm:$0xff]
    %v1586 = vld [vmem:[#allocation3 + $0x32] sm:$0xff]
    %v1587 = vld [vmem:[#allocation3 + $0x42] sm:$0xff]
    %v1588 = vld [vmem:[#allocation3 + $0x52] sm:$0xff]
    %v1589 = vld [vmem:[#allocation3 + $0x62] sm:$0xff]
    %v1590 = vld [vmem:[#allocation3 + $0x72] sm:$0xff]
    %v1591 = vld [vmem:[#allocation3 + $0xa2] sm:$0xff]
    %v1592 = vld [vmem:[#allocation3 + $0xb2] sm:$0xff]
    %v1593 = vld [vmem:[#allocation3 + $0xc2] sm:$0xff]
    %v1594 = vld [vmem:[#allocation3 + $0xd2] sm:$0xff]
    %v1595 = vld [vmem:[#allocation3 + $0xe2] sm:$0xff]
    %v1596 = vld [vmem:[#allocation3 + $0xf2] sm:$0xff]
    %v1597 = vld [vmem:[#allocation3 + $0x102] sm:$0xff]
    %v1598 = vld [vmem:[#allocation3 + $0x112] sm:$0xff]
    %1599 = vst.msk [vmem:[#allocation4 + $0x8] sm:$0xff] %vm895, %v1583
    %1600 = vst.msk [vmem:[#allocation4 + $0x30] sm:$0xff] %vm895, %v1584
    %1601 = vst.msk [vmem:[#allocation4 + $0x58] sm:$0xff] %vm895, %v1585
    %1602 = vst.msk [vmem:[#allocation4 + $0x80] sm:$0xff] %vm895, %v1586
    %1603 = vst.msk [vmem:[#allocation4 + $0xa8] sm:$0xff] %vm895, %v1587
    %1604 = vst.msk [vmem:[#allocation4 + $0xd0] sm:$0xff] %vm895, %v1588
    %1605 = vst.msk [vmem:[#allocation4 + $0xf8] sm:$0xff] %vm895, %v1589
    %1606 = vst.msk [vmem:[#allocation4 + $0x120] sm:$0xff] %vm895, %v1590
    %1607 = vst.msk [vmem:[#allocation4 + $0x148] sm:$0xff] %vm895, %v1591
    %1608 = vst.msk [vmem:[#allocation4 + $0x170] sm:$0xff] %vm895, %v1592
    %1609 = vst.msk [vmem:[#allocation4 + $0x198] sm:$0xff] %vm895, %v1593
    %1610 = vst.msk [vmem:[#allocation4 + $0x1c0] sm:$0xff] %vm895, %v1594
    %1611 = vst.msk [vmem:[#allocation4 + $0x1e8] sm:$0xff] %vm895, %v1595
    %1612 = vst.msk [vmem:[#allocation4 + $0x210] sm:$0xff] %vm895, %v1596
    %1613 = vst.msk [vmem:[#allocation4 + $0x238] sm:$0xff] %vm895, %v1597
    %1614 = vst.msk [vmem:[#allocation4 + $0x260] sm:$0xff] %vm895, %v1598
    %v1615 = vld [vmem:[%s1437] sm:$0xff]
    %v1616 = vld [vmem:[%s1437 + $0x10] sm:$0xff]
    %v1617 = vld [vmem:[%s1437 + $0x20] sm:$0xff]
    %v1618 = vld [vmem:[%s1437 + $0x30] sm:$0xff]
    %v1619 = vld [vmem:[%s1437 + $0x40] sm:$0xff]
    %v1620 = vld [vmem:[%s1437 + $0x50] sm:$0xff]
    %v1621 = vld [vmem:[%s1437 + $0x60] sm:$0xff]
    %v1622 = vld [vmem:[%s1437 + $0x70] sm:$0xff]
    %v1623 = vld [vmem:[%s1437 + $0xa0] sm:$0xff]
    %v1624 = vld [vmem:[%s1437 + $0xb0] sm:$0xff]
    %v1625 = vld [vmem:[%s1437 + $0xc0] sm:$0xff]
    %v1626 = vld [vmem:[%s1437 + $0xd0] sm:$0xff]
    %v1627 = vld [vmem:[%s1437 + $0xe0] sm:$0xff]
    %v1628 = vld [vmem:[%s1437 + $0xf0] sm:$0xff]
    %v1629 = vld [vmem:[%s1437 + $0x100] sm:$0xff]
    %v1630 = vld [vmem:[%s1437 + $0x110] sm:$0xff]
    %1647 = vrot.lane.b32.xlu0 %v1615, 64
    %v1648 = vpop.permute.xlu0 %1647
    %1649 = vrot.lane.b32.xlu0 %v1616, 64
    %v1650 = vpop.permute.xlu0 %1649
    %1651 = vrot.lane.b32.xlu0 %v1617, 64
    %v1652 = vpop.permute.xlu0 %1651
    %1653 = vrot.lane.b32.xlu0 %v1618, 64
    %v1654 = vpop.permute.xlu0 %1653
    %1655 = vrot.lane.b32.xlu0 %v1619, 64
    %v1656 = vpop.permute.xlu0 %1655
    %1657 = vrot.lane.b32.xlu0 %v1620, 64
    %v1658 = vpop.permute.xlu0 %1657
    %1659 = vrot.lane.b32.xlu0 %v1621, 64
    %v1660 = vpop.permute.xlu0 %1659
    %1661 = vrot.lane.b32.xlu0 %v1622, 64
    %v1662 = vpop.permute.xlu0 %1661
    %1663 = vrot.lane.b32.xlu0 %v1623, 64
    %v1664 = vpop.permute.xlu0 %1663
    %1665 = vrot.lane.b32.xlu0 %v1624, 64
    %v1666 = vpop.permute.xlu0 %1665
    %1667 = vrot.lane.b32.xlu0 %v1625, 64
    %v1668 = vpop.permute.xlu0 %1667
    %1669 = vrot.lane.b32.xlu0 %v1626, 64
    %v1670 = vpop.permute.xlu0 %1669
    %1671 = vrot.lane.b32.xlu0 %v1627, 64
    %v1672 = vpop.permute.xlu0 %1671
    %1673 = vrot.lane.b32.xlu0 %v1628, 64
    %v1674 = vpop.permute.xlu0 %1673
    %1675 = vrot.lane.b32.xlu0 %v1629, 64
    %v1676 = vpop.permute.xlu0 %1675
    %1677 = vrot.lane.b32.xlu0 %v1630, 64
    %v1678 = vpop.permute.xlu0 %1677
    %1695 = vst.msk [vmem:[#allocation4 + $0x8] sm:$0xff] %vm1566, %v1648
    %1696 = vst.msk [vmem:[#allocation4 + $0x30] sm:$0xff] %vm1566, %v1650
    %1697 = vst.msk [vmem:[#allocation4 + $0x58] sm:$0xff] %vm1566, %v1652
    %1698 = vst.msk [vmem:[#allocation4 + $0x80] sm:$0xff] %vm1566, %v1654
    %1699 = vst.msk [vmem:[#allocation4 + $0xa8] sm:$0xff] %vm1566, %v1656
    %1700 = vst.msk [vmem:[#allocation4 + $0xd0] sm:$0xff] %vm1566, %v1658
    %1701 = vst.msk [vmem:[#allocation4 + $0xf8] sm:$0xff] %vm1566, %v1660
    %1702 = vst.msk [vmem:[#allocation4 + $0x120] sm:$0xff] %vm1566, %v1662
    %1703 = vst.msk [vmem:[#allocation4 + $0x148] sm:$0xff] %vm1566, %v1664
    %1704 = vst.msk [vmem:[#allocation4 + $0x170] sm:$0xff] %vm1566, %v1666
    %1705 = vst.msk [vmem:[#allocation4 + $0x198] sm:$0xff] %vm1566, %v1668
    %1706 = vst.msk [vmem:[#allocation4 + $0x1c0] sm:$0xff] %vm1566, %v1670
    %1707 = vst.msk [vmem:[#allocation4 + $0x1e8] sm:$0xff] %vm1566, %v1672
    %1708 = vst.msk [vmem:[#allocation4 + $0x210] sm:$0xff] %vm1566, %v1674
    %1709 = vst.msk [vmem:[#allocation4 + $0x238] sm:$0xff] %vm1566, %v1676
    %1710 = vst.msk [vmem:[#allocation4 + $0x260] sm:$0xff] %vm1566, %v1678
    %v1711 = vld [vmem:[%s1437 + $0x1] sm:$0xff]
    %v1712 = vld [vmem:[%s1437 + $0x11] sm:$0xff]
    %v1713 = vld [vmem:[%s1437 + $0x21] sm:$0xff]
    %v1714 = vld [vmem:[%s1437 + $0x31] sm:$0xff]
    %v1715 = vld [vmem:[%s1437 + $0x41] sm:$0xff]
    %v1716 = vld [vmem:[%s1437 + $0x51] sm:$0xff]
    %v1717 = vld [vmem:[%s1437 + $0x61] sm:$0xff]
    %v1718 = vld [vmem:[%s1437 + $0x71] sm:$0xff]
    %v1719 = vld [vmem:[%s1437 + $0xa1] sm:$0xff]
    %v1720 = vld [vmem:[%s1437 + $0xb1] sm:$0xff]
    %v1721 = vld [vmem:[%s1437 + $0xc1] sm:$0xff]
    %v1722 = vld [vmem:[%s1437 + $0xd1] sm:$0xff]
    %v1723 = vld [vmem:[%s1437 + $0xe1] sm:$0xff]
    %v1724 = vld [vmem:[%s1437 + $0xf1] sm:$0xff]
    %v1725 = vld [vmem:[%s1437 + $0x101] sm:$0xff]
    %v1726 = vld [vmem:[%s1437 + $0x111] sm:$0xff]
    %1727 = vst.msk [vmem:[#allocation4 + $0x10] sm:$0xff] %vm895, %v1711
    %1728 = vst.msk [vmem:[#allocation4 + $0x38] sm:$0xff] %vm895, %v1712
    %1729 = vst.msk [vmem:[#allocation4 + $0x60] sm:$0xff] %vm895, %v1713
    %1730 = vst.msk [vmem:[#allocation4 + $0x88] sm:$0xff] %vm895, %v1714
    %1731 = vst.msk [vmem:[#allocation4 + $0xb0] sm:$0xff] %vm895, %v1715
    %1732 = vst.msk [vmem:[#allocation4 + $0xd8] sm:$0xff] %vm895, %v1716
    %1733 = vst.msk [vmem:[#allocation4 + $0x100] sm:$0xff] %vm895, %v1717
    %1734 = vst.msk [vmem:[#allocation4 + $0x128] sm:$0xff] %vm895, %v1718
    %1735 = vst.msk [vmem:[#allocation4 + $0x150] sm:$0xff] %vm895, %v1719
    %1736 = vst.msk [vmem:[#allocation4 + $0x178] sm:$0xff] %vm895, %v1720
    %1737 = vst.msk [vmem:[#allocation4 + $0x1a0] sm:$0xff] %vm895, %v1721
    %1738 = vst.msk [vmem:[#allocation4 + $0x1c8] sm:$0xff] %vm895, %v1722
    %1739 = vst.msk [vmem:[#allocation4 + $0x1f0] sm:$0xff] %vm895, %v1723
    %1740 = vst.msk [vmem:[#allocation4 + $0x218] sm:$0xff] %vm895, %v1724
    %1741 = vst.msk [vmem:[#allocation4 + $0x240] sm:$0xff] %vm895, %v1725
    %1742 = vst.msk [vmem:[#allocation4 + $0x268] sm:$0xff] %vm895, %v1726
    %v1743 = vld [vmem:[%s1437 + $0x2] sm:$0xff]
    %v1744 = vld [vmem:[%s1437 + $0x12] sm:$0xff]
    %v1745 = vld [vmem:[%s1437 + $0x22] sm:$0xff]
    %v1746 = vld [vmem:[%s1437 + $0x32] sm:$0xff]
    %v1747 = vld [vmem:[%s1437 + $0x42] sm:$0xff]
    %v1748 = vld [vmem:[%s1437 + $0x52] sm:$0xff]
    %v1749 = vld [vmem:[%s1437 + $0x62] sm:$0xff]
    %v1750 = vld [vmem:[%s1437 + $0x72] sm:$0xff]
    %v1751 = vld [vmem:[%s1437 + $0xa2] sm:$0xff]
    %v1752 = vld [vmem:[%s1437 + $0xb2] sm:$0xff]
    %v1753 = vld [vmem:[%s1437 + $0xc2] sm:$0xff]
    %v1754 = vld [vmem:[%s1437 + $0xd2] sm:$0xff]
    %v1755 = vld [vmem:[%s1437 + $0xe2] sm:$0xff]
    %v1756 = vld [vmem:[%s1437 + $0xf2] sm:$0xff]
    %v1757 = vld [vmem:[%s1437 + $0x102] sm:$0xff]
    %v1758 = vld [vmem:[%s1437 + $0x112] sm:$0xff]
    %1775 = vrot.lane.b32.xlu0 %v1743, 64
    %v1776 = vpop.permute.xlu0 %1775
    %1777 = vrot.lane.b32.xlu0 %v1744, 64
    %v1778 = vpop.permute.xlu0 %1777
    %1779 = vrot.lane.b32.xlu0 %v1745, 64
    %v1780 = vpop.permute.xlu0 %1779
    %1781 = vrot.lane.b32.xlu0 %v1746, 64
    %v1782 = vpop.permute.xlu0 %1781
    %1783 = vrot.lane.b32.xlu0 %v1747, 64
    %v1784 = vpop.permute.xlu0 %1783
    %1785 = vrot.lane.b32.xlu0 %v1748, 64
    %v1786 = vpop.permute.xlu0 %1785
    %1787 = vrot.lane.b32.xlu0 %v1749, 64
    %v1788 = vpop.permute.xlu0 %1787
    %1789 = vrot.lane.b32.xlu0 %v1750, 64
    %v1790 = vpop.permute.xlu0 %1789
    %1791 = vrot.lane.b32.xlu0 %v1751, 64
    %v1792 = vpop.permute.xlu0 %1791
    %1793 = vrot.lane.b32.xlu0 %v1752, 64
    %v1794 = vpop.permute.xlu0 %1793
    %1795 = vrot.lane.b32.xlu0 %v1753, 64
    %v1796 = vpop.permute.xlu0 %1795
    %1797 = vrot.lane.b32.xlu0 %v1754, 64
    %v1798 = vpop.permute.xlu0 %1797
    %1799 = vrot.lane.b32.xlu0 %v1755, 64
    %v1800 = vpop.permute.xlu0 %1799
    %1801 = vrot.lane.b32.xlu0 %v1756, 64
    %v1802 = vpop.permute.xlu0 %1801
    %1803 = vrot.lane.b32.xlu0 %v1757, 64
    %v1804 = vpop.permute.xlu0 %1803
    %1805 = vrot.lane.b32.xlu0 %v1758, 64
    %v1806 = vpop.permute.xlu0 %1805
    %1823 = vst.msk [vmem:[#allocation4 + $0x10] sm:$0xff] %vm1566, %v1776
    %1824 = vst.msk [vmem:[#allocation4 + $0x38] sm:$0xff] %vm1566, %v1778
    %1825 = vst.msk [vmem:[#allocation4 + $0x60] sm:$0xff] %vm1566, %v1780
    %1826 = vst.msk [vmem:[#allocation4 + $0x88] sm:$0xff] %vm1566, %v1782
    %1827 = vst.msk [vmem:[#allocation4 + $0xb0] sm:$0xff] %vm1566, %v1784
    %1828 = vst.msk [vmem:[#allocation4 + $0xd8] sm:$0xff] %vm1566, %v1786
    %1829 = vst.msk [vmem:[#allocation4 + $0x100] sm:$0xff] %vm1566, %v1788
    %1830 = vst.msk [vmem:[#allocation4 + $0x128] sm:$0xff] %vm1566, %v1790
    %1831 = vst.msk [vmem:[#allocation4 + $0x150] sm:$0xff] %vm1566, %v1792
    %1832 = vst.msk [vmem:[#allocation4 + $0x178] sm:$0xff] %vm1566, %v1794
    %1833 = vst.msk [vmem:[#allocation4 + $0x1a0] sm:$0xff] %vm1566, %v1796
    %1834 = vst.msk [vmem:[#allocation4 + $0x1c8] sm:$0xff] %vm1566, %v1798
    %1835 = vst.msk [vmem:[#allocation4 + $0x1f0] sm:$0xff] %vm1566, %v1800
    %1836 = vst.msk [vmem:[#allocation4 + $0x218] sm:$0xff] %vm1566, %v1802
    %1837 = vst.msk [vmem:[#allocation4 + $0x240] sm:$0xff] %vm1566, %v1804
    %1838 = vst.msk [vmem:[#allocation4 + $0x268] sm:$0xff] %vm1566, %v1806
    %s1839 = scalar_lea.vmem [#allocation3], 32
    %v1840 = vld [vmem:[%s1839] sm:$0xff]
    %v1841 = vld [vmem:[%s1839 + $0x10] sm:$0xff]
    %v1842 = vld [vmem:[%s1839 + $0x20] sm:$0xff]
    %v1843 = vld [vmem:[%s1839 + $0x30] sm:$0xff]
    %v1844 = vld [vmem:[%s1839 + $0x40] sm:$0xff]
    %v1845 = vld [vmem:[%s1839 + $0x50] sm:$0xff]
    %v1846 = vld [vmem:[%s1839 + $0x60] sm:$0xff]
    %v1847 = vld [vmem:[%s1839 + $0x70] sm:$0xff]
    %v1848 = vld [vmem:[%s1839 + $0xa0] sm:$0xff]
    %v1849 = vld [vmem:[%s1839 + $0xb0] sm:$0xff]
    %v1850 = vld [vmem:[%s1839 + $0xc0] sm:$0xff]
    %v1851 = vld [vmem:[%s1839 + $0xd0] sm:$0xff]
    %v1852 = vld [vmem:[%s1839 + $0xe0] sm:$0xff]
    %v1853 = vld [vmem:[%s1839 + $0xf0] sm:$0xff]
    %v1854 = vld [vmem:[%s1839 + $0x100] sm:$0xff]
    %v1855 = vld [vmem:[%s1839 + $0x110] sm:$0xff]
    %1856 = vst.msk [vmem:[#allocation4 + $0x18] sm:$0xff] %vm895, %v1840
    %1857 = vst.msk [vmem:[#allocation4 + $0x40] sm:$0xff] %vm895, %v1841
    %1858 = vst.msk [vmem:[#allocation4 + $0x68] sm:$0xff] %vm895, %v1842
    %1859 = vst.msk [vmem:[#allocation4 + $0x90] sm:$0xff] %vm895, %v1843
    %1860 = vst.msk [vmem:[#allocation4 + $0xb8] sm:$0xff] %vm895, %v1844
    %1861 = vst.msk [vmem:[#allocation4 + $0xe0] sm:$0xff] %vm895, %v1845
    %1862 = vst.msk [vmem:[#allocation4 + $0x108] sm:$0xff] %vm895, %v1846
    %1863 = vst.msk [vmem:[#allocation4 + $0x130] sm:$0xff] %vm895, %v1847
    %1864 = vst.msk [vmem:[#allocation4 + $0x158] sm:$0xff] %vm895, %v1848
    %1865 = vst.msk [vmem:[#allocation4 + $0x180] sm:$0xff] %vm895, %v1849
    %1866 = vst.msk [vmem:[#allocation4 + $0x1a8] sm:$0xff] %vm895, %v1850
    %1867 = vst.msk [vmem:[#allocation4 + $0x1d0] sm:$0xff] %vm895, %v1851
    %1868 = vst.msk [vmem:[#allocation4 + $0x1f8] sm:$0xff] %vm895, %v1852
    %1869 = vst.msk [vmem:[#allocation4 + $0x220] sm:$0xff] %vm895, %v1853
    %1870 = vst.msk [vmem:[#allocation4 + $0x248] sm:$0xff] %vm895, %v1854
    %1871 = vst.msk [vmem:[#allocation4 + $0x270] sm:$0xff] %vm895, %v1855
    %v1872 = vld [vmem:[%s1839 + $0x1] sm:$0xff]
    %v1873 = vld [vmem:[%s1839 + $0x11] sm:$0xff]
    %v1874 = vld [vmem:[%s1839 + $0x21] sm:$0xff]
    %v1875 = vld [vmem:[%s1839 + $0x31] sm:$0xff]
    %v1876 = vld [vmem:[%s1839 + $0x41] sm:$0xff]
    %v1877 = vld [vmem:[%s1839 + $0x51] sm:$0xff]
    %v1878 = vld [vmem:[%s1839 + $0x61] sm:$0xff]
    %v1879 = vld [vmem:[%s1839 + $0x71] sm:$0xff]
    %v1880 = vld [vmem:[%s1839 + $0xa1] sm:$0xff]
    %v1881 = vld [vmem:[%s1839 + $0xb1] sm:$0xff]
    %v1882 = vld [vmem:[%s1839 + $0xc1] sm:$0xff]
    %v1883 = vld [vmem:[%s1839 + $0xd1] sm:$0xff]
    %v1884 = vld [vmem:[%s1839 + $0xe1] sm:$0xff]
    %v1885 = vld [vmem:[%s1839 + $0xf1] sm:$0xff]
    %v1886 = vld [vmem:[%s1839 + $0x101] sm:$0xff]
    %v1887 = vld [vmem:[%s1839 + $0x111] sm:$0xff]
    %1904 = vrot.lane.b32.xlu0 %v1872, 64
    %v1905 = vpop.permute.xlu0 %1904
    %1906 = vrot.lane.b32.xlu0 %v1873, 64
    %v1907 = vpop.permute.xlu0 %1906
    %1908 = vrot.lane.b32.xlu0 %v1874, 64
    %v1909 = vpop.permute.xlu0 %1908
    %1910 = vrot.lane.b32.xlu0 %v1875, 64
    %v1911 = vpop.permute.xlu0 %1910
    %1912 = vrot.lane.b32.xlu0 %v1876, 64
    %v1913 = vpop.permute.xlu0 %1912
    %1914 = vrot.lane.b32.xlu0 %v1877, 64
    %v1915 = vpop.permute.xlu0 %1914
    %1916 = vrot.lane.b32.xlu0 %v1878, 64
    %v1917 = vpop.permute.xlu0 %1916
    %1918 = vrot.lane.b32.xlu0 %v1879, 64
    %v1919 = vpop.permute.xlu0 %1918
    %1920 = vrot.lane.b32.xlu0 %v1880, 64
    %v1921 = vpop.permute.xlu0 %1920
    %1922 = vrot.lane.b32.xlu0 %v1881, 64
    %v1923 = vpop.permute.xlu0 %1922
    %1924 = vrot.lane.b32.xlu0 %v1882, 64
    %v1925 = vpop.permute.xlu0 %1924
    %1926 = vrot.lane.b32.xlu0 %v1883, 64
    %v1927 = vpop.permute.xlu0 %1926
    %1928 = vrot.lane.b32.xlu0 %v1884, 64
    %v1929 = vpop.permute.xlu0 %1928
    %1930 = vrot.lane.b32.xlu0 %v1885, 64
    %v1931 = vpop.permute.xlu0 %1930
    %1932 = vrot.lane.b32.xlu0 %v1886, 64
    %v1933 = vpop.permute.xlu0 %1932
    %1934 = vrot.lane.b32.xlu0 %v1887, 64
    %v1935 = vpop.permute.xlu0 %1934
    %1952 = vst.msk [vmem:[#allocation4 + $0x18] sm:$0xff] %vm1566, %v1905
    %1953 = vst.msk [vmem:[#allocation4 + $0x40] sm:$0xff] %vm1566, %v1907
    %1954 = vst.msk [vmem:[#allocation4 + $0x68] sm:$0xff] %vm1566, %v1909
    %1955 = vst.msk [vmem:[#allocation4 + $0x90] sm:$0xff] %vm1566, %v1911
    %1956 = vst.msk [vmem:[#allocation4 + $0xb8] sm:$0xff] %vm1566, %v1913
    %1957 = vst.msk [vmem:[#allocation4 + $0xe0] sm:$0xff] %vm1566, %v1915
    %1958 = vst.msk [vmem:[#allocation4 + $0x108] sm:$0xff] %vm1566, %v1917
    %1959 = vst.msk [vmem:[#allocation4 + $0x130] sm:$0xff] %vm1566, %v1919
    %1960 = vst.msk [vmem:[#allocation4 + $0x158] sm:$0xff] %vm1566, %v1921
    %1961 = vst.msk [vmem:[#allocation4 + $0x180] sm:$0xff] %vm1566, %v1923
    %1962 = vst.msk [vmem:[#allocation4 + $0x1a8] sm:$0xff] %vm1566, %v1925
    %1963 = vst.msk [vmem:[#allocation4 + $0x1d0] sm:$0xff] %vm1566, %v1927
    %1964 = vst.msk [vmem:[#allocation4 + $0x1f8] sm:$0xff] %vm1566, %v1929
    %1965 = vst.msk [vmem:[#allocation4 + $0x220] sm:$0xff] %vm1566, %v1931
    %1966 = vst.msk [vmem:[#allocation4 + $0x248] sm:$0xff] %vm1566, %v1933
    %1967 = vst.msk [vmem:[#allocation4 + $0x270] sm:$0xff] %vm1566, %v1935
    %v1968 = vld [vmem:[%s1839 + $0x2] sm:$0xff]
    %v1969 = vld [vmem:[%s1839 + $0x12] sm:$0xff]
    %v1970 = vld [vmem:[%s1839 + $0x22] sm:$0xff]
    %v1971 = vld [vmem:[%s1839 + $0x32] sm:$0xff]
    %v1972 = vld [vmem:[%s1839 + $0x42] sm:$0xff]
    %v1973 = vld [vmem:[%s1839 + $0x52] sm:$0xff]
    %v1974 = vld [vmem:[%s1839 + $0x62] sm:$0xff]
    %v1975 = vld [vmem:[%s1839 + $0x72] sm:$0xff]
    %v1976 = vld [vmem:[%s1839 + $0xa2] sm:$0xff]
    %v1977 = vld [vmem:[%s1839 + $0xb2] sm:$0xff]
    %v1978 = vld [vmem:[%s1839 + $0xc2] sm:$0xff]
    %v1979 = vld [vmem:[%s1839 + $0xd2] sm:$0xff]
    %v1980 = vld [vmem:[%s1839 + $0xe2] sm:$0xff]
    %v1981 = vld [vmem:[%s1839 + $0xf2] sm:$0xff]
    %v1982 = vld [vmem:[%s1839 + $0x102] sm:$0xff]
    %v1983 = vld [vmem:[%s1839 + $0x112] sm:$0xff]
    %1984 = vst.msk [vmem:[#allocation4 + $0x20] sm:$0xff] %vm895, %v1968
    %1985 = vst.msk [vmem:[#allocation4 + $0x48] sm:$0xff] %vm895, %v1969
    %1986 = vst.msk [vmem:[#allocation4 + $0x70] sm:$0xff] %vm895, %v1970
    %1987 = vst.msk [vmem:[#allocation4 + $0x98] sm:$0xff] %vm895, %v1971
    %1988 = vst.msk [vmem:[#allocation4 + $0xc0] sm:$0xff] %vm895, %v1972
    %1989 = vst.msk [vmem:[#allocation4 + $0xe8] sm:$0xff] %vm895, %v1973
    %1990 = vst.msk [vmem:[#allocation4 + $0x110] sm:$0xff] %vm895, %v1974
    %1991 = vst.msk [vmem:[#allocation4 + $0x138] sm:$0xff] %vm895, %v1975
    %1992 = vst.msk [vmem:[#allocation4 + $0x160] sm:$0xff] %vm895, %v1976
    %1993 = vst.msk [vmem:[#allocation4 + $0x188] sm:$0xff] %vm895, %v1977
    %1994 = vst.msk [vmem:[#allocation4 + $0x1b0] sm:$0xff] %vm895, %v1978
    %1995 = vst.msk [vmem:[#allocation4 + $0x1d8] sm:$0xff] %vm895, %v1979
    %1996 = vst.msk [vmem:[#allocation4 + $0x200] sm:$0xff] %vm895, %v1980
    %1997 = vst.msk [vmem:[#allocation4 + $0x228] sm:$0xff] %vm895, %v1981
    %1998 = vst.msk [vmem:[#allocation4 + $0x250] sm:$0xff] %vm895, %v1982
    %1999 = vst.msk [vmem:[#allocation4 + $0x278] sm:$0xff] %vm895, %v1983
    %v2000 = vld [vmem:[#allocation4] sm:$0xff]
    %v2001 = vld [vmem:[#allocation4 + $0x8] sm:$0xff]
    %v2002 = vld [vmem:[#allocation4 + $0x10] sm:$0xff]
    %v2003 = vld [vmem:[#allocation4 + $0x18] sm:$0xff]
    %v2004 = vld [vmem:[#allocation4 + $0x20] sm:$0xff]
    %v2005 = vld [vmem:[#allocation4 + $0x28] sm:$0xff]
    %v2006 = vld [vmem:[#allocation4 + $0x30] sm:$0xff]
    %v2007 = vld [vmem:[#allocation4 + $0x38] sm:$0xff]
    %v2008 = vld [vmem:[#allocation4 + $0x40] sm:$0xff]
    %v2009 = vld [vmem:[#allocation4 + $0x48] sm:$0xff]
    %v2010 = vld [vmem:[#allocation4 + $0x50] sm:$0xff]
    %v2011 = vld [vmem:[#allocation4 + $0x58] sm:$0xff]
    %v2012 = vld [vmem:[#allocation4 + $0x60] sm:$0xff]
    %v2013 = vld [vmem:[#allocation4 + $0x68] sm:$0xff]
    %v2014 = vld [vmem:[#allocation4 + $0x70] sm:$0xff]
    %v2015 = vld [vmem:[#allocation4 + $0x78] sm:$0xff]
    %v2016 = vld [vmem:[#allocation4 + $0x80] sm:$0xff]
    %v2017 = vld [vmem:[#allocation4 + $0x88] sm:$0xff]
    %v2018 = vld [vmem:[#allocation4 + $0x90] sm:$0xff]
    %v2019 = vld [vmem:[#allocation4 + $0x98] sm:$0xff]
    %v2020 = vld [vmem:[#allocation4 + $0xa0] sm:$0xff]
    %v2021 = vld [vmem:[#allocation4 + $0xa8] sm:$0xff]
    %v2022 = vld [vmem:[#allocation4 + $0xb0] sm:$0xff]
    %v2023 = vld [vmem:[#allocation4 + $0xb8] sm:$0xff]
    %v2024 = vld [vmem:[#allocation4 + $0xc0] sm:$0xff]
    %v2025 = vld [vmem:[#allocation4 + $0xc8] sm:$0xff]
    %v2026 = vld [vmem:[#allocation4 + $0xd0] sm:$0xff]
    %v2027 = vld [vmem:[#allocation4 + $0xd8] sm:$0xff]
    %v2028 = vld [vmem:[#allocation4 + $0xe0] sm:$0xff]
    %v2029 = vld [vmem:[#allocation4 + $0xe8] sm:$0xff]
    %v2030 = vld [vmem:[#allocation4 + $0xf0] sm:$0xff]
    %v2031 = vld [vmem:[#allocation4 + $0xf8] sm:$0xff]
    %v2032 = vld [vmem:[#allocation4 + $0x100] sm:$0xff]
    %v2033 = vld [vmem:[#allocation4 + $0x108] sm:$0xff]
    %v2034 = vld [vmem:[#allocation4 + $0x110] sm:$0xff]
    %v2035 = vld [vmem:[#allocation4 + $0x118] sm:$0xff]
    %v2036 = vld [vmem:[#allocation4 + $0x120] sm:$0xff]
    %v2037 = vld [vmem:[#allocation4 + $0x128] sm:$0xff]
    %v2038 = vld [vmem:[#allocation4 + $0x130] sm:$0xff]
    %v2039 = vld [vmem:[#allocation4 + $0x138] sm:$0xff]
    %v2040 = vld [vmem:[#allocation4 + $0x140] sm:$0xff]
    %v2041 = vld [vmem:[#allocation4 + $0x148] sm:$0xff]
    %v2042 = vld [vmem:[#allocation4 + $0x150] sm:$0xff]
    %v2043 = vld [vmem:[#allocation4 + $0x158] sm:$0xff]
    %v2044 = vld [vmem:[#allocation4 + $0x160] sm:$0xff]
    %v2045 = vld [vmem:[#allocation4 + $0x168] sm:$0xff]
    %v2046 = vld [vmem:[#allocation4 + $0x170] sm:$0xff]
    %v2047 = vld [vmem:[#allocation4 + $0x178] sm:$0xff]
    %v2048 = vld [vmem:[#allocation4 + $0x180] sm:$0xff]
    %v2049 = vld [vmem:[#allocation4 + $0x188] sm:$0xff]
    %v2050 = vld [vmem:[#allocation4 + $0x190] sm:$0xff]
    %v2051 = vld [vmem:[#allocation4 + $0x198] sm:$0xff]
    %v2052 = vld [vmem:[#allocation4 + $0x1a0] sm:$0xff]
    %v2053 = vld [vmem:[#allocation4 + $0x1a8] sm:$0xff]
    %v2054 = vld [vmem:[#allocation4 + $0x1b0] sm:$0xff]
    %v2055 = vld [vmem:[#allocation4 + $0x1b8] sm:$0xff]
    %v2056 = vld [vmem:[#allocation4 + $0x1c0] sm:$0xff]
    %v2057 = vld [vmem:[#allocation4 + $0x1c8] sm:$0xff]
    %v2058 = vld [vmem:[#allocation4 + $0x1d0] sm:$0xff]
    %v2059 = vld [vmem:[#allocation4 + $0x1d8] sm:$0xff]
    %v2060 = vld [vmem:[#allocation4 + $0x1e0] sm:$0xff]
    %v2061 = vld [vmem:[#allocation4 + $0x1e8] sm:$0xff]
    %v2062 = vld [vmem:[#allocation4 + $0x1f0] sm:$0xff]
    %v2063 = vld [vmem:[#allocation4 + $0x1f8] sm:$0xff]
    %v2064 = vld [vmem:[#allocation4 + $0x200] sm:$0xff]
    %v2065 = vld [vmem:[#allocation4 + $0x208] sm:$0xff]
    %v2066 = vld [vmem:[#allocation4 + $0x210] sm:$0xff]
    %v2067 = vld [vmem:[#allocation4 + $0x218] sm:$0xff]
    %v2068 = vld [vmem:[#allocation4 + $0x220] sm:$0xff]
    %v2069 = vld [vmem:[#allocation4 + $0x228] sm:$0xff]
    %v2070 = vld [vmem:[#allocation4 + $0x230] sm:$0xff]
    %v2071 = vld [vmem:[#allocation4 + $0x238] sm:$0xff]
    %v2072 = vld [vmem:[#allocation4 + $0x240] sm:$0xff]
    %v2073 = vld [vmem:[#allocation4 + $0x248] sm:$0xff]
    %v2074 = vld [vmem:[#allocation4 + $0x250] sm:$0xff]
    %v2075 = vld [vmem:[#allocation4 + $0x258] sm:$0xff]
    %v2076 = vld [vmem:[#allocation4 + $0x260] sm:$0xff]
    %v2077 = vld [vmem:[#allocation4 + $0x268] sm:$0xff]
    %v2078 = vld [vmem:[#allocation4 + $0x270] sm:$0xff]
    %v2079 = vld [vmem:[#allocation4 + $0x278] sm:$0xff]
    %v2080 = vpack.c.bf16 %v2005, %v2000
    %v2081 = vpack.c.bf16 %v2006, %v2001
    %v2082 = vpack.c.bf16 %v2007, %v2002
    %v2083 = vpack.c.bf16 %v2008, %v2003
    %v2084 = vpack.c.bf16 %v2009, %v2004
    %v2085 = vpack.c.bf16 %v2015, %v2010
    %v2086 = vpack.c.bf16 %v2016, %v2011
    %v2087 = vpack.c.bf16 %v2017, %v2012
    %v2088 = vpack.c.bf16 %v2018, %v2013
    %v2089 = vpack.c.bf16 %v2019, %v2014
    %v2090 = vpack.c.bf16 %v2025, %v2020
    %v2091 = vpack.c.bf16 %v2026, %v2021
    %v2092 = vpack.c.bf16 %v2027, %v2022
    %v2093 = vpack.c.bf16 %v2028, %v2023
    %v2094 = vpack.c.bf16 %v2029, %v2024
    %v2095 = vpack.c.bf16 %v2035, %v2030
    %v2096 = vpack.c.bf16 %v2036, %v2031
    %v2097 = vpack.c.bf16 %v2037, %v2032
    %v2098 = vpack.c.bf16 %v2038, %v2033
    %v2099 = vpack.c.bf16 %v2039, %v2034
    %v2100 = vpack.c.bf16 %v2045, %v2040
    %v2101 = vpack.c.bf16 %v2046, %v2041
    %v2102 = vpack.c.bf16 %v2047, %v2042
    %v2103 = vpack.c.bf16 %v2048, %v2043
    %v2104 = vpack.c.bf16 %v2049, %v2044
    %v2105 = vpack.c.bf16 %v2055, %v2050
    %v2106 = vpack.c.bf16 %v2056, %v2051
    %v2107 = vpack.c.bf16 %v2057, %v2052
    %v2108 = vpack.c.bf16 %v2058, %v2053
    %v2109 = vpack.c.bf16 %v2059, %v2054
    %v2110 = vpack.c.bf16 %v2065, %v2060
    %v2111 = vpack.c.bf16 %v2066, %v2061
    %v2112 = vpack.c.bf16 %v2067, %v2062
    %v2113 = vpack.c.bf16 %v2068, %v2063
    %v2114 = vpack.c.bf16 %v2069, %v2064
    %v2115 = vpack.c.bf16 %v2075, %v2070
    %v2116 = vpack.c.bf16 %v2076, %v2071
    %v2117 = vpack.c.bf16 %v2077, %v2072
    %v2118 = vpack.c.bf16 %v2078, %v2073
    %v2119 = vpack.c.bf16 %v2079, %v2074
    %v2120 = vld [vmem:[%s5] sm:$0xf]
    %v2121 = vld [vmem:[%s5 + $0x4] sm:$0xf]
    %v2122 = vld [vmem:[%s5 + $0x8] sm:$0xf]
    %v2123 = vld [vmem:[%s5 + $0xc] sm:$0xf]
    %v2124 = vld [vmem:[%s5 + $0x10] sm:$0xf]
    %v2125 = vld [vmem:[%s5 + $0x14] sm:$0xf]
    %v2126 = vld [vmem:[%s5 + $0x18] sm:$0xf]
    %v2127 = vld [vmem:[%s5 + $0x1c] sm:$0xf]
    %v2128 = vld [vmem:[%s5 + $0x20] sm:$0xf]
    %v2129 = vld [vmem:[%s5 + $0x24] sm:$0xf]
    %v2130 = vld [vmem:[%s5 + $0x28] sm:$0xf]
    %v2131 = vld [vmem:[%s5 + $0x2c] sm:$0xf]
    %v2132 = vld [vmem:[%s5 + $0x30] sm:$0xf]
    %v2133 = vld [vmem:[%s5 + $0x34] sm:$0xf]
    %v2134 = vld [vmem:[%s5 + $0x38] sm:$0xf]
    %v2135 = vld [vmem:[%s5 + $0x3c] sm:$0xf]
    %v2136 = vld [vmem:[%s5 + $0x40] sm:$0xf]
    %v2137 = vld [vmem:[%s5 + $0x44] sm:$0xf]
    %v2138 = vld [vmem:[%s5 + $0x48] sm:$0xf]
    %v2139 = vld [vmem:[%s5 + $0x4c] sm:$0xf]
    %v2140 = vld [vmem:[%s5 + $0x50] sm:$0xf]
    %v2141 = vld [vmem:[%s5 + $0x54] sm:$0xf]
    %v2142 = vld [vmem:[%s5 + $0x58] sm:$0xf]
    %v2143 = vld [vmem:[%s5 + $0x5c] sm:$0xf]
    %v2144 = vld [vmem:[%s5 + $0x60] sm:$0xf]
    %v2145 = vld [vmem:[%s5 + $0x64] sm:$0xf]
    %v2146 = vld [vmem:[%s5 + $0x68] sm:$0xf]
    %v2147 = vld [vmem:[%s5 + $0x6c] sm:$0xf]
    %v2148 = vld [vmem:[%s5 + $0x70] sm:$0xf]
    %v2149 = vld [vmem:[%s5 + $0x74] sm:$0xf]
    %v2150 = vld [vmem:[%s5 + $0x78] sm:$0xf]
    %v2151 = vld [vmem:[%s5 + $0x7c] sm:$0xf]
    %v2152 = vld [vmem:[%s5 + $0x80] sm:$0xf]
    %v2153 = vld [vmem:[%s5 + $0x84] sm:$0xf]
    %v2154 = vld [vmem:[%s5 + $0x88] sm:$0xf]
    %v2155 = vld [vmem:[%s5 + $0x8c] sm:$0xf]
    %v2156 = vld [vmem:[%s5 + $0x90] sm:$0xf]
    %v2157 = vld [vmem:[%s5 + $0x94] sm:$0xf]
    %v2158 = vld [vmem:[%s5 + $0x98] sm:$0xf]
    %v2159 = vld [vmem:[%s5 + $0x9c] sm:$0xf]
    %v2160 = vld [vmem:[%s5 + $0xa0] sm:$0xf]
    %v2161 = vld [vmem:[%s5 + $0xa4] sm:$0xf]
    %v2162 = vld [vmem:[%s5 + $0xa8] sm:$0xf]
    %v2163 = vld [vmem:[%s5 + $0xac] sm:$0xf]
    %v2164 = vld [vmem:[%s5 + $0xb0] sm:$0xf]
    %v2165 = vld [vmem:[%s5 + $0xb4] sm:$0xf]
    %v2166 = vld [vmem:[%s5 + $0xb8] sm:$0xf]
    %v2167 = vld [vmem:[%s5 + $0xbc] sm:$0xf]
    %v2168 = vld [vmem:[%s5 + $0xc0] sm:$0xf]
    %v2169 = vld [vmem:[%s5 + $0xc4] sm:$0xf]
    %v2170 = vld [vmem:[%s5 + $0xc8] sm:$0xf]
    %v2171 = vld [vmem:[%s5 + $0xcc] sm:$0xf]
    %v2172 = vld [vmem:[%s5 + $0xd0] sm:$0xf]
    %v2173 = vld [vmem:[%s5 + $0xd4] sm:$0xf]
    %v2174 = vld [vmem:[%s5 + $0xd8] sm:$0xf]
    %v2175 = vld [vmem:[%s5 + $0xdc] sm:$0xf]
    %v2176 = vld [vmem:[%s5 + $0xe0] sm:$0xf]
    %v2177 = vld [vmem:[%s5 + $0xe4] sm:$0xf]
    %v2178 = vld [vmem:[%s5 + $0xe8] sm:$0xf]
    %v2179 = vld [vmem:[%s5 + $0xec] sm:$0xf]
    %v2180 = vld [vmem:[%s5 + $0xf0] sm:$0xf]
    %v2181 = vld [vmem:[%s5 + $0xf4] sm:$0xf]
    %v2182 = vld [vmem:[%s5 + $0xf8] sm:$0xf]
    %v2183 = vld [vmem:[%s5 + $0xfc] sm:$0xf]
    %v2184 = vld [vmem:[%s5 + $0x100] sm:$0xf]
    %v2185 = vld [vmem:[%s5 + $0x104] sm:$0xf]
    %v2186 = vld [vmem:[%s5 + $0x108] sm:$0xf]
    %v2187 = vld [vmem:[%s5 + $0x10c] sm:$0xf]
    %v2188 = vld [vmem:[%s5 + $0x110] sm:$0xf]
    %v2189 = vld [vmem:[%s5 + $0x114] sm:$0xf]
    %v2190 = vld [vmem:[%s5 + $0x118] sm:$0xf]
    %v2191 = vld [vmem:[%s5 + $0x11c] sm:$0xf]
    %v2192 = vld [vmem:[%s6] sm:$0x1]
    %v2194 = vlaneseq
    %v2195 = vshrl.u32 %v2194, 7
    %v2196 = vsub.s32 0, %v2195
    %v2197 = vrot.slane %v2192, %v2196
    %v2271 = vunpack.c.l.b16 %v2120
    %v2272 = vunpack.c.l.b16 %v2121
    %v2273 = vunpack.c.l.b16 %v2122
    %v2274 = vunpack.c.l.b16 %v2123
    %v2275 = vunpack.c.l.b16 %v2124
    %v2276 = vunpack.c.l.b16 %v2125
    %v2277 = vunpack.c.l.b16 %v2126
    %v2278 = vunpack.c.l.b16 %v2127
    %v2279 = vunpack.c.l.b16 %v2128
    %v2280 = vunpack.c.l.b16 %v2129
    %v2281 = vunpack.c.l.b16 %v2130
    %v2282 = vunpack.c.l.b16 %v2131
    %v2283 = vunpack.c.l.b16 %v2132
    %v2284 = vunpack.c.l.b16 %v2133
    %v2285 = vunpack.c.l.b16 %v2134
    %v2286 = vunpack.c.l.b16 %v2135
    %v2287 = vunpack.c.l.b16 %v2136
    %v2288 = vunpack.c.l.b16 %v2137
    %v2289 = vunpack.c.l.b16 %v2138
    %v2290 = vunpack.c.l.b16 %v2139
    %v2291 = vunpack.c.l.b16 %v2140
    %v2292 = vunpack.c.l.b16 %v2141
    %v2293 = vunpack.c.l.b16 %v2142
    %v2294 = vunpack.c.l.b16 %v2143
    %v2295 = vunpack.c.l.b16 %v2144
    %v2296 = vunpack.c.l.b16 %v2145
    %v2297 = vunpack.c.l.b16 %v2146
    %v2298 = vunpack.c.l.b16 %v2147
    %v2299 = vunpack.c.l.b16 %v2148
    %v2300 = vunpack.c.l.b16 %v2149
    %v2301 = vunpack.c.l.b16 %v2150
    %v2302 = vunpack.c.l.b16 %v2151
    %v2303 = vunpack.c.l.b16 %v2152
    %v2304 = vunpack.c.l.b16 %v2153
    %v2305 = vunpack.c.l.b16 %v2154
    %v2306 = vunpack.c.l.b16 %v2155
    %v2307 = vunpack.c.l.b16 %v2156
    %v2308 = vunpack.c.l.b16 %v2157
    %v2309 = vunpack.c.l.b16 %v2158
    %v2310 = vunpack.c.l.b16 %v2159
    %v2311 = vunpack.c.l.b16 %v2160
    %v2312 = vunpack.c.l.b16 %v2161
    %v2313 = vunpack.c.l.b16 %v2162
    %v2314 = vunpack.c.l.b16 %v2163
    %v2315 = vunpack.c.l.b16 %v2164
    %v2316 = vunpack.c.l.b16 %v2165
    %v2317 = vunpack.c.l.b16 %v2166
    %v2318 = vunpack.c.l.b16 %v2167
    %v2319 = vunpack.c.l.b16 %v2168
    %v2320 = vunpack.c.l.b16 %v2169
    %v2321 = vunpack.c.l.b16 %v2170
    %v2322 = vunpack.c.l.b16 %v2171
    %v2323 = vunpack.c.l.b16 %v2172
    %v2324 = vunpack.c.l.b16 %v2173
    %v2325 = vunpack.c.l.b16 %v2174
    %v2326 = vunpack.c.l.b16 %v2175
    %v2327 = vunpack.c.l.b16 %v2176
    %v2328 = vunpack.c.l.b16 %v2177
    %v2329 = vunpack.c.l.b16 %v2178
    %v2330 = vunpack.c.l.b16 %v2179
    %v2331 = vunpack.c.l.b16 %v2180
    %v2332 = vunpack.c.l.b16 %v2181
    %v2333 = vunpack.c.l.b16 %v2182
    %v2334 = vunpack.c.l.b16 %v2183
    %v2335 = vunpack.c.l.b16 %v2184
    %v2336 = vunpack.c.l.b16 %v2185
    %v2337 = vunpack.c.l.b16 %v2186
    %v2338 = vunpack.c.l.b16 %v2187
    %v2339 = vunpack.c.l.b16 %v2188
    %v2340 = vunpack.c.l.b16 %v2189
    %v2341 = vunpack.c.l.b16 %v2190
    %v2342 = vunpack.c.l.b16 %v2191
    %v2343 = vpack.c.b16 %v2272, %v2271
    %v2344 = vpack.c.b16 %v2274, %v2273
    %v2345 = vpack.c.b16 %v2276, %v2275
    %v2346 = vpack.c.b16 %v2278, %v2277
    %v2347 = vpack.c.b16 %v2280, %v2279
    %v2348 = vpack.c.b16 %v2282, %v2281
    %v2349 = vpack.c.b16 %v2284, %v2283
    %v2350 = vpack.c.b16 %v2286, %v2285
    %v2351 = vpack.c.b16 %v2288, %v2287
    %v2352 = vpack.c.b16 %v2290, %v2289
    %v2353 = vpack.c.b16 %v2292, %v2291
    %v2354 = vpack.c.b16 %v2294, %v2293
    %v2355 = vpack.c.b16 %v2296, %v2295
    %v2356 = vpack.c.b16 %v2298, %v2297
    %v2357 = vpack.c.b16 %v2300, %v2299
    %v2358 = vpack.c.b16 %v2302, %v2301
    %v2359 = vpack.c.b16 %v2304, %v2303
    %v2360 = vpack.c.b16 %v2306, %v2305
    %v2361 = vpack.c.b16 %v2308, %v2307
    %v2362 = vpack.c.b16 %v2310, %v2309
    %v2363 = vpack.c.b16 %v2312, %v2311
    %v2364 = vpack.c.b16 %v2314, %v2313
    %v2365 = vpack.c.b16 %v2316, %v2315
    %v2366 = vpack.c.b16 %v2318, %v2317
    %v2367 = vpack.c.b16 %v2320, %v2319
    %v2368 = vpack.c.b16 %v2322, %v2321
    %v2369 = vpack.c.b16 %v2324, %v2323
    %v2370 = vpack.c.b16 %v2326, %v2325
    %v2371 = vpack.c.b16 %v2328, %v2327
    %v2372 = vpack.c.b16 %v2330, %v2329
    %v2373 = vpack.c.b16 %v2332, %v2331
    %v2374 = vpack.c.b16 %v2334, %v2333
    %v2375 = vpack.c.b16 %v2336, %v2335
    %v2376 = vpack.c.b16 %v2338, %v2337
    %v2377 = vpack.c.b16 %v2340, %v2339
    %v2378 = vpack.c.b16 %v2342, %v2341
    %v2416 = vsel %vm895, %v2084, 0
    %v2419 = vsel %vm895, %v2089, 0
    %v2422 = vsel %vm895, %v2094, 0
    %v2425 = vsel %vm895, %v2099, 0
    %v2428 = vsel %vm895, %v2104, 0
    %v2431 = vsel %vm895, %v2109, 0
    %v2434 = vsel %vm895, %v2114, 0
    %v2437 = vsel %vm895, %v2119, 0
    %2439 = vmatprep.subr.bf16.mxu0 0
    %2440 = vmatpush1.bf16.msra.mxu0 %v2343
    %2441 = vmatprep.subr.bf16.mxu0 0
    %2442 = vmatpush1.bf16.msra.mxu0 %v2344
    %2443 = vmatprep.subr.bf16.mxu0 0
    %2444 = vmatpush1.bf16.msra.mxu0 %v2345
    %2445 = vmatprep.subr.bf16.mxu0 0
    %2446 = vmatpush1.bf16.msra.mxu0 %v2346
    %2447 = vmatprep.subr.bf16.mxu0 0
    %2448 = vmatpush1.bf16.msra.mxu0 %v2347
    %2449 = vmatprep.subr.bf16.mxu0 0
    %2450 = vmatpush1.bf16.msra.mxu0 %v2348
    %2451 = vmatprep.subr.bf16.mxu0 0
    %2452 = vmatpush1.bf16.msra.mxu0 %v2349
    %2453 = vmatprep.subr.bf16.mxu0 0
    %2454 = vmatpush1.bf16.msra.mxu0 %v2350
    %2455 = vmatprep.subr.bf16.mxu0 0
    %2456 = vmatpush1.bf16.msra.mxu0 %v2351
    %2457 = vmatprep.subr.bf16.mxu0 0
    %2458 = vmatpush1.bf16.msra.mxu0 %v2352
    %2459 = vmatprep.subr.bf16.mxu0 0
    %2460 = vmatpush1.bf16.msra.mxu0 %v2353
    %2461 = vmatprep.subr.bf16.mxu0 0
    %2462 = vmatpush1.bf16.msra.mxu0 %v2354
    %2463 = vmatprep.subr.bf16.mxu0 0
    %2464 = vmatpush1.bf16.msra.mxu0 %v2355
    %2465 = vmatprep.subr.bf16.mxu0 0
    %2466 = vmatpush1.bf16.msra.mxu0 %v2356
    %2467 = vmatprep.subr.bf16.mxu0 0
    %2468 = vmatpush1.bf16.msra.mxu0 %v2357
    %2469 = vmatprep.subr.bf16.mxu0 0
    %2470 = vmatpush1.bf16.msra.mxu0 %v2358
    %2471 = vmatprep.mubr.bf16.mxu0 %v2081
    %2472 = vmatmul.mubr.bf16.gmra.mrb[0].mxu0 %v2080
    %v2473 = vpop.f32.mrb[0].mxu0
    %v2474 = vadd.f32 %v2197, %v2473
    %v2475 = vpop.f32.mrb[0].mxu0
    %v2476 = vpop.f32.mrb[0].mxu0
    %v2477 = vadd.f32 %v2197, %v2476
    %v2478 = vpop.f32.mrb[0].mxu0
    %2479 = vmatprep.mubr.bf16.mxu0 %v2086
    %2480 = vmatmul.mubr.bf16.gmra.mrb[0].mxu0 %v2085
    %v2481 = vpop.f32.mrb[0].mxu0
    %v2482 = vadd.f32 %v2197, %v2481
    %v2483 = vpop.f32.mrb[0].mxu0
    %v2484 = vpop.f32.mrb[0].mxu0
    %v2485 = vadd.f32 %v2197, %v2484
    %v2486 = vpop.f32.mrb[0].mxu0
    %2487 = vmatprep.mubr.bf16.mxu0 %v2091
    %2488 = vmatmul.mubr.bf16.gmra.mrb[0].mxu0 %v2090
    %v2489 = vpop.f32.mrb[0].mxu0
    %v2490 = vadd.f32 %v2197, %v2489
    %v2491 = vpop.f32.mrb[0].mxu0
    %v2492 = vpop.f32.mrb[0].mxu0
    %v2493 = vadd.f32 %v2197, %v2492
    %v2494 = vpop.f32.mrb[0].mxu0
    %2495 = vmatprep.mubr.bf16.mxu0 %v2096
    %2496 = vmatmul.mubr.bf16.gmra.mrb[0].mxu0 %v2095
    %v2497 = vpop.f32.mrb[0].mxu0
    %v2498 = vadd.f32 %v2197, %v2497
    %v2499 = vpop.f32.mrb[0].mxu0
    %v2500 = vpop.f32.mrb[0].mxu0
    %v2501 = vadd.f32 %v2197, %v2500
    %v2502 = vpop.f32.mrb[0].mxu0
    %2503 = vmatprep.mubr.bf16.mxu0 %v2101
    %2504 = vmatmul.mubr.bf16.gmra.mrb[0].mxu0 %v2100
    %v2505 = vpop.f32.mrb[0].mxu0
    %v2506 = vadd.f32 %v2197, %v2505
    %v2507 = vpop.f32.mrb[0].mxu0
    %v2508 = vpop.f32.mrb[0].mxu0
    %v2509 = vadd.f32 %v2197, %v2508
    %v2510 = vpop.f32.mrb[0].mxu0
    %2511 = vmatprep.mubr.bf16.mxu0 %v2106
    %2512 = vmatmul.mubr.bf16.gmra.mrb[0].mxu0 %v2105
    %v2513 = vpop.f32.mrb[0].mxu0
    %v2514 = vadd.f32 %v2197, %v2513
    %v2515 = vpop.f32.mrb[0].mxu0
    %v2516 = vpop.f32.mrb[0].mxu0
    %v2517 = vadd.f32 %v2197, %v2516
    %v2518 = vpop.f32.mrb[0].mxu0
    %2519 = vmatprep.mubr.bf16.mxu0 %v2111
    %2520 = vmatmul.mubr.bf16.gmra.mrb[0].mxu0 %v2110
    %v2521 = vpop.f32.mrb[0].mxu0
    %v2522 = vadd.f32 %v2197, %v2521
    %v2523 = vpop.f32.mrb[0].mxu0
    %v2524 = vpop.f32.mrb[0].mxu0
    %v2525 = vadd.f32 %v2197, %v2524
    %v2526 = vpop.f32.mrb[0].mxu0
    %2527 = vmatprep.mubr.bf16.mxu0 %v2116
    %2528 = vmatmul.mubr.bf16.gmra.mrb[0].mxu0 %v2115
    %v2529 = vpop.f32.mrb[0].mxu0
    %v2530 = vadd.f32 %v2197, %v2529
    %v2531 = vpop.f32.mrb[0].mxu0
    %v2532 = vpop.f32.mrb[0].mxu0
    %v2533 = vadd.f32 %v2197, %v2532
    %v2534 = vpop.f32.mrb[0].mxu0
    %2535 = vdwg.mxu0
    %2536 = vmatprep.subr.bf16.mxu0 0
    %2537 = vmatpush1.bf16.msra.mxu0 %v2359
    %2538 = vmatprep.subr.bf16.mxu0 0
    %2539 = vmatpush1.bf16.msra.mxu0 %v2360
    %2540 = vmatprep.subr.bf16.mxu0 0
    %2541 = vmatpush1.bf16.msra.mxu0 %v2361
    %2542 = vmatprep.subr.bf16.mxu0 0
    %2543 = vmatpush1.bf16.msra.mxu0 %v2362
    %2544 = vmatprep.subr.bf16.mxu0 0
    %2545 = vmatpush1.bf16.msra.mxu0 %v2363
    %2546 = vmatprep.subr.bf16.mxu0 0
    %2547 = vmatpush1.bf16.msra.mxu0 %v2364
    %2548 = vmatprep.subr.bf16.mxu0 0
    %2549 = vmatpush1.bf16.msra.mxu0 %v2365
    %2550 = vmatprep.subr.bf16.mxu0 0
    %2551 = vmatpush1.bf16.msra.mxu0 %v2366
    %2552 = vmatprep.subr.bf16.mxu0 0
    %2553 = vmatpush1.bf16.msra.mxu0 %v2367
    %2554 = vmatprep.subr.bf16.mxu0 0
    %2555 = vmatpush1.bf16.msra.mxu0 %v2368
    %2556 = vmatprep.subr.bf16.mxu0 0
    %2557 = vmatpush1.bf16.msra.mxu0 %v2369
    %2558 = vmatprep.subr.bf16.mxu0 0
    %2559 = vmatpush1.bf16.msra.mxu0 %v2370
    %2560 = vmatprep.subr.bf16.mxu0 0
    %2561 = vmatpush1.bf16.msra.mxu0 %v2371
    %2562 = vmatprep.subr.bf16.mxu0 0
    %2563 = vmatpush1.bf16.msra.mxu0 %v2372
    %2564 = vmatprep.subr.bf16.mxu0 0
    %2565 = vmatpush1.bf16.msra.mxu0 %v2373
    %2566 = vmatprep.subr.bf16.mxu0 0
    %2567 = vmatpush1.bf16.msra.mxu0 %v2374
    %2568 = vmatprep.mubr.bf16.mxu0 %v2083
    %2569 = vmatmul.mubr.bf16.gmra.mrb[0].mxu0 %v2082
    %v2570 = vpop.f32.mrb[0].mxu0
    %v2571 = vadd.f32 %v2474, %v2570
    %v2572 = vpop.f32.mrb[0].mxu0
    %v2573 = vpop.f32.mrb[0].mxu0
    %v2574 = vadd.f32 %v2477, %v2573
    %v2575 = vpop.f32.mrb[0].mxu0
    %2576 = vmatprep.mubr.bf16.mxu0 %v2088
    %2577 = vmatmul.mubr.bf16.gmra.mrb[0].mxu0 %v2087
    %v2578 = vpop.f32.mrb[0].mxu0
    %v2579 = vadd.f32 %v2482, %v2578
    %v2580 = vpop.f32.mrb[0].mxu0
    %v2581 = vpop.f32.mrb[0].mxu0
    %v2582 = vadd.f32 %v2485, %v2581
    %v2583 = vpop.f32.mrb[0].mxu0
    %2584 = vmatprep.mubr.bf16.mxu0 %v2093
    %2585 = vmatmul.mubr.bf16.gmra.mrb[0].mxu0 %v2092
    %v2586 = vpop.f32.mrb[0].mxu0
    %v2587 = vadd.f32 %v2490, %v2586
    %v2588 = vpop.f32.mrb[0].mxu0
    %v2589 = vpop.f32.mrb[0].mxu0
    %v2590 = vadd.f32 %v2493, %v2589
    %v2591 = vpop.f32.mrb[0].mxu0
    %2592 = vmatprep.mubr.bf16.mxu0 %v2098
    %2593 = vmatmul.mubr.bf16.gmra.mrb[0].mxu0 %v2097
    %v2594 = vpop.f32.mrb[0].mxu0
    %v2595 = vadd.f32 %v2498, %v2594
    %v2596 = vpop.f32.mrb[0].mxu0
    %v2597 = vpop.f32.mrb[0].mxu0
    %v2598 = vadd.f32 %v2501, %v2597
    %v2599 = vpop.f32.mrb[0].mxu0
    %2600 = vmatprep.mubr.bf16.mxu0 %v2103
    %2601 = vmatmul.mubr.bf16.gmra.mrb[0].mxu0 %v2102
    %v2602 = vpop.f32.mrb[0].mxu0
    %v2603 = vadd.f32 %v2506, %v2602
    %v2604 = vpop.f32.mrb[0].mxu0
    %v2605 = vpop.f32.mrb[0].mxu0
    %v2606 = vadd.f32 %v2509, %v2605
    %v2607 = vpop.f32.mrb[0].mxu0
    %2608 = vmatprep.mubr.bf16.mxu0 %v2108
    %2609 = vmatmul.mubr.bf16.gmra.mrb[0].mxu0 %v2107
    %v2610 = vpop.f32.mrb[0].mxu0
    %v2611 = vadd.f32 %v2514, %v2610
    %v2612 = vpop.f32.mrb[0].mxu0
    %v2613 = vpop.f32.mrb[0].mxu0
    %v2614 = vadd.f32 %v2517, %v2613
    %v2615 = vpop.f32.mrb[0].mxu0
    %2616 = vmatprep.mubr.bf16.mxu0 %v2113
    %2617 = vmatmul.mubr.bf16.gmra.mrb[0].mxu0 %v2112
    %v2618 = vpop.f32.mrb[0].mxu0
    %v2619 = vadd.f32 %v2522, %v2618
    %v2620 = vpop.f32.mrb[0].mxu0
    %v2621 = vpop.f32.mrb[0].mxu0
    %v2622 = vadd.f32 %v2525, %v2621
    %v2623 = vpop.f32.mrb[0].mxu0
    %2624 = vmatprep.mubr.bf16.mxu0 %v2118
    %2625 = vmatmul.mubr.bf16.gmra.mrb[0].mxu0 %v2117
    %v2626 = vpop.f32.mrb[0].mxu0
    %v2627 = vadd.f32 %v2530, %v2626
    %v2628 = vpop.f32.mrb[0].mxu0
    %v2629 = vpop.f32.mrb[0].mxu0
    %v2630 = vadd.f32 %v2533, %v2629
    %v2631 = vpop.f32.mrb[0].mxu0
    %2632 = vdwg.mxu0
    %2633 = vmatprep.subr.bf16.mxu0 0
    %2634 = vmatpush1.bf16.msra.mxu0 %v2375
    %2635 = vmatprep.subr.bf16.mxu0 0
    %2636 = vmatpush1.bf16.msra.mxu0 %v2376
    %2637 = vmatprep.subr.bf16.mxu0 0
    %2638 = vmatpush1.bf16.msra.mxu0 %v2377
    %2639 = vmatprep.subr.bf16.mxu0 0
    %2640 = vmatpush1.bf16.msra.mxu0 %v2378
    %2641 = vmatprep.subr.bf16.mxu0 0
    %2642 = vmatpush1.bf16.msra.mxu0 0
    %2643 = vmatprep.subr.bf16.mxu0 0
    %2644 = vmatpush1.bf16.msra.mxu0 0
    %2645 = vmatprep.subr.bf16.mxu0 0
    %2646 = vmatpush1.bf16.msra.mxu0 0
    %2647 = vmatprep.subr.bf16.mxu0 0
    %2648 = vmatpush1.bf16.msra.mxu0 0
    %2649 = vmatprep.subr.bf16.mxu0 0
    %2650 = vmatpush1.bf16.msra.mxu0 0
    %2651 = vmatprep.subr.bf16.mxu0 0
    %2652 = vmatpush1.bf16.msra.mxu0 0
    %2653 = vmatprep.subr.bf16.mxu0 0
    %2654 = vmatpush1.bf16.msra.mxu0 0
    %2655 = vmatprep.subr.bf16.mxu0 0
    %2656 = vmatpush1.bf16.msra.mxu0 0
    %2657 = vmatprep.subr.bf16.mxu0 0
    %2658 = vmatpush1.bf16.msra.mxu0 0
    %2659 = vmatprep.subr.bf16.mxu0 0
    %2660 = vmatpush1.bf16.msra.mxu0 0
    %2661 = vmatprep.subr.bf16.mxu0 0
    %2662 = vmatpush1.bf16.msra.mxu0 0
    %2663 = vmatprep.subr.bf16.mxu0 0
    %2664 = vmatpush1.bf16.msra.mxu0 0
    %2665 = vmatprep.mubr.bf16.mxu0 0
    %2666 = vmatmul.mubr.bf16.gmra.mrb[0].mxu0 %v2416
    %v2667 = vpop.f32.mrb[0].mxu0
    %v2668 = vadd.f32 %v2571, %v2667
    %v2669 = vpop.f32.mrb[0].mxu0
    %v2670 = vpop.f32.mrb[0].mxu0
    %v2671 = vadd.f32 %v2574, %v2670
    %v2672 = vpop.f32.mrb[0].mxu0
    %2673 = vmatprep.mubr.bf16.mxu0 0
    %2674 = vmatmul.mubr.bf16.gmra.mrb[0].mxu0 %v2419
    %v2675 = vpop.f32.mrb[0].mxu0
    %v2676 = vadd.f32 %v2579, %v2675
    %v2677 = vpop.f32.mrb[0].mxu0
    %v2678 = vpop.f32.mrb[0].mxu0
    %v2679 = vadd.f32 %v2582, %v2678
    %v2680 = vpop.f32.mrb[0].mxu0
    %2681 = vmatprep.mubr.bf16.mxu0 0
    %2682 = vmatmul.mubr.bf16.gmra.mrb[0].mxu0 %v2422
    %v2683 = vpop.f32.mrb[0].mxu0
    %v2684 = vadd.f32 %v2587, %v2683
    %v2685 = vpop.f32.mrb[0].mxu0
    %v2686 = vpop.f32.mrb[0].mxu0
    %v2687 = vadd.f32 %v2590, %v2686
    %v2688 = vpop.f32.mrb[0].mxu0
    %2689 = vmatprep.mubr.bf16.mxu0 0
    %2690 = vmatmul.mubr.bf16.gmra.mrb[0].mxu0 %v2425
    %v2691 = vpop.f32.mrb[0].mxu0
    %v2692 = vadd.f32 %v2595, %v2691
    %v2693 = vpop.f32.mrb[0].mxu0
    %v2694 = vpop.f32.mrb[0].mxu0
    %v2695 = vadd.f32 %v2598, %v2694
    %v2696 = vpop.f32.mrb[0].mxu0
    %2697 = vmatprep.mubr.bf16.mxu0 0
    %2698 = vmatmul.mubr.bf16.gmra.mrb[0].mxu0 %v2428
    %v2699 = vpop.f32.mrb[0].mxu0
    %v2700 = vadd.f32 %v2603, %v2699
    %v2701 = vpop.f32.mrb[0].mxu0
    %v2702 = vpop.f32.mrb[0].mxu0
    %v2703 = vadd.f32 %v2606, %v2702
    %v2704 = vpop.f32.mrb[0].mxu0
    %2705 = vmatprep.mubr.bf16.mxu0 0
    %2706 = vmatmul.mubr.bf16.gmra.mrb[0].mxu0 %v2431
    %v2707 = vpop.f32.mrb[0].mxu0
    %v2708 = vadd.f32 %v2611, %v2707
    %v2709 = vpop.f32.mrb[0].mxu0
    %v2710 = vpop.f32.mrb[0].mxu0
    %v2711 = vadd.f32 %v2614, %v2710
    %v2712 = vpop.f32.mrb[0].mxu0
    %2713 = vmatprep.mubr.bf16.mxu0 0
    %2714 = vmatmul.mubr.bf16.gmra.mrb[0].mxu0 %v2434
    %v2715 = vpop.f32.mrb[0].mxu0
    %v2716 = vadd.f32 %v2619, %v2715
    %v2717 = vpop.f32.mrb[0].mxu0
    %v2718 = vpop.f32.mrb[0].mxu0
    %v2719 = vadd.f32 %v2622, %v2718
    %v2720 = vpop.f32.mrb[0].mxu0
    %2721 = vmatprep.mubr.bf16.mxu0 0
    %2722 = vmatmul.mubr.bf16.gmra.mrb[0].mxu0 %v2437
    %v2723 = vpop.f32.mrb[0].mxu0
    %v2724 = vadd.f32 %v2627, %v2723
    %v2725 = vpop.f32.mrb[0].mxu0
    %v2726 = vpop.f32.mrb[0].mxu0
    %v2727 = vadd.f32 %v2630, %v2726
    %v2728 = vpop.f32.mrb[0].mxu0
    %2729 = vdwg.mxu0
    %v2730 = vmax.f32 %v2668, 0.0
    %v2731 = vmax.f32 %v2671, 0.0
    %v2732 = vmax.f32 %v2676, 0.0
    %v2733 = vmax.f32 %v2679, 0.0
    %v2734 = vmax.f32 %v2684, 0.0
    %v2735 = vmax.f32 %v2687, 0.0
    %v2736 = vmax.f32 %v2692, 0.0
    %v2737 = vmax.f32 %v2695, 0.0
    %v2738 = vmax.f32 %v2700, 0.0
    %v2739 = vmax.f32 %v2703, 0.0
    %v2740 = vmax.f32 %v2708, 0.0
    %v2741 = vmax.f32 %v2711, 0.0
    %v2742 = vmax.f32 %v2716, 0.0
    %v2743 = vmax.f32 %v2719, 0.0
    %v2744 = vmax.f32 %v2724, 0.0
    %v2745 = vmax.f32 %v2727, 0.0
    %v2746 = vpack.c.bf16 %v2731, %v2730
    %v2747 = vpack.c.bf16 %v2733, %v2732
    %v2748 = vpack.c.bf16 %v2735, %v2734
    %v2749 = vpack.c.bf16 %v2737, %v2736
    %v2750 = vpack.c.bf16 %v2739, %v2738
    %v2751 = vpack.c.bf16 %v2741, %v2740
    %v2752 = vpack.c.bf16 %v2743, %v2742
    %v2753 = vpack.c.bf16 %v2745, %v2744
    %v2754 = vld [vmem:[%s7] sm:$0x7]
    %v2755 = vld [vmem:[%s8] sm:$0x3f]
    %2757 = vset.pattern.permute.xlu0 0
    %2758 = vperm.xlu0 %2757, %v2755
    %v2759 = vpop.permute.xlu0 %2758
    %2761 = vmatprep.subr.bf16.mxu0 0
    %2762 = vmatpush1.bf16.xpose.msra.mxu0 %v2746
    %2763 = vmatprep.subr.bf16.mxu0 0
    %2764 = vmatpush1.bf16.xpose.msra.mxu0 %v2747
    %2765 = vmatprep.subr.bf16.mxu0 0
    %2766 = vmatpush1.bf16.xpose.msra.mxu0 %v2748
    %2767 = vmatprep.subr.bf16.mxu0 0
    %2768 = vmatpush1.bf16.xpose.msra.mxu0 %v2749
    %2769 = vmatprep.subr.bf16.mxu0 0
    %2770 = vmatpush1.bf16.xpose.msra.mxu0 %v2750
    %2771 = vmatprep.subr.bf16.mxu0 0
    %2772 = vmatpush1.bf16.xpose.msra.mxu0 %v2751
    %2773 = vmatprep.subr.bf16.mxu0 0
    %2774 = vmatpush1.bf16.xpose.msra.mxu0 %v2752
    %2775 = vmatprep.subr.bf16.mxu0 0
    %2776 = vmatpush1.bf16.xpose.msra.mxu0 %v2753
    %2777 = vmatprep.subr.bf16.mxu0 0
    %2778 = vmatpush1.bf16.xpose.msra.mxu0 0
    %2779 = vmatprep.subr.bf16.mxu0 0
    %2780 = vmatpush1.bf16.xpose.msra.mxu0 0
    %2781 = vmatprep.subr.bf16.mxu0 0
    %2782 = vmatpush1.bf16.xpose.msra.mxu0 0
    %2783 = vmatprep.subr.bf16.mxu0 0
    %2784 = vmatpush1.bf16.xpose.msra.mxu0 0
    %2785 = vmatprep.subr.bf16.mxu0 0
    %2786 = vmatpush1.bf16.xpose.msra.mxu0 0
    %2787 = vmatprep.subr.bf16.mxu0 0
    %2788 = vmatpush1.bf16.xpose.msra.mxu0 0
    %2789 = vmatprep.subr.bf16.mxu0 0
    %2790 = vmatpush1.bf16.xpose.msra.mxu0 0
    %2791 = vmatprep.subr.bf16.mxu0 0
    %2792 = vmatpush1.bf16.xpose.msra.mxu0 0
    %2793 = vmatprep.mubr.bf16.mxu0 0
    %2794 = vmatmul.mubr.bf16.gmra.mrb[0].mxu0 %v2754
    %v2795 = vpop.f32.mrb[0].mxu0
    %v2796 = vadd.f32 %v2759, %v2795
    %v2797 = vpop.f32.mrb[0].mxu0
    %v2798 = vpop.f32.mrb[0].mxu0
    %v2799 = vpop.f32.mrb[0].mxu0
    %2800 = vdwg.mxu0
    %v2801 = vmax.f32 %v2796, 0.0
    %v2803 = vrot.slane %v2801, 1
    %2804 = vrot.lane.b32.xlu0 %v2803, 64
    %v2805 = vpop.permute.xlu0 %2804
    %v2807 = vrot.slane %v2801, 2
    %v2809 = vrot.slane %v2801, 3
    %2810 = vrot.lane.b32.xlu0 %v2809, 64
    %v2811 = vpop.permute.xlu0 %2810
    %v2813 = vsel %vm895, %v2801, %v2805
    %v2814 = vsel %vm895, %v2807, %v2811
    %2815 = vrot.lane.b32.xlu0 %v2801, 64
    %v2816 = vpop.permute.xlu0 %2815
    %2819 = vrot.lane.b32.xlu0 %v2807, 64
    %v2820 = vpop.permute.xlu0 %2819
    %v2823 = vsel %vm895, %v2816, %v2803
    %v2824 = vsel %vm895, %v2820, %v2809
    %v2827 = vrot.slane %v2823, 7
    %v2828 = vrot.slane %v2824, 7
    %vm2831 = vcmask 1040384
    %v2832 = vsel %vm2831, %v2813, %v2827
    %v2833 = vsel %vm2831, %v2814, %v2828
    %v2834 = vpack.c.bf16 %v2832, %v2832
    %v2835 = vpack.c.bf16 %v2833, %v2833
    %v2837 = vrot.slane %v2813, 4
    %v2839 = vrot.slane %v2823, 3
    %v2841 = vsel %vm2831, %v2837, %v2839
    %v2842 = vpack.c.bf16 %v2841, %v2841
    %v2843 = vld [vmem:[%s9] sm:$0xf]
    %v2844 = vld [vmem:[%s9 + $0x4] sm:$0xf]
    %v2845 = vld [vmem:[%s9 + $0x8] sm:$0xf]
    %v2846 = vld [vmem:[%s9 + $0xc] sm:$0xf]
    %v2847 = vld [vmem:[%s9 + $0x10] sm:$0xf]
    %v2848 = vld [vmem:[%s9 + $0x14] sm:$0xf]
    %v2849 = vld [vmem:[%s9 + $0x18] sm:$0xf]
    %v2850 = vld [vmem:[%s9 + $0x1c] sm:$0xf]
    %v2851 = vld [vmem:[%s9 + $0x20] sm:$0xf]
    %v2852 = vld [vmem:[%s9 + $0x24] sm:$0xf]
    %v2853 = vld [vmem:[%s9 + $0x28] sm:$0xf]
    %v2854 = vld [vmem:[%s9 + $0x2c] sm:$0xf]
    %v2855 = vld [vmem:[%s9 + $0x30] sm:$0xf]
    %v2856 = vld [vmem:[%s9 + $0x34] sm:$0xf]
    %v2857 = vld [vmem:[%s9 + $0x38] sm:$0xf]
    %v2858 = vld [vmem:[%s9 + $0x3c] sm:$0xf]
    %v2859 = vld [vmem:[%s9 + $0x40] sm:$0xf]
    %v2860 = vld [vmem:[%s9 + $0x44] sm:$0xf]
    %v2861 = vld [vmem:[%s9 + $0x48] sm:$0xf]
    %v2862 = vld [vmem:[%s9 + $0x4c] sm:$0xf]
    %v2863 = vld [vmem:[%s9 + $0x50] sm:$0xf]
    %v2864 = vld [vmem:[%s9 + $0x54] sm:$0xf]
    %v2865 = vld [vmem:[%s9 + $0x58] sm:$0xf]
    %v2866 = vld [vmem:[%s9 + $0x5c] sm:$0xf]
    %v2867 = vld [vmem:[%s9 + $0x60] sm:$0xf]
    %v2868 = vld [vmem:[%s9 + $0x64] sm:$0xf]
    %v2869 = vld [vmem:[%s9 + $0x68] sm:$0xf]
    %v2870 = vld [vmem:[%s9 + $0x6c] sm:$0xf]
    %v2871 = vld [vmem:[%s9 + $0x70] sm:$0xf]
    %v2872 = vld [vmem:[%s9 + $0x74] sm:$0xf]
    %v2873 = vld [vmem:[%s9 + $0x78] sm:$0xf]
    %v2874 = vld [vmem:[%s9 + $0x7c] sm:$0xf]
    %v2875 = vld [vmem:[%s10] sm:$0x1]
    %v2877 = vlaneseq
    %v2878 = vshrl.u32 %v2877, 7
    %v2879 = vsub.s32 0, %v2878
    %v2880 = vrot.slane %v2875, %v2879
    %v2914 = vunpack.c.l.b16 %v2843
    %v2915 = vunpack.c.l.b16 %v2844
    %v2916 = vunpack.c.l.b16 %v2845
    %v2917 = vunpack.c.l.b16 %v2846
    %v2918 = vunpack.c.l.b16 %v2847
    %v2919 = vunpack.c.l.b16 %v2848
    %v2920 = vunpack.c.l.b16 %v2849
    %v2921 = vunpack.c.l.b16 %v2850
    %v2922 = vunpack.c.l.b16 %v2851
    %v2923 = vunpack.c.l.b16 %v2852
    %v2924 = vunpack.c.l.b16 %v2853
    %v2925 = vunpack.c.l.b16 %v2854
    %v2926 = vunpack.c.l.b16 %v2855
    %v2927 = vunpack.c.l.b16 %v2856
    %v2928 = vunpack.c.l.b16 %v2857
    %v2929 = vunpack.c.l.b16 %v2858
    %v2930 = vunpack.c.l.b16 %v2859
    %v2931 = vunpack.c.l.b16 %v2860
    %v2932 = vunpack.c.l.b16 %v2861
    %v2933 = vunpack.c.l.b16 %v2862
    %v2934 = vunpack.c.l.b16 %v2863
    %v2935 = vunpack.c.l.b16 %v2864
    %v2936 = vunpack.c.l.b16 %v2865
    %v2937 = vunpack.c.l.b16 %v2866
    %v2938 = vunpack.c.l.b16 %v2867
    %v2939 = vunpack.c.l.b16 %v2868
    %v2940 = vunpack.c.l.b16 %v2869
    %v2941 = vunpack.c.l.b16 %v2870
    %v2942 = vunpack.c.l.b16 %v2871
    %v2943 = vunpack.c.l.b16 %v2872
    %v2944 = vunpack.c.l.b16 %v2873
    %v2945 = vunpack.c.l.b16 %v2874
    %v2946 = vpack.c.b16 %v2915, %v2914
    %v2947 = vpack.c.b16 %v2917, %v2916
    %v2948 = vpack.c.b16 %v2919, %v2918
    %v2949 = vpack.c.b16 %v2921, %v2920
    %v2950 = vpack.c.b16 %v2923, %v2922
    %v2951 = vpack.c.b16 %v2925, %v2924
    %v2952 = vpack.c.b16 %v2927, %v2926
    %v2953 = vpack.c.b16 %v2929, %v2928
    %v2954 = vpack.c.b16 %v2931, %v2930
    %v2955 = vpack.c.b16 %v2933, %v2932
    %v2956 = vpack.c.b16 %v2935, %v2934
    %v2957 = vpack.c.b16 %v2937, %v2936
    %v2958 = vpack.c.b16 %v2939, %v2938
    %v2959 = vpack.c.b16 %v2941, %v2940
    %v2960 = vpack.c.b16 %v2943, %v2942
    %v2961 = vpack.c.b16 %v2945, %v2944
    %2978 = vmatprep.subr.bf16.mxu0 0
    %2979 = vmatpush1.bf16.msra.mxu0 %v2946
    %2980 = vmatprep.subr.bf16.mxu0 0
    %2981 = vmatpush1.bf16.msra.mxu0 %v2947
    %2982 = vmatprep.subr.bf16.mxu0 0
    %2983 = vmatpush1.bf16.msra.mxu0 %v2948
    %2984 = vmatprep.subr.bf16.mxu0 0
    %2985 = vmatpush1.bf16.msra.mxu0 %v2949
    %2986 = vmatprep.subr.bf16.mxu0 0
    %2987 = vmatpush1.bf16.msra.mxu0 %v2950
    %2988 = vmatprep.subr.bf16.mxu0 0
    %2989 = vmatpush1.bf16.msra.mxu0 %v2951
    %2990 = vmatprep.subr.bf16.mxu0 0
    %2991 = vmatpush1.bf16.msra.mxu0 %v2952
    %2992 = vmatprep.subr.bf16.mxu0 0
    %2993 = vmatpush1.bf16.msra.mxu0 %v2953
    %2994 = vmatprep.subr.bf16.mxu0 0
    %2995 = vmatpush1.bf16.msra.mxu0 %v2954
    %2996 = vmatprep.subr.bf16.mxu0 0
    %2997 = vmatpush1.bf16.msra.mxu0 %v2955
    %2998 = vmatprep.subr.bf16.mxu0 0
    %2999 = vmatpush1.bf16.msra.mxu0 %v2956
    %3000 = vmatprep.subr.bf16.mxu0 0
    %3001 = vmatpush1.bf16.msra.mxu0 %v2957
    %3002 = vmatprep.subr.bf16.mxu0 0
    %3003 = vmatpush1.bf16.msra.mxu0 %v2958
    %3004 = vmatprep.subr.bf16.mxu0 0
    %3005 = vmatpush1.bf16.msra.mxu0 %v2959
    %3006 = vmatprep.subr.bf16.mxu0 0
    %3007 = vmatpush1.bf16.msra.mxu0 %v2960
    %3008 = vmatprep.subr.bf16.mxu0 0
    %3009 = vmatpush1.bf16.msra.mxu0 %v2961
    %3010 = vmatprep.mubr.bf16.mxu0 %v2835
    %3011 = vmatmul.mubr.bf16.gmra.mrb[0].mxu0 %v2834
    %v3012 = vpop.f32.mrb[0].mxu0
    %v3013 = vadd.f32 %v2880, %v3012
    %v3014 = vpop.f32.mrb[0].mxu0
    %v3015 = vpop.f32.mrb[0].mxu0
    %v3016 = vpop.f32.mrb[0].mxu0
    %3017 = vdwg.mxu0
    %v3018 = vsel %vm1387, %v3013, -inf
    %3019 = vmax.xlane.f32.xlu0 %v3018
    %v3020 = vpop.xlane.xlu0 %3019
    %v3021 = vsub.f32 %v3013, %v3020
    %v3022 = vmul.f32 %v3021, 1.442695
    %v3023 = vpow.pop %v3022
    %v3024 = vsel %vm1387, %v3023, 0.0
    %3025 = vadd.xlane.f32.xlu0 %v3024
    %v3026 = vpop.xlane.xlu0 %3025
    %v3027 = vlog2.pop %v3026
    %v3028 = vmul.f32 %v3027, 0.6931472
    %v3029 = vsub.f32 %v3021, %v3028
    %3030 = vst.msk [vmem:[#allocation6] sm:$0x3] %vm1387, %v3029
    %v3031 = vld [vmem:[%s11] sm:$0xf]
    %v3032 = vld [vmem:[%s11 + $0x4] sm:$0xf]
    %v3033 = vld [vmem:[%s11 + $0x8] sm:$0xf]
    %v3034 = vld [vmem:[%s11 + $0xc] sm:$0xf]
    %v3035 = vld [vmem:[%s11 + $0x10] sm:$0xf]
    %v3036 = vld [vmem:[%s11 + $0x14] sm:$0xf]
    %v3037 = vld [vmem:[%s11 + $0x18] sm:$0xf]
    %v3038 = vld [vmem:[%s11 + $0x1c] sm:$0xf]
    %v3039 = vld [vmem:[%s11 + $0x20] sm:$0xf]
    %v3040 = vld [vmem:[%s11 + $0x24] sm:$0xf]
    %v3041 = vld [vmem:[%s11 + $0x28] sm:$0xf]
    %v3042 = vld [vmem:[%s11 + $0x2c] sm:$0xf]
    %v3043 = vld [vmem:[%s11 + $0x30] sm:$0xf]
    %v3044 = vld [vmem:[%s11 + $0x34] sm:$0xf]
    %v3045 = vld [vmem:[%s11 + $0x38] sm:$0xf]
    %v3046 = vld [vmem:[%s11 + $0x3c] sm:$0xf]
    %v3047 = vld [vmem:[%s12] sm:$0x1]
    %v3049 = vlaneseq
    %v3050 = vshrl.u32 %v3049, 7
    %v3051 = vsub.s32 0, %v3050
    %v3052 = vrot.slane %v3047, %v3051
    %v3070 = vunpack.c.l.b16 %v3031
    %v3071 = vunpack.c.l.b16 %v3032
    %v3072 = vunpack.c.l.b16 %v3033
    %v3073 = vunpack.c.l.b16 %v3034
    %v3074 = vunpack.c.l.b16 %v3035
    %v3075 = vunpack.c.l.b16 %v3036
    %v3076 = vunpack.c.l.b16 %v3037
    %v3077 = vunpack.c.l.b16 %v3038
    %v3078 = vunpack.c.l.b16 %v3039
    %v3079 = vunpack.c.l.b16 %v3040
    %v3080 = vunpack.c.l.b16 %v3041
    %v3081 = vunpack.c.l.b16 %v3042
    %v3082 = vunpack.c.l.b16 %v3043
    %v3083 = vunpack.c.l.b16 %v3044
    %v3084 = vunpack.c.l.b16 %v3045
    %v3085 = vunpack.c.l.b16 %v3046
    %v3086 = vpack.c.b16 %v3071, %v3070
    %v3087 = vpack.c.b16 %v3073, %v3072
    %v3088 = vpack.c.b16 %v3075, %v3074
    %v3089 = vpack.c.b16 %v3077, %v3076
    %v3090 = vpack.c.b16 %v3079, %v3078
    %v3091 = vpack.c.b16 %v3081, %v3080
    %v3092 = vpack.c.b16 %v3083, %v3082
    %v3093 = vpack.c.b16 %v3085, %v3084
    %3102 = vmatprep.subr.bf16.mxu0 0
    %3103 = vmatpush1.bf16.msra.mxu0 %v3086
    %3104 = vmatprep.subr.bf16.mxu0 0
    %3105 = vmatpush1.bf16.msra.mxu0 %v3087
    %3106 = vmatprep.subr.bf16.mxu0 0
    %3107 = vmatpush1.bf16.msra.mxu0 %v3088
    %3108 = vmatprep.subr.bf16.mxu0 0
    %3109 = vmatpush1.bf16.msra.mxu0 %v3089
    %3110 = vmatprep.subr.bf16.mxu0 0
    %3111 = vmatpush1.bf16.msra.mxu0 %v3090
    %3112 = vmatprep.subr.bf16.mxu0 0
    %3113 = vmatpush1.bf16.msra.mxu0 %v3091
    %3114 = vmatprep.subr.bf16.mxu0 0
    %3115 = vmatpush1.bf16.msra.mxu0 %v3092
    %3116 = vmatprep.subr.bf16.mxu0 0
    %3117 = vmatpush1.bf16.msra.mxu0 %v3093
    %3118 = vmatprep.subr.bf16.mxu0 0
    %3119 = vmatpush1.bf16.msra.mxu0 0
    %3120 = vmatprep.subr.bf16.mxu0 0
    %3121 = vmatpush1.bf16.msra.mxu0 0
    %3122 = vmatprep.subr.bf16.mxu0 0
    %3123 = vmatpush1.bf16.msra.mxu0 0
    %3124 = vmatprep.subr.bf16.mxu0 0
    %3125 = vmatpush1.bf16.msra.mxu0 0
    %3126 = vmatprep.subr.bf16.mxu0 0
    %3127 = vmatpush1.bf16.msra.mxu0 0
    %3128 = vmatprep.subr.bf16.mxu0 0
    %3129 = vmatpush1.bf16.msra.mxu0 0
    %3130 = vmatprep.subr.bf16.mxu0 0
    %3131 = vmatpush1.bf16.msra.mxu0 0
    %3132 = vmatprep.subr.bf16.mxu0 0
    %3133 = vmatpush1.bf16.msra.mxu0 0
    %3134 = vmatprep.mubr.bf16.mxu0 0
    %3135 = vmatmul.mubr.bf16.gmra.mrb[0].mxu0 %v2842
    %v3136 = vpop.f32.mrb[0].mxu0
    %v3137 = vadd.f32 %v3052, %v3136
    %v3138 = vpop.f32.mrb[0].mxu0
    %v3139 = vpop.f32.mrb[0].mxu0
    %v3140 = vpop.f32.mrb[0].mxu0
    %3141 = vdwg.mxu0
    %v3142 = vmax.f32 %v3137, 0.0
    %v3143 = vpack.c.bf16 %v3142, %v3142
    %v3144 = vld [vmem:[%s13] sm:$0xf]
    %v3145 = vld [vmem:[%s13 + $0x4] sm:$0xf]
    %v3146 = vld [vmem:[%s13 + $0x8] sm:$0xf]
    %v3147 = vld [vmem:[%s13 + $0xc] sm:$0xf]
    %v3148 = vld [vmem:[%s13 + $0x10] sm:$0xf]
    %v3149 = vld [vmem:[%s13 + $0x14] sm:$0xf]
    %v3150 = vld [vmem:[%s13 + $0x18] sm:$0xf]
    %v3151 = vld [vmem:[%s13 + $0x1c] sm:$0xf]
    %v3152 = vld [vmem:[#allocation5] sm:$0x1]
    %v3154 = vlaneseq
    %v3155 = vshrl.u32 %v3154, 7
    %v3156 = vsub.s32 0, %v3155
    %v3157 = vrot.slane %v3152, %v3156
    %v3167 = vunpack.c.l.b16 %v3144
    %v3168 = vunpack.c.l.b16 %v3145
    %v3169 = vunpack.c.l.b16 %v3146
    %v3170 = vunpack.c.l.b16 %v3147
    %v3171 = vunpack.c.l.b16 %v3148
    %v3172 = vunpack.c.l.b16 %v3149
    %v3173 = vunpack.c.l.b16 %v3150
    %v3174 = vunpack.c.l.b16 %v3151
    %v3175 = vpack.c.b16 %v3168, %v3167
    %v3176 = vpack.c.b16 %v3170, %v3169
    %v3177 = vpack.c.b16 %v3172, %v3171
    %v3178 = vpack.c.b16 %v3174, %v3173
    %v3184 = vsel %vm895, %v3143, 0
    %3186 = vmatprep.subr.bf16.mxu0 0
    %3187 = vmatpush1.bf16.msra.mxu0 %v3175
    %3188 = vmatprep.subr.bf16.mxu0 0
    %3189 = vmatpush1.bf16.msra.mxu0 %v3176
    %3190 = vmatprep.subr.bf16.mxu0 0
    %3191 = vmatpush1.bf16.msra.mxu0 %v3177
    %3192 = vmatprep.subr.bf16.mxu0 0
    %3193 = vmatpush1.bf16.msra.mxu0 %v3178
    %3194 = vmatprep.subr.bf16.mxu0 0
    %3195 = vmatpush1.bf16.msra.mxu0 0
    %3196 = vmatprep.subr.bf16.mxu0 0
    %3197 = vmatpush1.bf16.msra.mxu0 0
    %3198 = vmatprep.subr.bf16.mxu0 0
    %3199 = vmatpush1.bf16.msra.mxu0 0
    %3200 = vmatprep.subr.bf16.mxu0 0
    %3201 = vmatpush1.bf16.msra.mxu0 0
    %3202 = vmatprep.subr.bf16.mxu0 0
    %3203 = vmatpush1.bf16.msra.mxu0 0
    %3204 = vmatprep.subr.bf16.mxu0 0
    %3205 = vmatpush1.bf16.msra.mxu0 0
    %3206 = vmatprep.subr.bf16.mxu0 0
    %3207 = vmatpush1.bf16.msra.mxu0 0
    %3208 = vmatprep.subr.bf16.mxu0 0
    %3209 = vmatpush1.bf16.msra.mxu0 0
    %3210 = vmatprep.subr.bf16.mxu0 0
    %3211 = vmatpush1.bf16.msra.mxu0 0
    %3212 = vmatprep.subr.bf16.mxu0 0
    %3213 = vmatpush1.bf16.msra.mxu0 0
    %3214 = vmatprep.subr.bf16.mxu0 0
    %3215 = vmatpush1.bf16.msra.mxu0 0
    %3216 = vmatprep.subr.bf16.mxu0 0
    %3217 = vmatpush1.bf16.msra.mxu0 0
    %3218 = vmatprep.mubr.bf16.mxu0 0
    %3219 = vmatmul.mubr.bf16.gmra.mrb[0].mxu0 %v3184
    %v3220 = vpop.f32.mrb[0].mxu0
    %v3221 = vadd.f32 %v3157, %v3220
    %v3222 = vpop.f32.mrb[0].mxu0
    %v3223 = vpop.f32.mrb[0].mxu0
    %v3224 = vpop.f32.mrb[0].mxu0
    %3225 = vdwg.mxu0
    %v3226 = vtanh.pop %v3221
    %vm3227 = vcmask 1024
    %3228 = vst.msk [vmem:[%s16] sm:$0x3] %vm3227, %v3226
    // Predicated region
    $region62: #{net_forward.1} parent=1 // pred_check
      _
    $region63: #{net_forward.1} parent=1 // pred_check_branch
      %3230 = sbr.rel (0) target = $region65
    $region64: #{net_forward.1} parent=1 // pred_region
      %s3232 = ssub.s32 32, 32
      %3233 = vsyncadd [#allocation7], %s3232
      %s3235 = sshll.u32 [#allocation6], 4
      %s3236 = int_to_ptr.vmem [resolvable:$true] %s3235
      %3238 = dma.vmem_to_hbm [thread:$0]  %s3236, 32, %s15, [#allocation7]
    $region65: #{net_forward.1} parent=1 // pred_fallthru
      _
    // Predicated region
    $region66: #{net_forward.1} parent=1 // pred_check
      _
    $region67: #{net_forward.1} parent=1 // pred_check_branch
      %3240 = sbr.rel (0) target = $region69
    $region68: #{net_forward.1} parent=1 // pred_region
      _
    $region69: #{net_forward.1} parent=1 // pred_fallthru
      _
    // Predicated region
    $region70: #{net_forward.1} parent=1 // pred_check
      _
    $region71: #{net_forward.1} parent=1 // pred_check_branch
      %3242 = sbr.rel (0) target = $region73
    $region72: #{net_forward.1} parent=1 // pred_region
      %3243 = dma.done [#allocation7], 32
    $region73: #{net_forward.1} parent=1 // pred_fallthru
      _
    // Predicated region
    $region74: #{net_forward.1} parent=1 // pred_check
      _
    $region75: #{net_forward.1} parent=1 // pred_check_branch
      %3245 = sbr.rel (0) target = $region77
    $region76: #{net_forward.1} parent=1 // pred_region
      _
    $region77: #{net_forward.1} parent=1 // pred_fallthru
      _
    %3246 = vsyncpa [#allocation7], 1

</llo_original>
